<compile_context>
chip_gen: v5e
topology: v5e:2x2
jax: 0.10.0
libtpu: 0.0.40
codegen_flags: <defaults>
</compile_context>

<pallas_src>
import functools

import jax
import jax.numpy as jnp
from jax.experimental import pallas as pl
from jax.experimental.pallas import tpu as pltpu


# ------------------------------- kernel --------------------------------------

def r2d1_kernel(obs_ref, w_repr_ref, b_repr_ref, w_ih_ref, w_hh_ref, b_lstm_ref,
                w_q_ref, b_q_ref, h0_ref, c0_ref,
                q_ref, hT_ref, cT_ref,
                h_sc, c_sc, gx_sc, hh_sc,
                *, seq_len, needs_time_mask, unroll):
    t_chunk = pl.program_id(1)

    # load the carried recurrent state once, at the first time chunk of this batch block
    @pl.when(t_chunk == 0)
    def _():
        h_sc[...] = h0_ref[...]
        c_sc[...] = c0_ref[...]

    BB, Hp = h_sc.shape                       # static: batch-block rows, padded hidden
    rows = gx_sc.shape[0]                     # static: TILE_T * BB
    tile_t = rows // BB

    # ---- hoisted, batched matmuls (M = TILE_T*BB): representation + input gates ----
    # obs is already streamed in the weight dtype (bf16 path: no in-kernel cast).
    feat = jnp.maximum(
        jnp.dot(obs_ref[...], w_repr_ref[...],
                preferred_element_type=jnp.float32) + b_repr_ref[...],
        0.0)                                                      # (rows, Fp) f32
    gx_sc[...] = (jnp.dot(feat.astype(w_ih_ref.dtype), w_ih_ref[...],
                          preferred_element_type=jnp.float32)
                  + b_lstm_ref[...])                              # (rows, 4*Hp) f32

    # ---- serial LSTM recurrence over the chunk (PyTorch gate order i, f, g, o) ----
    def fast_sigmoid(x):
        # sigmoid(x) = 0.5 * (1 + tanh(x/2)); one EUP op instead of exp + reciprocal
        return 0.5 + 0.5 * jnp.tanh(0.5 * x)

    def step(tt, carry):
        h, c = carry
        off = pl.multiple_of(tt * BB, BB)                         # 8/16-aligned sublanes
        gates = gx_sc[pl.ds(off, BB), :] + jnp.dot(
            h.astype(w_hh_ref.dtype), w_hh_ref[...],
            preferred_element_type=jnp.float32)                   # (BB, 4*Hp)
        i_g = fast_sigmoid(gates[:, 0 * Hp:1 * Hp])               # lane-aligned slices
        f_g = fast_sigmoid(gates[:, 1 * Hp:2 * Hp])
        g_g = jnp.tanh(gates[:, 2 * Hp:3 * Hp])
        o_g = fast_sigmoid(gates[:, 3 * Hp:4 * Hp])
        c_new = f_g * c + i_g * g_g
        h_new = o_g * jnp.tanh(c_new)
        if needs_time_mask:
            # freeze the state on padded trailing time steps (T padded to TILE_T mult.)
            valid = (t_chunk * tile_t + tt) < seq_len
            h_new = jnp.where(valid, h_new, h)
            c_new = jnp.where(valid, c_new, c)
        hh_sc[pl.ds(off, BB), :] = h_new                          # stage for batched q head
        return h_new, c_new

    h_last, c_last = jax.lax.fori_loop(
        0, tile_t, step, (h_sc[...], c_sc[...]), unroll=unroll)
    h_sc[...] = h_last
    c_sc[...] = c_last

    # ---- batched NoisyLinear q head: one MXU matmul + one lane-dense slab store ----
    q_ref[...] = (jnp.dot(hh_sc[...].astype(w_q_ref.dtype), w_q_ref[...],
                          preferred_element_type=jnp.float32)
                  + b_q_ref[...]).astype(q_ref.dtype)

    # ---- final hidden/cell state: resident output blocks, written exactly once ----
    @pl.when(t_chunk == pl.num_programs(1) - 1)
    def _():
        hT_ref[...] = h_last
        cT_ref[...] = c_last


# ------------------------------ helpers ---------------------------------------

def _round_up(x, m):
    return ((x + m - 1) // m) * m


def _vmem_capacity_bytes(default=64 * 2 ** 20):
    """Physical VMEM per TensorCore; falls back to a conservative v7x-sized default."""
    try:
        info = pltpu.get_tpu_info()
        for attr in ("vmem_capacity_bytes", "vmem_size_bytes", "vmem_bytes"):
            v = getattr(info, attr, None)
            if v:
                return int(v)
    except Exception:
        pass
    return default


def _pick_tile_t(T, per_step_bytes, fixed_bytes, vmem_budget, max_tile_t):
    """Largest affordable chunk length; arbitrary T is handled by padding to
    tile_t * num_chunks (minimal padding), with padded steps masked in-kernel."""
    cap = 1
    for cand in range(1, min(max_tile_t, T) + 1):
        if fixed_bytes + cand * per_step_bytes <= vmem_budget:
            cap = cand
    num_chunks = -(-T // cap)          # ceil
    tile_t = -(-T // num_chunks)       # ceil -> minimal T padding
    return tile_t, num_chunks


# ------------------------------ wrappers --------------------------------------

def recurrent_q_forward_time_major(params, obs_tm, h0, c0, *,
                                   weight_dtype=jnp.float32,
                                   batch_blocks=None,
                                   max_tile_t=128):
    """obs_tm: (T, B, obs_dim) time-major f32. Returns (q_tm (T,B,A), hT (B,H), cT (B,H))."""
    T, B, obs_dim = obs_tm.shape
    F = params["w_repr"].shape[1]
    H = params["w_hh"].shape[0]
    A = params["w_q"].shape[1]

    wd = jnp.dtype(weight_dtype)
    wsize = wd.itemsize
    sub = 16 if wsize < 4 else 8            # sublane packing of the streamed obs dtype

    # ---- lane padding: obs/F/H/A up to 128 so gate slices / q store are lane-dense ----
    obs_p = _round_up(obs_dim, 128)
    Fp = _round_up(F, 128)
    Hp = _round_up(H, 128)
    Ap = _round_up(A, 128)

    # ---- batch blocking: leading "parallel" grid axis (2 TCs on v7x, no-op elsewhere) ----
    if batch_blocks is None:
        batch_blocks = 2 if B >= 2 * sub else 1
    nbb = max(1, int(batch_blocks))
    Bp = _round_up(max(B, sub), nbb * sub)
    BB = Bp // nbb

    # ---- per-generation VMEM budget (~3/4 of physical) and explicit compiler limit ----
    vmem_cap = _vmem_capacity_bytes()
    vmem_limit = max(32 << 20, min(vmem_cap * 3 // 4, 100 << 20))
    vmem_budget = vmem_limit - (4 << 20)

    weight_bytes = ((obs_p * Fp + Fp * 4 * Hp + Hp * 4 * Hp + Hp * Ap) * wsize
                    + (Fp + 4 * Hp + Ap) * 4)
    # constant-index blocks are still double-buffered by the default pipeline (2x below)
    fixed_bytes = 2 * weight_bytes + (2 * 4 + 2) * BB * Hp * 4
    per_step_bytes = BB * (2 * obs_p * wsize     # obs block (double-buffered)
                           + 2 * Ap * 4          # q block (double-buffered)
                           + 4 * Hp * 4          # gx_sc
                           + Hp * 4              # hh_sc
                           + Fp * 4)             # feat temporary
    tile_t, num_chunks = _pick_tile_t(T, per_step_bytes, fixed_bytes,
                                      vmem_budget, max_tile_t)
    T_pad = tile_t * num_chunks
    rows = tile_t * BB

    # ---- pad inputs; obs is streamed in the weight dtype (bf16 halves obs DMA) ----
    obs_tm = jnp.pad(obs_tm.astype(weight_dtype),
                     ((0, T_pad - T), (0, Bp - B), (0, obs_p - obs_dim)))
    h0 = jnp.pad(h0.astype(jnp.float32), ((0, Bp - B), (0, Hp - H)))
    c0 = jnp.pad(c0.astype(jnp.float32), ((0, Bp - B), (0, Hp - H)))

    # Batch-block-major row layout: row = (b*T_pad + t)*BB + local_b. Free reshape when
    # nbb == 1; for nbb > 1 this is one extra XLA pass over obs (layout plumbing only).
    obs2d = (obs_tm.reshape(T_pad, nbb, BB, obs_p)
             .transpose(1, 0, 2, 3)
             .reshape(nbb * T_pad * BB, obs_p))

    # ---- gate-blocked weight padding (per-gate zero columns keep padded h/c == 0) ----
    def pad2(x, r, c):
        return jnp.pad(x, ((0, r - x.shape[0]), (0, c - x.shape[1])))

    def pad_gates(x, rows_to):            # (R, 4H) -> (rows_to, 4*Hp)
        parts = [jnp.pad(x[:, k * H:(k + 1) * H], ((0, 0), (0, Hp - H)))
                 for k in range(4)]
        g = jnp.concatenate(parts, axis=1)
        return jnp.pad(g, ((0, rows_to - g.shape[0]), (0, 0)))

    w_repr = pad2(params["w_repr"], obs_p, Fp).astype(weight_dtype)
    b_repr = pad2(params["b_repr"], 1, Fp).astype(jnp.float32)
    w_ih = pad_gates(params["w_ih"], Fp).astype(weight_dtype)
    w_hh = pad_gates(params["w_hh"], Hp).astype(weight_dtype)
    b_lstm = pad_gates(params["b_lstm"], 1).astype(jnp.float32)
    w_q = pad2(params["w_q"], Hp, Ap).astype(weight_dtype)
    b_q = pad2(params["b_q"], 1, Ap).astype(jnp.float32)

    kernel = functools.partial(
        r2d1_kernel,
        seq_len=T,
        needs_time_mask=(T_pad != T),
        unroll=min(8, tile_t))

    grid_spec = pltpu.PrefetchScalarGridSpec(
        num_scalar_prefetch=0,
        grid=(nbb, num_chunks),
        in_specs=[
            pl.BlockSpec((rows, obs_p), lambda b, t: (b * num_chunks + t, 0)),  # obs chunk
            pl.BlockSpec((obs_p, Fp), lambda b, t: (0, 0)),       # w_repr
            pl.BlockSpec((1, Fp), lambda b, t: (0, 0)),           # b_repr
            pl.BlockSpec((Fp, 4 * Hp), lambda b, t: (0, 0)),      # w_ih (gate-blocked)
            pl.BlockSpec((Hp, 4 * Hp), lambda b, t: (0, 0)),      # w_hh (gate-blocked)
            pl.BlockSpec((1, 4 * Hp), lambda b, t: (0, 0)),       # b_lstm (b_ih + b_hh)
            pl.BlockSpec((Hp, Ap), lambda b, t: (0, 0)),          # w_q (noisy, effective)
            pl.BlockSpec((1, Ap), lambda b, t: (0, 0)),           # b_q
            pl.BlockSpec((BB, Hp), lambda b, t: (b, 0)),          # h0 (per batch block)
            pl.BlockSpec((BB, Hp), lambda b, t: (b, 0)),          # c0 (per batch block)
        ],
        out_specs=[
            pl.BlockSpec((rows, Ap), lambda b, t: (b * num_chunks + t, 0)),  # q (lane-dense)
            pl.BlockSpec((BB, Hp), lambda b, t: (b, 0)),          # h_T (resident)
            pl.BlockSpec((BB, Hp), lambda b, t: (b, 0)),          # c_T (resident)
        ],
        scratch_shapes=[
            pltpu.VMEM((BB, Hp), jnp.float32),                    # carried h state
            pltpu.VMEM((BB, Hp), jnp.float32),                    # carried c state
            pltpu.VMEM((rows, 4 * Hp), jnp.float32),              # hoisted input-gate preacts
            pltpu.VMEM((rows, Hp), jnp.float32),                  # per-step h staging
        ],
    )

    # NOTE: input_output_aliases={8: 1, 9: 2} would reuse the h0/c0 HBM buffers for
    # hT/cT; skipped so the caller's hidden-state inputs are not donated (matches the
    # PyTorch module's non-destructive hidden-state semantics).
    q2d, hT, cT = pl.pallas_call(
        kernel,
        out_shape=(
            jax.ShapeDtypeStruct((nbb * T_pad * BB, Ap), jnp.float32),
            jax.ShapeDtypeStruct((Bp, Hp), jnp.float32),
            jax.ShapeDtypeStruct((Bp, Hp), jnp.float32),
        ),
        grid_spec=grid_spec,
        compiler_params=pltpu.CompilerParams(
            dimension_semantics=("parallel", "arbitrary"),        # batch-parallel, time-serial
            vmem_limit_bytes=int(vmem_limit)),
    )(obs2d, w_repr, b_repr, w_ih, w_hh, b_lstm, w_q, b_q, h0, c0)

    q_tm = (q2d.reshape(nbb, T_pad, BB, Ap)
            .transpose(1, 0, 2, 3)
            .reshape(T_pad, Bp, Ap)[:T, :B, :A])
    return q_tm, hT[:B, :H], cT[:B, :H]


def recurrent_q_forward(params, observation, h_recurrent=None, c_recurrent=None, *,
                        weight_dtype=jnp.float32, batch_blocks=None):
    """observation: (B, T, obs_dim). Returns (q_values (B,T,A), (h (1,B,H), c (1,B,H)))."""
    B, T, obs_dim = observation.shape
    H = params["w_hh"].shape[0]

    if h_recurrent is None or c_recurrent is None:
        h0 = jnp.zeros((B, H), jnp.float32)
        c0 = jnp.zeros((B, H), jnp.float32)
    else:
        h0 = h_recurrent.reshape(B, H).astype(jnp.float32)
        c0 = c_recurrent.reshape(B, H).astype(jnp.float32)

    # Layout plumbing only (batch_first torch convention <-> time-major kernel); callers
    # that already hold time-major sequences should call recurrent_q_forward_time_major.
    obs_tm = jnp.transpose(observation, (1, 0, 2)).astype(jnp.float32)
    q_tm, hT, cT = recurrent_q_forward_time_major(
        params, obs_tm, h0, c0, weight_dtype=weight_dtype, batch_blocks=batch_blocks)
    q_values = jnp.transpose(q_tm, (1, 0, 2))
    return q_values, (hT[None], cT[None])


# ----------------------------- parameter setup ------------------------------

def _noisy_f(x):
    return jnp.sign(x) * jnp.sqrt(jnp.abs(x))


def init_params(key, obs_dim, features_dim, recurrent_dim, action_dim):
    ks = jax.random.split(key, 10)
    F, H, A = features_dim, recurrent_dim, action_dim

    # representation: Linear(obs_dim -> F) + ReLU  (PyTorch-default-like uniform init)
    lim_r = 1.0 / jnp.sqrt(obs_dim)
    w_repr = jax.random.uniform(ks[0], (obs_dim, F), jnp.float32, -lim_r, lim_r)
    b_repr = jax.random.uniform(ks[1], (1, F), jnp.float32, -lim_r, lim_r)

    # LSTM(F -> H), single layer; gate order i,f,g,o; fold b_ih + b_hh
    lim_l = 1.0 / jnp.sqrt(H)
    w_ih = jax.random.uniform(ks[2], (F, 4 * H), jnp.float32, -lim_l, lim_l)
    w_hh = jax.random.uniform(ks[3], (H, 4 * H), jnp.float32, -lim_l, lim_l)
    b_ih = jax.random.uniform(ks[4], (4 * H,), jnp.float32, -lim_l, lim_l)
    b_hh = jax.random.uniform(ks[5], (4 * H,), jnp.float32, -lim_l, lim_l)
    b_lstm = (b_ih + b_hh).reshape(1, 4 * H)

    # NoisyLinear(H -> A): factorized Gaussian noise; effective weights built here
    # (mirrors reset_noise(); the matmul itself runs in the kernel)
    lim_q = 1.0 / jnp.sqrt(H)
    w_mu = jax.random.uniform(ks[6], (A, H), jnp.float32, -lim_q, lim_q)
    b_mu = jax.random.uniform(ks[7], (A,), jnp.float32, -lim_q, lim_q)
    sigma0 = 0.5
    w_sigma = jnp.full((A, H), sigma0 / jnp.sqrt(H), jnp.float32)
    b_sigma = jnp.full((A,), sigma0 / jnp.sqrt(H), jnp.float32)
    eps_in = _noisy_f(jax.random.normal(ks[8], (H,), jnp.float32))
    eps_out = _noisy_f(jax.random.normal(ks[9], (A,), jnp.float32))
    w_eps = jnp.outer(eps_out, eps_in)
    w_q = (w_mu + w_sigma * w_eps).T                              # (H, A)
    b_q = (b_mu + b_sigma * eps_out).reshape(1, A)

    return {"w_repr": w_repr, "b_repr": b_repr,
            "w_ih": w_ih, "w_hh": w_hh, "b_lstm": b_lstm,
            "w_q": w_q, "b_q": b_q}


# -------------------------- pure-JAX reference -------------------------------

def ref_forward(params, observation, h0, c0):
    B, T, obs_dim = observation.shape
    H = params["w_hh"].shape[0]
    feat = jax.nn.relu(observation.reshape(B * T, obs_dim) @ params["w_repr"]
                       + params["b_repr"][0])
    feat = feat.reshape(B, T, -1)

    def step(carry, x_t):
        h, c = carry
        gates = x_t @ params["w_ih"] + h @ params["w_hh"] + params["b_lstm"][0]
        i = jax.nn.sigmoid(gates[:, :H])
        f = jax.nn.sigmoid(gates[:, H:2 * H])
        g = jnp.tanh(gates[:, 2 * H:3 * H])
        o = jax.nn.sigmoid(gates[:, 3 * H:])
        c_new = f * c + i * g
        h_new = o * jnp.tanh(c_new)
        return (h_new, c_new), h_new

    (hT, cT), ys = jax.lax.scan(step, (h0, c0), jnp.transpose(feat, (1, 0, 2)))
    ys = jnp.transpose(ys, (1, 0, 2)).reshape(B * T, H)
    q = ys @ params["w_q"] + params["b_q"][0]
    return q.reshape(B, T, -1), hT[None], cT[None]


if __name__ == "__main__":
    # ---- config 1: module-scale shapes, default f32 weights ----
    B, T = 2, 8
    OBS_DIM, FEATURES_DIM, RECURRENT_DIM, ACTION_DIM = 16, 32, 32, 4

    key = jax.random.PRNGKey(0)
    k_param, k_obs = jax.random.split(key)
    params = init_params(k_param, OBS_DIM, FEATURES_DIM, RECURRENT_DIM, ACTION_DIM)
    observation = jax.random.normal(k_obs, (B, T, OBS_DIM), jnp.float32)

    q_values, (h_out, c_out) = recurrent_q_forward(params, observation)
    jax.block_until_ready((q_values, h_out, c_out))

    q_ref, h_ref, c_ref = ref_forward(
        params, observation,
        jnp.zeros((B, RECURRENT_DIM), jnp.float32),
        jnp.zeros((B, RECURRENT_DIM), jnp.float32))

    assert q_values.shape == (B, T, ACTION_DIM)
    assert h_out.shape == (1, B, RECURRENT_DIM) and c_out.shape == (1, B, RECURRENT_DIM)
    assert jnp.allclose(q_values, q_ref, rtol=1e-4, atol=1e-4)
    assert jnp.allclose(h_out, h_ref, rtol=1e-4, atol=1e-4)
    assert jnp.allclose(c_out, c_ref, rtol=1e-4, atol=1e-4)

    # ---- config 2: exercises the batch-parallel grid axis (2 batch blocks), multi-chunk
    #      time grid with T padding + in-kernel masking, non-128 dims, nonzero h0/c0 ----
    B2, T2, OBS2, F2, H2, A2 = 16, 7, 10, 24, 20, 5
    k2p, k2o = jax.random.split(jax.random.PRNGKey(1))
    params2 = init_params(k2p, OBS2, F2, H2, A2)
    obs2 = jax.random.normal(k2o, (B2, T2, OBS2), jnp.float32)
    h0_2 = 0.1 * jax.random.normal(jax.random.PRNGKey(2), (B2, H2), jnp.float32)
    c0_2 = 0.1 * jax.random.normal(jax.random.PRNGKey(3), (B2, H2), jnp.float32)
    q2_tm, h2T, c2T = recurrent_q_forward_time_major(
        params2, jnp.transpose(obs2, (1, 0, 2)), h0_2, c0_2, max_tile_t=4)
    jax.block_until_ready((q2_tm, h2T, c2T))
    q2_ref, h2_ref, c2_ref = ref_forward(params2, obs2, h0_2, c0_2)
    assert jnp.allclose(jnp.transpose(q2_tm, (1, 0, 2)), q2_ref, rtol=1e-4, atol=1e-4)
    assert jnp.allclose(h2T, h2_ref[0], rtol=1e-4, atol=1e-4)
    assert jnp.allclose(c2T, c2_ref[0], rtol=1e-4, atol=1e-4)

    # ---- bf16-weight run (all generations): f32 accumulation, loose sanity check ----
    q_bf16, (h_bf16, c_bf16) = recurrent_q_forward(
        params, observation, weight_dtype=jnp.bfloat16)
    jax.block_until_ready((q_bf16, h_bf16, c_bf16))
    assert q_bf16.shape == (B, T, ACTION_DIM)
    assert bool(jnp.isfinite(q_bf16).all())
    assert float(jnp.max(jnp.abs(q_bf16 - q_ref))) < 0.5

    print("KERNEL_OK")
</pallas_src>

<mosaic_0001>
module attributes {stable_mosaic.version = 11 : i64} {
  func.func @r2d1_kernel(%arg0: i32, %arg1: i32, %arg2: memref<64x128xf32, #tpu.memory_space<vmem>>, %arg3: memref<128x128xf32, #tpu.memory_space<vmem>>, %arg4: memref<1x128xf32, #tpu.memory_space<vmem>>, %arg5: memref<128x512xf32, #tpu.memory_space<vmem>>, %arg6: memref<128x512xf32, #tpu.memory_space<vmem>>, %arg7: memref<1x512xf32, #tpu.memory_space<vmem>>, %arg8: memref<128x128xf32, #tpu.memory_space<vmem>>, %arg9: memref<1x128xf32, #tpu.memory_space<vmem>>, %arg10: memref<8x128xf32, #tpu.memory_space<vmem>>, %arg11: memref<8x128xf32, #tpu.memory_space<vmem>>, %arg12: memref<64x128xf32, #tpu.memory_space<vmem>>, %arg13: memref<8x128xf32, #tpu.memory_space<vmem>>, %arg14: memref<8x128xf32, #tpu.memory_space<vmem>>, %arg15: memref<8x128xf32, #tpu.memory_space<vmem>>, %arg16: memref<8x128xf32, #tpu.memory_space<vmem>>, %arg17: memref<64x512xf32, #tpu.memory_space<vmem>>, %arg18: memref<64x128xf32, #tpu.memory_space<vmem>>) attributes {dimension_semantics = [#tpu.dimension_semantics<parallel>, #tpu.dimension_semantics<arbitrary>], iteration_bounds = array<i64: 1, 1>, scalar_prefetch = 0 : i64, scratch_operands = 4 : i64, tpu.core_type = #tpu.core_type<tc>, window_params = [{transform_indices = @transform_0, window_bounds = array<i64: 64, 128>}, {pipeline_mode = #tpu.pipeline_mode<synchronous>, transform_indices = @transform_1, window_bounds = array<i64: 128, 128>}, {pipeline_mode = #tpu.pipeline_mode<synchronous>, transform_indices = @transform_2, window_bounds = array<i64: 1, 128>}, {pipeline_mode = #tpu.pipeline_mode<synchronous>, transform_indices = @transform_3, window_bounds = array<i64: 128, 512>}, {pipeline_mode = #tpu.pipeline_mode<synchronous>, transform_indices = @transform_4, window_bounds = array<i64: 128, 512>}, {pipeline_mode = #tpu.pipeline_mode<synchronous>, transform_indices = @transform_5, window_bounds = array<i64: 1, 512>}, {pipeline_mode = #tpu.pipeline_mode<synchronous>, transform_indices = @transform_6, window_bounds = array<i64: 128, 128>}, {pipeline_mode = #tpu.pipeline_mode<synchronous>, transform_indices = @transform_7, window_bounds = array<i64: 1, 128>}, {transform_indices = @transform_8, window_bounds = array<i64: 8, 128>}, {transform_indices = @transform_9, window_bounds = array<i64: 8, 128>}, {transform_indices = @transform_10, window_bounds = array<i64: 64, 128>}, {transform_indices = @transform_11, window_bounds = array<i64: 8, 128>}, {transform_indices = @transform_12, window_bounds = array<i64: 8, 128>}]} {
    %c0_i32 = arith.constant 0 : i32
    %0 = arith.cmpi eq, %arg1, %c0_i32 : i32
    %1 = arith.extui %0 : i1 to i32
    %c0_i32_0 = arith.constant 0 : i32
    %2 = arith.cmpi ne, %1, %c0_i32_0 : i32
    scf.if %2 {
      %c0_154 = arith.constant 0 : index
      %c0_155 = arith.constant 0 : index
      %351 = vector.load %arg10[%c0_154, %c0_155] : memref<8x128xf32, #tpu.memory_space<vmem>>, vector<8x128xf32>
      %c0_156 = arith.constant 0 : index
      %c0_157 = arith.constant 0 : index
      %352 = vector.load %arg15[%c0_156, %c0_157] : memref<8x128xf32, #tpu.memory_space<vmem>>, vector<8x128xf32>
      tpu.vector_store %arg15[%c0_156, %c0_157], %351 {strides = array<i32>} : memref<8x128xf32, #tpu.memory_space<vmem>>, vector<8x128xf32>,
      %c0_158 = arith.constant 0 : index
      %c0_159 = arith.constant 0 : index
      %353 = vector.load %arg11[%c0_158, %c0_159] : memref<8x128xf32, #tpu.memory_space<vmem>>, vector<8x128xf32>
      %c0_160 = arith.constant 0 : index
      %c0_161 = arith.constant 0 : index
      %354 = vector.load %arg16[%c0_160, %c0_161] : memref<8x128xf32, #tpu.memory_space<vmem>>, vector<8x128xf32>
      tpu.vector_store %arg16[%c0_160, %c0_161], %353 {strides = array<i32>} : memref<8x128xf32, #tpu.memory_space<vmem>>, vector<8x128xf32>,
    } else {
    }
    %c0 = arith.constant 0 : index
    %c0_1 = arith.constant 0 : index
    %3 = vector.load %arg2[%c0, %c0_1] : memref<64x128xf32, #tpu.memory_space<vmem>>, vector<64x128xf32>
    %c0_2 = arith.constant 0 : index
    %c0_3 = arith.constant 0 : index
    %4 = vector.load %arg3[%c0_2, %c0_3] : memref<128x128xf32, #tpu.memory_space<vmem>>, vector<128x128xf32>
    %cst = arith.constant dense<0.000000e+00> : vector<64x128xf32>
    %5 = tpu.matmul %3, %4, %cst {dimension_numbers = #tpu.dot_dimension_numbers<[1], [0], [0], [1], [0, 0, 1, 1], [], []>} : vector<64x128xf32>, vector<128x128xf32>, vector<64x128xf32> -> vector<64x128xf32>
    %c0_4 = arith.constant 0 : index
    %c0_5 = arith.constant 0 : index
    %6 = vector.load %arg4[%c0_4, %c0_5] : memref<1x128xf32, #tpu.memory_space<vmem>>, vector<1x128xf32>
    %7 = vector.broadcast %6 : vector<1x128xf32> to vector<64x128xf32>
    %8 = arith.addf %5, %7 : vector<64x128xf32>
    %cst_6 = arith.constant 0.000000e+00 : f32
    %9 = vector.broadcast %cst_6 : f32 to vector<64x128xf32>
    %10 = arith.maximumf %8, %9 : vector<64x128xf32>
    %c0_7 = arith.constant 0 : index
    %c0_8 = arith.constant 0 : index
    %11 = vector.load %arg5[%c0_7, %c0_8] : memref<128x512xf32, #tpu.memory_space<vmem>>, vector<128x512xf32>
    %cst_9 = arith.constant dense<0.000000e+00> : vector<64x512xf32>
    %12 = tpu.matmul %10, %11, %cst_9 {dimension_numbers = #tpu.dot_dimension_numbers<[1], [0], [0], [1], [0, 0, 1, 1], [], []>} : vector<64x128xf32>, vector<128x512xf32>, vector<64x512xf32> -> vector<64x512xf32>
    %c0_10 = arith.constant 0 : index
    %c0_11 = arith.constant 0 : index
    %13 = vector.load %arg7[%c0_10, %c0_11] : memref<1x512xf32, #tpu.memory_space<vmem>>, vector<1x512xf32>
    %14 = vector.broadcast %13 : vector<1x512xf32> to vector<64x512xf32>
    %15 = arith.addf %12, %14 : vector<64x512xf32>
    %c0_12 = arith.constant 0 : index
    %c0_13 = arith.constant 0 : index
    %16 = vector.load %arg17[%c0_12, %c0_13] : memref<64x512xf32, #tpu.memory_space<vmem>>, vector<64x512xf32>
    tpu.vector_store %arg17[%c0_12, %c0_13], %15 {strides = array<i32>} : memref<64x512xf32, #tpu.memory_space<vmem>>, vector<64x512xf32>,
    %c0_14 = arith.constant 0 : index
    %c0_15 = arith.constant 0 : index
    %17 = vector.load %arg15[%c0_14, %c0_15] : memref<8x128xf32, #tpu.memory_space<vmem>>, vector<8x128xf32>
    %c0_16 = arith.constant 0 : index
    %c0_17 = arith.constant 0 : index
    %18 = vector.load %arg16[%c0_16, %c0_17] : memref<8x128xf32, #tpu.memory_space<vmem>>, vector<8x128xf32>
    %c0_i32_18 = arith.constant 0 : i32
    %c8_i32 = arith.constant 8 : i32
    %19 = arith.muli %c0_i32_18, %c8_i32 : i32
    %20 = tpu.assume_multiple %19, 8 : i32
    %21 = arith.index_cast %20 : i32 to index
    %c0_19 = arith.constant 0 : index
    %22 = vector.load %arg17[%21, %c0_19] : memref<64x512xf32, #tpu.memory_space<vmem>>, vector<8x512xf32>
    %c0_20 = arith.constant 0 : index
    %c0_21 = arith.constant 0 : index
    %23 = vector.load %arg6[%c0_20, %c0_21] : memref<128x512xf32, #tpu.memory_space<vmem>>, vector<128x512xf32>
    %cst_22 = arith.constant dense<0.000000e+00> : vector<8x512xf32>
    %24 = tpu.matmul %17, %23, %cst_22 {dimension_numbers = #tpu.dot_dimension_numbers<[1], [0], [0], [1], [0, 0, 1, 1], [], []>} : vector<8x128xf32>, vector<128x512xf32>, vector<8x512xf32> -> vector<8x512xf32>
    %25 = arith.addf %22, %24 : vector<8x512xf32>
    %26 = vector.extract_strided_slice %25 {offsets = [0, 0], sizes = [8, 128], strides = [1, 1]} : vector<8x512xf32> to vector<8x128xf32>
    %cst_23 = arith.constant 5.000000e-01 : f32
    %27 = vector.broadcast %cst_23 : f32 to vector<8x128xf32>
    %28 = arith.mulf %27, %26 : vector<8x128xf32>
    %29 = math.tanh %28 : vector<8x128xf32>
    %cst_24 = arith.constant 5.000000e-01 : f32
    %30 = vector.broadcast %cst_24 : f32 to vector<8x128xf32>
    %31 = arith.mulf %30, %29 : vector<8x128xf32>
    %cst_25 = arith.constant 5.000000e-01 : f32
    %32 = vector.broadcast %cst_25 : f32 to vector<8x128xf32>
    %33 = arith.addf %32, %31 : vector<8x128xf32>
    %34 = vector.extract_strided_slice %25 {offsets = [0, 128], sizes = [8, 128], strides = [1, 1]} : vector<8x512xf32> to vector<8x128xf32>
    %cst_26 = arith.constant 5.000000e-01 : f32
    %35 = vector.broadcast %cst_26 : f32 to vector<8x128xf32>
    %36 = arith.mulf %35, %34 : vector<8x128xf32>
    %37 = math.tanh %36 : vector<8x128xf32>
    %cst_27 = arith.constant 5.000000e-01 : f32
    %38 = vector.broadcast %cst_27 : f32 to vector<8x128xf32>
    %39 = arith.mulf %38, %37 : vector<8x128xf32>
    %cst_28 = arith.constant 5.000000e-01 : f32
    %40 = vector.broadcast %cst_28 : f32 to vector<8x128xf32>
    %41 = arith.addf %40, %39 : vector<8x128xf32>
    %42 = vector.extract_strided_slice %25 {offsets = [0, 256], sizes = [8, 128], strides = [1, 1]} : vector<8x512xf32> to vector<8x128xf32>
    %43 = math.tanh %42 : vector<8x128xf32>
    %44 = vector.extract_strided_slice %25 {offsets = [0, 384], sizes = [8, 128], strides = [1, 1]} : vector<8x512xf32> to vector<8x128xf32>
    %cst_29 = arith.constant 5.000000e-01 : f32
    %45 = vector.broadcast %cst_29 : f32 to vector<8x128xf32>
    %46 = arith.mulf %45, %44 : vector<8x128xf32>
    %47 = math.tanh %46 : vector<8x128xf32>
    %cst_30 = arith.constant 5.000000e-01 : f32
    %48 = vector.broadcast %cst_30 : f32 to vector<8x128xf32>
    %49 = arith.mulf %48, %47 : vector<8x128xf32>
    %cst_31 = arith.constant 5.000000e-01 : f32
    %50 = vector.broadcast %cst_31 : f32 to vector<8x128xf32>
    %51 = arith.addf %50, %49 : vector<8x128xf32>
    %52 = arith.mulf %41, %18 : vector<8x128xf32>
    %53 = arith.mulf %33, %43 : vector<8x128xf32>
    %54 = arith.addf %52, %53 : vector<8x128xf32>
    %55 = math.tanh %54 : vector<8x128xf32>
    %56 = arith.mulf %51, %55 : vector<8x128xf32>
    %57 = arith.index_cast %20 : i32 to index
    %c0_32 = arith.constant 0 : index
    %58 = vector.load %arg18[%57, %c0_32] : memref<64x128xf32, #tpu.memory_space<vmem>>, vector<8x128xf32>
    tpu.vector_store %arg18[%57, %c0_32], %56 {strides = array<i32>} : memref<64x128xf32, #tpu.memory_space<vmem>>, vector<8x128xf32>,
    %c1_i32 = arith.constant 1 : i32
    %c8_i32_33 = arith.constant 8 : i32
    %59 = arith.muli %c1_i32, %c8_i32_33 : i32
    %60 = tpu.assume_multiple %59, 8 : i32
    %61 = arith.index_cast %60 : i32 to index
    %c0_34 = arith.constant 0 : index
    %62 = vector.load %arg17[%61, %c0_34] : memref<64x512xf32, #tpu.memory_space<vmem>>, vector<8x512xf32>
    %c0_35 = arith.constant 0 : index
    %c0_36 = arith.constant 0 : index
    %63 = vector.load %arg6[%c0_35, %c0_36] : memref<128x512xf32, #tpu.memory_space<vmem>>, vector<128x512xf32>
    %cst_37 = arith.constant dense<0.000000e+00> : vector<8x512xf32>
    %64 = tpu.matmul %56, %63, %cst_37 {dimension_numbers = #tpu.dot_dimension_numbers<[1], [0], [0], [1], [0, 0, 1, 1], [], []>} : vector<8x128xf32>, vector<128x512xf32>, vector<8x512xf32> -> vector<8x512xf32>
    %65 = arith.addf %62, %64 : vector<8x512xf32>
    %66 = vector.extract_strided_slice %65 {offsets = [0, 0], sizes = [8, 128], strides = [1, 1]} : vector<8x512xf32> to vector<8x128xf32>
    %cst_38 = arith.constant 5.000000e-01 : f32
    %67 = vector.broadcast %cst_38 : f32 to vector<8x128xf32>
    %68 = arith.mulf %67, %66 : vector<8x128xf32>
    %69 = math.tanh %68 : vector<8x128xf32>
    %cst_39 = arith.constant 5.000000e-01 : f32
    %70 = vector.broadcast %cst_39 : f32 to vector<8x128xf32>
    %71 = arith.mulf %70, %69 : vector<8x128xf32>
    %cst_40 = arith.constant 5.000000e-01 : f32
    %72 = vector.broadcast %cst_40 : f32 to vector<8x128xf32>
    %73 = arith.addf %72, %71 : vector<8x128xf32>
    %74 = vector.extract_strided_slice %65 {offsets = [0, 128], sizes = [8, 128], strides = [1, 1]} : vector<8x512xf32> to vector<8x128xf32>
    %cst_41 = arith.constant 5.000000e-01 : f32
    %75 = vector.broadcast %cst_41 : f32 to vector<8x128xf32>
    %76 = arith.mulf %75, %74 : vector<8x128xf32>
    %77 = math.tanh %76 : vector<8x128xf32>
    %cst_42 = arith.constant 5.000000e-01 : f32
    %78 = vector.broadcast %cst_42 : f32 to vector<8x128xf32>
    %79 = arith.mulf %78, %77 : vector<8x128xf32>
    %cst_43 = arith.constant 5.000000e-01 : f32
    %80 = vector.broadcast %cst_43 : f32 to vector<8x128xf32>
    %81 = arith.addf %80, %79 : vector<8x128xf32>
    %82 = vector.extract_strided_slice %65 {offsets = [0, 256], sizes = [8, 128], strides = [1, 1]} : vector<8x512xf32> to vector<8x128xf32>
    %83 = math.tanh %82 : vector<8x128xf32>
    %84 = vector.extract_strided_slice %65 {offsets = [0, 384], sizes = [8, 128], strides = [1, 1]} : vector<8x512xf32> to vector<8x128xf32>
    %cst_44 = arith.constant 5.000000e-01 : f32
    %85 = vector.broadcast %cst_44 : f32 to vector<8x128xf32>
    %86 = arith.mulf %85, %84 : vector<8x128xf32>
    %87 = math.tanh %86 : vector<8x128xf32>
    %cst_45 = arith.constant 5.000000e-01 : f32
    %88 = vector.broadcast %cst_45 : f32 to vector<8x128xf32>
    %89 = arith.mulf %88, %87 : vector<8x128xf32>
    %cst_46 = arith.constant 5.000000e-01 : f32
    %90 = vector.broadcast %cst_46 : f32 to vector<8x128xf32>
    %91 = arith.addf %90, %89 : vector<8x128xf32>
    %92 = arith.mulf %81, %54 : vector<8x128xf32>
    %93 = arith.mulf %73, %83 : vector<8x128xf32>
    %94 = arith.addf %92, %93 : vector<8x128xf32>
    %95 = math.tanh %94 : vector<8x128xf32>
    %96 = arith.mulf %91, %95 : vector<8x128xf32>
    %97 = arith.index_cast %60 : i32 to index
    %c0_47 = arith.constant 0 : index
    %98 = vector.load %arg18[%97, %c0_47] : memref<64x128xf32, #tpu.memory_space<vmem>>, vector<8x128xf32>
    tpu.vector_store %arg18[%97, %c0_47], %96 {strides = array<i32>} : memref<64x128xf32, #tpu.memory_space<vmem>>, vector<8x128xf32>,
    %c2_i32 = arith.constant 2 : i32
    %c8_i32_48 = arith.constant 8 : i32
    %99 = arith.muli %c2_i32, %c8_i32_48 : i32
    %100 = tpu.assume_multiple %99, 8 : i32
    %101 = arith.index_cast %100 : i32 to index
    %c0_49 = arith.constant 0 : index
    %102 = vector.load %arg17[%101, %c0_49] : memref<64x512xf32, #tpu.memory_space<vmem>>, vector<8x512xf32>
    %c0_50 = arith.constant 0 : index
    %c0_51 = arith.constant 0 : index
    %103 = vector.load %arg6[%c0_50, %c0_51] : memref<128x512xf32, #tpu.memory_space<vmem>>, vector<128x512xf32>
    %cst_52 = arith.constant dense<0.000000e+00> : vector<8x512xf32>
    %104 = tpu.matmul %96, %103, %cst_52 {dimension_numbers = #tpu.dot_dimension_numbers<[1], [0], [0], [1], [0, 0, 1, 1], [], []>} : vector<8x128xf32>, vector<128x512xf32>, vector<8x512xf32> -> vector<8x512xf32>
    %105 = arith.addf %102, %104 : vector<8x512xf32>
    %106 = vector.extract_strided_slice %105 {offsets = [0, 0], sizes = [8, 128], strides = [1, 1]} : vector<8x512xf32> to vector<8x128xf32>
    %cst_53 = arith.constant 5.000000e-01 : f32
    %107 = vector.broadcast %cst_53 : f32 to vector<8x128xf32>
    %108 = arith.mulf %107, %106 : vector<8x128xf32>
    %109 = math.tanh %108 : vector<8x128xf32>
    %cst_54 = arith.constant 5.000000e-01 : f32
    %110 = vector.broadcast %cst_54 : f32 to vector<8x128xf32>
    %111 = arith.mulf %110, %109 : vector<8x128xf32>
    %cst_55 = arith.constant 5.000000e-01 : f32
    %112 = vector.broadcast %cst_55 : f32 to vector<8x128xf32>
    %113 = arith.addf %112, %111 : vector<8x128xf32>
    %114 = vector.extract_strided_slice %105 {offsets = [0, 128], sizes = [8, 128], strides = [1, 1]} : vector<8x512xf32> to vector<8x128xf32>
    %cst_56 = arith.constant 5.000000e-01 : f32
    %115 = vector.broadcast %cst_56 : f32 to vector<8x128xf32>
    %116 = arith.mulf %115, %114 : vector<8x128xf32>
    %117 = math.tanh %116 : vector<8x128xf32>
    %cst_57 = arith.constant 5.000000e-01 : f32
    %118 = vector.broadcast %cst_57 : f32 to vector<8x128xf32>
    %119 = arith.mulf %118, %117 : vector<8x128xf32>
    %cst_58 = arith.constant 5.000000e-01 : f32
    %120 = vector.broadcast %cst_58 : f32 to vector<8x128xf32>
    %121 = arith.addf %120, %119 : vector<8x128xf32>
    %122 = vector.extract_strided_slice %105 {offsets = [0, 256], sizes = [8, 128], strides = [1, 1]} : vector<8x512xf32> to vector<8x128xf32>
    %123 = math.tanh %122 : vector<8x128xf32>
    %124 = vector.extract_strided_slice %105 {offsets = [0, 384], sizes = [8, 128], strides = [1, 1]} : vector<8x512xf32> to vector<8x128xf32>
    %cst_59 = arith.constant 5.000000e-01 : f32
    %125 = vector.broadcast %cst_59 : f32 to vector<8x128xf32>
    %126 = arith.mulf %125, %124 : vector<8x128xf32>
    %127 = math.tanh %126 : vector<8x128xf32>
    %cst_60 = arith.constant 5.000000e-01 : f32
    %128 = vector.broadcast %cst_60 : f32 to vector<8x128xf32>
    %129 = arith.mulf %128, %127 : vector<8x128xf32>
    %cst_61 = arith.constant 5.000000e-01 : f32
    %130 = vector.broadcast %cst_61 : f32 to vector<8x128xf32>
    %131 = arith.addf %130, %129 : vector<8x128xf32>
    %132 = arith.mulf %121, %94 : vector<8x128xf32>
    %133 = arith.mulf %113, %123 : vector<8x128xf32>
    %134 = arith.addf %132, %133 : vector<8x128xf32>
    %135 = math.tanh %134 : vector<8x128xf32>
    %136 = arith.mulf %131, %135 : vector<8x128xf32>
    %137 = arith.index_cast %100 : i32 to index
    %c0_62 = arith.constant 0 : index
    %138 = vector.load %arg18[%137, %c0_62] : memref<64x128xf32, #tpu.memory_space<vmem>>, vector<8x128xf32>
    tpu.vector_store %arg18[%137, %c0_62], %136 {strides = array<i32>} : memref<64x128xf32, #tpu.memory_space<vmem>>, vector<8x128xf32>,
    %c3_i32 = arith.constant 3 : i32
    %c8_i32_63 = arith.constant 8 : i32
    %139 = arith.muli %c3_i32, %c8_i32_63 : i32
    %140 = tpu.assume_multiple %139, 8 : i32
    %141 = arith.index_cast %140 : i32 to index
    %c0_64 = arith.constant 0 : index
    %142 = vector.load %arg17[%141, %c0_64] : memref<64x512xf32, #tpu.memory_space<vmem>>, vector<8x512xf32>
    %c0_65 = arith.constant 0 : index
    %c0_66 = arith.constant 0 : index
    %143 = vector.load %arg6[%c0_65, %c0_66] : memref<128x512xf32, #tpu.memory_space<vmem>>, vector<128x512xf32>
    %cst_67 = arith.constant dense<0.000000e+00> : vector<8x512xf32>
    %144 = tpu.matmul %136, %143, %cst_67 {dimension_numbers = #tpu.dot_dimension_numbers<[1], [0], [0], [1], [0, 0, 1, 1], [], []>} : vector<8x128xf32>, vector<128x512xf32>, vector<8x512xf32> -> vector<8x512xf32>
    %145 = arith.addf %142, %144 : vector<8x512xf32>
    %146 = vector.extract_strided_slice %145 {offsets = [0, 0], sizes = [8, 128], strides = [1, 1]} : vector<8x512xf32> to vector<8x128xf32>
    %cst_68 = arith.constant 5.000000e-01 : f32
    %147 = vector.broadcast %cst_68 : f32 to vector<8x128xf32>
    %148 = arith.mulf %147, %146 : vector<8x128xf32>
    %149 = math.tanh %148 : vector<8x128xf32>
    %cst_69 = arith.constant 5.000000e-01 : f32
    %150 = vector.broadcast %cst_69 : f32 to vector<8x128xf32>
    %151 = arith.mulf %150, %149 : vector<8x128xf32>
    %cst_70 = arith.constant 5.000000e-01 : f32
    %152 = vector.broadcast %cst_70 : f32 to vector<8x128xf32>
    %153 = arith.addf %152, %151 : vector<8x128xf32>
    %154 = vector.extract_strided_slice %145 {offsets = [0, 128], sizes = [8, 128], strides = [1, 1]} : vector<8x512xf32> to vector<8x128xf32>
    %cst_71 = arith.constant 5.000000e-01 : f32
    %155 = vector.broadcast %cst_71 : f32 to vector<8x128xf32>
    %156 = arith.mulf %155, %154 : vector<8x128xf32>
    %157 = math.tanh %156 : vector<8x128xf32>
    %cst_72 = arith.constant 5.000000e-01 : f32
    %158 = vector.broadcast %cst_72 : f32 to vector<8x128xf32>
    %159 = arith.mulf %158, %157 : vector<8x128xf32>
    %cst_73 = arith.constant 5.000000e-01 : f32
    %160 = vector.broadcast %cst_73 : f32 to vector<8x128xf32>
    %161 = arith.addf %160, %159 : vector<8x128xf32>
    %162 = vector.extract_strided_slice %145 {offsets = [0, 256], sizes = [8, 128], strides = [1, 1]} : vector<8x512xf32> to vector<8x128xf32>
    %163 = math.tanh %162 : vector<8x128xf32>
    %164 = vector.extract_strided_slice %145 {offsets = [0, 384], sizes = [8, 128], strides = [1, 1]} : vector<8x512xf32> to vector<8x128xf32>
    %cst_74 = arith.constant 5.000000e-01 : f32
    %165 = vector.broadcast %cst_74 : f32 to vector<8x128xf32>
    %166 = arith.mulf %165, %164 : vector<8x128xf32>
    %167 = math.tanh %166 : vector<8x128xf32>
    %cst_75 = arith.constant 5.000000e-01 : f32
    %168 = vector.broadcast %cst_75 : f32 to vector<8x128xf32>
    %169 = arith.mulf %168, %167 : vector<8x128xf32>
    %cst_76 = arith.constant 5.000000e-01 : f32
    %170 = vector.broadcast %cst_76 : f32 to vector<8x128xf32>
    %171 = arith.addf %170, %169 : vector<8x128xf32>
    %172 = arith.mulf %161, %134 : vector<8x128xf32>
    %173 = arith.mulf %153, %163 : vector<8x128xf32>
    %174 = arith.addf %172, %173 : vector<8x128xf32>
    %175 = math.tanh %174 : vector<8x128xf32>
    %176 = arith.mulf %171, %175 : vector<8x128xf32>
    %177 = arith.index_cast %140 : i32 to index
    %c0_77 = arith.constant 0 : index
    %178 = vector.load %arg18[%177, %c0_77] : memref<64x128xf32, #tpu.memory_space<vmem>>, vector<8x128xf32>
    tpu.vector_store %arg18[%177, %c0_77], %176 {strides = array<i32>} : memref<64x128xf32, #tpu.memory_space<vmem>>, vector<8x128xf32>,
    %c4_i32 = arith.constant 4 : i32
    %c8_i32_78 = arith.constant 8 : i32
    %179 = arith.muli %c4_i32, %c8_i32_78 : i32
    %180 = tpu.assume_multiple %179, 8 : i32
    %181 = arith.index_cast %180 : i32 to index
    %c0_79 = arith.constant 0 : index
    %182 = vector.load %arg17[%181, %c0_79] : memref<64x512xf32, #tpu.memory_space<vmem>>, vector<8x512xf32>
    %c0_80 = arith.constant 0 : index
    %c0_81 = arith.constant 0 : index
    %183 = vector.load %arg6[%c0_80, %c0_81] : memref<128x512xf32, #tpu.memory_space<vmem>>, vector<128x512xf32>
    %cst_82 = arith.constant dense<0.000000e+00> : vector<8x512xf32>
    %184 = tpu.matmul %176, %183, %cst_82 {dimension_numbers = #tpu.dot_dimension_numbers<[1], [0], [0], [1], [0, 0, 1, 1], [], []>} : vector<8x128xf32>, vector<128x512xf32>, vector<8x512xf32> -> vector<8x512xf32>
    %185 = arith.addf %182, %184 : vector<8x512xf32>
    %186 = vector.extract_strided_slice %185 {offsets = [0, 0], sizes = [8, 128], strides = [1, 1]} : vector<8x512xf32> to vector<8x128xf32>
    %cst_83 = arith.constant 5.000000e-01 : f32
    %187 = vector.broadcast %cst_83 : f32 to vector<8x128xf32>
    %188 = arith.mulf %187, %186 : vector<8x128xf32>
    %189 = math.tanh %188 : vector<8x128xf32>
    %cst_84 = arith.constant 5.000000e-01 : f32
    %190 = vector.broadcast %cst_84 : f32 to vector<8x128xf32>
    %191 = arith.mulf %190, %189 : vector<8x128xf32>
    %cst_85 = arith.constant 5.000000e-01 : f32
    %192 = vector.broadcast %cst_85 : f32 to vector<8x128xf32>
    %193 = arith.addf %192, %191 : vector<8x128xf32>
    %194 = vector.extract_strided_slice %185 {offsets = [0, 128], sizes = [8, 128], strides = [1, 1]} : vector<8x512xf32> to vector<8x128xf32>
    %cst_86 = arith.constant 5.000000e-01 : f32
    %195 = vector.broadcast %cst_86 : f32 to vector<8x128xf32>
    %196 = arith.mulf %195, %194 : vector<8x128xf32>
    %197 = math.tanh %196 : vector<8x128xf32>
    %cst_87 = arith.constant 5.000000e-01 : f32
    %198 = vector.broadcast %cst_87 : f32 to vector<8x128xf32>
    %199 = arith.mulf %198, %197 : vector<8x128xf32>
    %cst_88 = arith.constant 5.000000e-01 : f32
    %200 = vector.broadcast %cst_88 : f32 to vector<8x128xf32>
    %201 = arith.addf %200, %199 : vector<8x128xf32>
    %202 = vector.extract_strided_slice %185 {offsets = [0, 256], sizes = [8, 128], strides = [1, 1]} : vector<8x512xf32> to vector<8x128xf32>
    %203 = math.tanh %202 : vector<8x128xf32>
    %204 = vector.extract_strided_slice %185 {offsets = [0, 384], sizes = [8, 128], strides = [1, 1]} : vector<8x512xf32> to vector<8x128xf32>
    %cst_89 = arith.constant 5.000000e-01 : f32
    %205 = vector.broadcast %cst_89 : f32 to vector<8x128xf32>
    %206 = arith.mulf %205, %204 : vector<8x128xf32>
    %207 = math.tanh %206 : vector<8x128xf32>
    %cst_90 = arith.constant 5.000000e-01 : f32
    %208 = vector.broadcast %cst_90 : f32 to vector<8x128xf32>
    %209 = arith.mulf %208, %207 : vector<8x128xf32>
    %cst_91 = arith.constant 5.000000e-01 : f32
    %210 = vector.broadcast %cst_91 : f32 to vector<8x128xf32>
    %211 = arith.addf %210, %209 : vector<8x128xf32>
    %212 = arith.mulf %201, %174 : vector<8x128xf32>
    %213 = arith.mulf %193, %203 : vector<8x128xf32>
    %214 = arith.addf %212, %213 : vector<8x128xf32>
    %215 = math.tanh %214 : vector<8x128xf32>
    %216 = arith.mulf %211, %215 : vector<8x128xf32>
    %217 = arith.index_cast %180 : i32 to index
    %c0_92 = arith.constant 0 : index
    %218 = vector.load %arg18[%217, %c0_92] : memref<64x128xf32, #tpu.memory_space<vmem>>, vector<8x128xf32>
    tpu.vector_store %arg18[%217, %c0_92], %216 {strides = array<i32>} : memref<64x128xf32, #tpu.memory_space<vmem>>, vector<8x128xf32>,
    %c5_i32 = arith.constant 5 : i32
    %c8_i32_93 = arith.constant 8 : i32
    %219 = arith.muli %c5_i32, %c8_i32_93 : i32
    %220 = tpu.assume_multiple %219, 8 : i32
    %221 = arith.index_cast %220 : i32 to index
    %c0_94 = arith.constant 0 : index
    %222 = vector.load %arg17[%221, %c0_94] : memref<64x512xf32, #tpu.memory_space<vmem>>, vector<8x512xf32>
    %c0_95 = arith.constant 0 : index
    %c0_96 = arith.constant 0 : index
    %223 = vector.load %arg6[%c0_95, %c0_96] : memref<128x512xf32, #tpu.memory_space<vmem>>, vector<128x512xf32>
    %cst_97 = arith.constant dense<0.000000e+00> : vector<8x512xf32>
    %224 = tpu.matmul %216, %223, %cst_97 {dimension_numbers = #tpu.dot_dimension_numbers<[1], [0], [0], [1], [0, 0, 1, 1], [], []>} : vector<8x128xf32>, vector<128x512xf32>, vector<8x512xf32> -> vector<8x512xf32>
    %225 = arith.addf %222, %224 : vector<8x512xf32>
    %226 = vector.extract_strided_slice %225 {offsets = [0, 0], sizes = [8, 128], strides = [1, 1]} : vector<8x512xf32> to vector<8x128xf32>
    %cst_98 = arith.constant 5.000000e-01 : f32
    %227 = vector.broadcast %cst_98 : f32 to vector<8x128xf32>
    %228 = arith.mulf %227, %226 : vector<8x128xf32>
    %229 = math.tanh %228 : vector<8x128xf32>
    %cst_99 = arith.constant 5.000000e-01 : f32
    %230 = vector.broadcast %cst_99 : f32 to vector<8x128xf32>
    %231 = arith.mulf %230, %229 : vector<8x128xf32>
    %cst_100 = arith.constant 5.000000e-01 : f32
    %232 = vector.broadcast %cst_100 : f32 to vector<8x128xf32>
    %233 = arith.addf %232, %231 : vector<8x128xf32>
    %234 = vector.extract_strided_slice %225 {offsets = [0, 128], sizes = [8, 128], strides = [1, 1]} : vector<8x512xf32> to vector<8x128xf32>
    %cst_101 = arith.constant 5.000000e-01 : f32
    %235 = vector.broadcast %cst_101 : f32 to vector<8x128xf32>
    %236 = arith.mulf %235, %234 : vector<8x128xf32>
    %237 = math.tanh %236 : vector<8x128xf32>
    %cst_102 = arith.constant 5.000000e-01 : f32
    %238 = vector.broadcast %cst_102 : f32 to vector<8x128xf32>
    %239 = arith.mulf %238, %237 : vector<8x128xf32>
    %cst_103 = arith.constant 5.000000e-01 : f32
    %240 = vector.broadcast %cst_103 : f32 to vector<8x128xf32>
    %241 = arith.addf %240, %239 : vector<8x128xf32>
    %242 = vector.extract_strided_slice %225 {offsets = [0, 256], sizes = [8, 128], strides = [1, 1]} : vector<8x512xf32> to vector<8x128xf32>
    %243 = math.tanh %242 : vector<8x128xf32>
    %244 = vector.extract_strided_slice %225 {offsets = [0, 384], sizes = [8, 128], strides = [1, 1]} : vector<8x512xf32> to vector<8x128xf32>
    %cst_104 = arith.constant 5.000000e-01 : f32
    %245 = vector.broadcast %cst_104 : f32 to vector<8x128xf32>
    %246 = arith.mulf %245, %244 : vector<8x128xf32>
    %247 = math.tanh %246 : vector<8x128xf32>
    %cst_105 = arith.constant 5.000000e-01 : f32
    %248 = vector.broadcast %cst_105 : f32 to vector<8x128xf32>
    %249 = arith.mulf %248, %247 : vector<8x128xf32>
    %cst_106 = arith.constant 5.000000e-01 : f32
    %250 = vector.broadcast %cst_106 : f32 to vector<8x128xf32>
    %251 = arith.addf %250, %249 : vector<8x128xf32>
    %252 = arith.mulf %241, %214 : vector<8x128xf32>
    %253 = arith.mulf %233, %243 : vector<8x128xf32>
    %254 = arith.addf %252, %253 : vector<8x128xf32>
    %255 = math.tanh %254 : vector<8x128xf32>
    %256 = arith.mulf %251, %255 : vector<8x128xf32>
    %257 = arith.index_cast %220 : i32 to index
    %c0_107 = arith.constant 0 : index
    %258 = vector.load %arg18[%257, %c0_107] : memref<64x128xf32, #tpu.memory_space<vmem>>, vector<8x128xf32>
    tpu.vector_store %arg18[%257, %c0_107], %256 {strides = array<i32>} : memref<64x128xf32, #tpu.memory_space<vmem>>, vector<8x128xf32>,
    %c6_i32 = arith.constant 6 : i32
    %c8_i32_108 = arith.constant 8 : i32
    %259 = arith.muli %c6_i32, %c8_i32_108 : i32
    %260 = tpu.assume_multiple %259, 8 : i32
    %261 = arith.index_cast %260 : i32 to index
    %c0_109 = arith.constant 0 : index
    %262 = vector.load %arg17[%261, %c0_109] : memref<64x512xf32, #tpu.memory_space<vmem>>, vector<8x512xf32>
    %c0_110 = arith.constant 0 : index
    %c0_111 = arith.constant 0 : index
    %263 = vector.load %arg6[%c0_110, %c0_111] : memref<128x512xf32, #tpu.memory_space<vmem>>, vector<128x512xf32>
    %cst_112 = arith.constant dense<0.000000e+00> : vector<8x512xf32>
    %264 = tpu.matmul %256, %263, %cst_112 {dimension_numbers = #tpu.dot_dimension_numbers<[1], [0], [0], [1], [0, 0, 1, 1], [], []>} : vector<8x128xf32>, vector<128x512xf32>, vector<8x512xf32> -> vector<8x512xf32>
    %265 = arith.addf %262, %264 : vector<8x512xf32>
    %266 = vector.extract_strided_slice %265 {offsets = [0, 0], sizes = [8, 128], strides = [1, 1]} : vector<8x512xf32> to vector<8x128xf32>
    %cst_113 = arith.constant 5.000000e-01 : f32
    %267 = vector.broadcast %cst_113 : f32 to vector<8x128xf32>
    %268 = arith.mulf %267, %266 : vector<8x128xf32>
    %269 = math.tanh %268 : vector<8x128xf32>
    %cst_114 = arith.constant 5.000000e-01 : f32
    %270 = vector.broadcast %cst_114 : f32 to vector<8x128xf32>
    %271 = arith.mulf %270, %269 : vector<8x128xf32>
    %cst_115 = arith.constant 5.000000e-01 : f32
    %272 = vector.broadcast %cst_115 : f32 to vector<8x128xf32>
    %273 = arith.addf %272, %271 : vector<8x128xf32>
    %274 = vector.extract_strided_slice %265 {offsets = [0, 128], sizes = [8, 128], strides = [1, 1]} : vector<8x512xf32> to vector<8x128xf32>
    %cst_116 = arith.constant 5.000000e-01 : f32
    %275 = vector.broadcast %cst_116 : f32 to vector<8x128xf32>
    %276 = arith.mulf %275, %274 : vector<8x128xf32>
    %277 = math.tanh %276 : vector<8x128xf32>
    %cst_117 = arith.constant 5.000000e-01 : f32
    %278 = vector.broadcast %cst_117 : f32 to vector<8x128xf32>
    %279 = arith.mulf %278, %277 : vector<8x128xf32>
    %cst_118 = arith.constant 5.000000e-01 : f32
    %280 = vector.broadcast %cst_118 : f32 to vector<8x128xf32>
    %281 = arith.addf %280, %279 : vector<8x128xf32>
    %282 = vector.extract_strided_slice %265 {offsets = [0, 256], sizes = [8, 128], strides = [1, 1]} : vector<8x512xf32> to vector<8x128xf32>
    %283 = math.tanh %282 : vector<8x128xf32>
    %284 = vector.extract_strided_slice %265 {offsets = [0, 384], sizes = [8, 128], strides = [1, 1]} : vector<8x512xf32> to vector<8x128xf32>
    %cst_119 = arith.constant 5.000000e-01 : f32
    %285 = vector.broadcast %cst_119 : f32 to vector<8x128xf32>
    %286 = arith.mulf %285, %284 : vector<8x128xf32>
    %287 = math.tanh %286 : vector<8x128xf32>
    %cst_120 = arith.constant 5.000000e-01 : f32
    %288 = vector.broadcast %cst_120 : f32 to vector<8x128xf32>
    %289 = arith.mulf %288, %287 : vector<8x128xf32>
    %cst_121 = arith.constant 5.000000e-01 : f32
    %290 = vector.broadcast %cst_121 : f32 to vector<8x128xf32>
    %291 = arith.addf %290, %289 : vector<8x128xf32>
    %292 = arith.mulf %281, %254 : vector<8x128xf32>
    %293 = arith.mulf %273, %283 : vector<8x128xf32>
    %294 = arith.addf %292, %293 : vector<8x128xf32>
    %295 = math.tanh %294 : vector<8x128xf32>
    %296 = arith.mulf %291, %295 : vector<8x128xf32>
    %297 = arith.index_cast %260 : i32 to index
    %c0_122 = arith.constant 0 : index
    %298 = vector.load %arg18[%297, %c0_122] : memref<64x128xf32, #tpu.memory_space<vmem>>, vector<8x128xf32>
    tpu.vector_store %arg18[%297, %c0_122], %296 {strides = array<i32>} : memref<64x128xf32, #tpu.memory_space<vmem>>, vector<8x128xf32>,
    %c7_i32 = arith.constant 7 : i32
    %c8_i32_123 = arith.constant 8 : i32
    %299 = arith.muli %c7_i32, %c8_i32_123 : i32
    %300 = tpu.assume_multiple %299, 8 : i32
    %301 = arith.index_cast %300 : i32 to index
    %c0_124 = arith.constant 0 : index
    %302 = vector.load %arg17[%301, %c0_124] : memref<64x512xf32, #tpu.memory_space<vmem>>, vector<8x512xf32>
    %c0_125 = arith.constant 0 : index
    %c0_126 = arith.constant 0 : index
    %303 = vector.load %arg6[%c0_125, %c0_126] : memref<128x512xf32, #tpu.memory_space<vmem>>, vector<128x512xf32>
    %cst_127 = arith.constant dense<0.000000e+00> : vector<8x512xf32>
    %304 = tpu.matmul %296, %303, %cst_127 {dimension_numbers = #tpu.dot_dimension_numbers<[1], [0], [0], [1], [0, 0, 1, 1], [], []>} : vector<8x128xf32>, vector<128x512xf32>, vector<8x512xf32> -> vector<8x512xf32>
    %305 = arith.addf %302, %304 : vector<8x512xf32>
    %306 = vector.extract_strided_slice %305 {offsets = [0, 0], sizes = [8, 128], strides = [1, 1]} : vector<8x512xf32> to vector<8x128xf32>
    %cst_128 = arith.constant 5.000000e-01 : f32
    %307 = vector.broadcast %cst_128 : f32 to vector<8x128xf32>
    %308 = arith.mulf %307, %306 : vector<8x128xf32>
    %309 = math.tanh %308 : vector<8x128xf32>
    %cst_129 = arith.constant 5.000000e-01 : f32
    %310 = vector.broadcast %cst_129 : f32 to vector<8x128xf32>
    %311 = arith.mulf %310, %309 : vector<8x128xf32>
    %cst_130 = arith.constant 5.000000e-01 : f32
    %312 = vector.broadcast %cst_130 : f32 to vector<8x128xf32>
    %313 = arith.addf %312, %311 : vector<8x128xf32>
    %314 = vector.extract_strided_slice %305 {offsets = [0, 128], sizes = [8, 128], strides = [1, 1]} : vector<8x512xf32> to vector<8x128xf32>
    %cst_131 = arith.constant 5.000000e-01 : f32
    %315 = vector.broadcast %cst_131 : f32 to vector<8x128xf32>
    %316 = arith.mulf %315, %314 : vector<8x128xf32>
    %317 = math.tanh %316 : vector<8x128xf32>
    %cst_132 = arith.constant 5.000000e-01 : f32
    %318 = vector.broadcast %cst_132 : f32 to vector<8x128xf32>
    %319 = arith.mulf %318, %317 : vector<8x128xf32>
    %cst_133 = arith.constant 5.000000e-01 : f32
    %320 = vector.broadcast %cst_133 : f32 to vector<8x128xf32>
    %321 = arith.addf %320, %319 : vector<8x128xf32>
    %322 = vector.extract_strided_slice %305 {offsets = [0, 256], sizes = [8, 128], strides = [1, 1]} : vector<8x512xf32> to vector<8x128xf32>
    %323 = math.tanh %322 : vector<8x128xf32>
    %324 = vector.extract_strided_slice %305 {offsets = [0, 384], sizes = [8, 128], strides = [1, 1]} : vector<8x512xf32> to vector<8x128xf32>
    %cst_134 = arith.constant 5.000000e-01 : f32
    %325 = vector.broadcast %cst_134 : f32 to vector<8x128xf32>
    %326 = arith.mulf %325, %324 : vector<8x128xf32>
    %327 = math.tanh %326 : vector<8x128xf32>
    %cst_135 = arith.constant 5.000000e-01 : f32
    %328 = vector.broadcast %cst_135 : f32 to vector<8x128xf32>
    %329 = arith.mulf %328, %327 : vector<8x128xf32>
    %cst_136 = arith.constant 5.000000e-01 : f32
    %330 = vector.broadcast %cst_136 : f32 to vector<8x128xf32>
    %331 = arith.addf %330, %329 : vector<8x128xf32>
    %332 = arith.mulf %321, %294 : vector<8x128xf32>
    %333 = arith.mulf %313, %323 : vector<8x128xf32>
    %334 = arith.addf %332, %333 : vector<8x128xf32>
    %335 = math.tanh %334 : vector<8x128xf32>
    %336 = arith.mulf %331, %335 : vector<8x128xf32>
    %337 = arith.index_cast %300 : i32 to index
    %c0_137 = arith.constant 0 : index
    %338 = vector.load %arg18[%337, %c0_137] : memref<64x128xf32, #tpu.memory_space<vmem>>, vector<8x128xf32>
    tpu.vector_store %arg18[%337, %c0_137], %336 {strides = array<i32>} : memref<64x128xf32, #tpu.memory_space<vmem>>, vector<8x128xf32>,
    %c8_i32_138 = arith.constant 8 : i32
    %c0_139 = arith.constant 0 : index
    %c0_140 = arith.constant 0 : index
    %339 = vector.load %arg15[%c0_139, %c0_140] : memref<8x128xf32, #tpu.memory_space<vmem>>, vector<8x128xf32>
    tpu.vector_store %arg15[%c0_139, %c0_140], %336 {strides = array<i32>} : memref<8x128xf32, #tpu.memory_space<vmem>>, vector<8x128xf32>,
    %c0_141 = arith.constant 0 : index
    %c0_142 = arith.constant 0 : index
    %340 = vector.load %arg16[%c0_141, %c0_142] : memref<8x128xf32, #tpu.memory_space<vmem>>, vector<8x128xf32>
    tpu.vector_store %arg16[%c0_141, %c0_142], %334 {strides = array<i32>} : memref<8x128xf32, #tpu.memory_space<vmem>>, vector<8x128xf32>,
    %c0_143 = arith.constant 0 : index
    %c0_144 = arith.constant 0 : index
    %341 = vector.load %arg18[%c0_143, %c0_144] : memref<64x128xf32, #tpu.memory_space<vmem>>, vector<64x128xf32>
    %c0_145 = arith.constant 0 : index
    %c0_146 = arith.constant 0 : index
    %342 = vector.load %arg8[%c0_145, %c0_146] : memref<128x128xf32, #tpu.memory_space<vmem>>, vector<128x128xf32>
    %cst_147 = arith.constant dense<0.000000e+00> : vector<64x128xf32>
    %343 = tpu.matmul %341, %342, %cst_147 {dimension_numbers = #tpu.dot_dimension_numbers<[1], [0], [0], [1], [0, 0, 1, 1], [], []>} : vector<64x128xf32>, vector<128x128xf32>, vector<64x128xf32> -> vector<64x128xf32>
    %c0_148 = arith.constant 0 : index
    %c0_149 = arith.constant 0 : index
    %344 = vector.load %arg9[%c0_148, %c0_149] : memref<1x128xf32, #tpu.memory_space<vmem>>, vector<1x128xf32>
    %345 = vector.broadcast %344 : vector<1x128xf32> to vector<64x128xf32>
    %346 = arith.addf %343, %345 : vector<64x128xf32>
    %c0_150 = arith.constant 0 : index
    %c0_151 = arith.constant 0 : index
    %347 = vector.load %arg12[%c0_150, %c0_151] : memref<64x128xf32, #tpu.memory_space<vmem>>, vector<64x128xf32>
    tpu.vector_store %arg12[%c0_150, %c0_151], %346 {strides = array<i32>} : memref<64x128xf32, #tpu.memory_space<vmem>>, vector<64x128xf32>,
    %c0_i32_152 = arith.constant 0 : i32
    %348 = arith.cmpi eq, %arg1, %c0_i32_152 : i32
    %349 = arith.extui %348 : i1 to i32
    %c0_i32_153 = arith.constant 0 : i32
    %350 = arith.cmpi ne, %349, %c0_i32_153 : i32
    scf.if %350 {
      %c0_154 = arith.constant 0 : index
      %c0_155 = arith.constant 0 : index
      %351 = vector.load %arg13[%c0_154, %c0_155] : memref<8x128xf32, #tpu.memory_space<vmem>>, vector<8x128xf32>
      tpu.vector_store %arg13[%c0_154, %c0_155], %336 {strides = array<i32>} : memref<8x128xf32, #tpu.memory_space<vmem>>, vector<8x128xf32>,
      %c0_156 = arith.constant 0 : index
      %c0_157 = arith.constant 0 : index
      %352 = vector.load %arg14[%c0_156, %c0_157] : memref<8x128xf32, #tpu.memory_space<vmem>>, vector<8x128xf32>
      tpu.vector_store %arg14[%c0_156, %c0_157], %334 {strides = array<i32>} : memref<8x128xf32, #tpu.memory_space<vmem>>, vector<8x128xf32>,
    } else {
    }
    return
  }
  func.func @transform_0(%arg0: i32, %arg1: i32) -> (i32, i32) {
    %c1_i32 = arith.constant 1 : i32
    %0 = arith.muli %arg0, %c1_i32 : i32
    %1 = arith.addi %0, %arg1 : i32
    %c0_i32 = arith.constant 0 : i32
    %c0_i32_0 = arith.constant 0 : i32
    return %1, %c0_i32 : i32, i32
  }
  func.func @transform_1(%arg0: i32, %arg1: i32) -> (i32, i32) {
    %c0_i32 = arith.constant 0 : i32
    %c0_i32_0 = arith.constant 0 : i32
    %c0_i32_1 = arith.constant 0 : i32
    return %c0_i32, %c0_i32_0 : i32, i32
  }
  func.func @transform_2(%arg0: i32, %arg1: i32) -> (i32, i32) {
    %c0_i32 = arith.constant 0 : i32
    %c0_i32_0 = arith.constant 0 : i32
    %c0_i32_1 = arith.constant 0 : i32
    return %c0_i32, %c0_i32_0 : i32, i32
  }
  func.func @transform_3(%arg0: i32, %arg1: i32) -> (i32, i32) {
    %c0_i32 = arith.constant 0 : i32
    %c0_i32_0 = arith.constant 0 : i32
    %c0_i32_1 = arith.constant 0 : i32
    return %c0_i32, %c0_i32_0 : i32, i32
  }
  func.func @transform_4(%arg0: i32, %arg1: i32) -> (i32, i32) {
    %c0_i32 = arith.constant 0 : i32
    %c0_i32_0 = arith.constant 0 : i32
    %c0_i32_1 = arith.constant 0 : i32
    return %c0_i32, %c0_i32_0 : i32, i32
  }
  func.func @transform_5(%arg0: i32, %arg1: i32) -> (i32, i32) {
    %c0_i32 = arith.constant 0 : i32
    %c0_i32_0 = arith.constant 0 : i32
    %c0_i32_1 = arith.constant 0 : i32
    return %c0_i32, %c0_i32_0 : i32, i32
  }
  func.func @transform_6(%arg0: i32, %arg1: i32) -> (i32, i32) {
    %c0_i32 = arith.constant 0 : i32
    %c0_i32_0 = arith.constant 0 : i32
    %c0_i32_1 = arith.constant 0 : i32
    return %c0_i32, %c0_i32_0 : i32, i32
  }
  func.func @transform_7(%arg0: i32, %arg1: i32) -> (i32, i32) {
    %c0_i32 = arith.constant 0 : i32
    %c0_i32_0 = arith.constant 0 : i32
    %c0_i32_1 = arith.constant 0 : i32
    return %c0_i32, %c0_i32_0 : i32, i32
  }
  func.func @transform_8(%arg0: i32, %arg1: i32) -> (i32, i32) {
    %c0_i32 = arith.constant 0 : i32
    %c0_i32_0 = arith.constant 0 : i32
    return %arg0, %c0_i32 : i32, i32
  }
  func.func @transform_9(%arg0: i32, %arg1: i32) -> (i32, i32) {
    %c0_i32 = arith.constant 0 : i32
    %c0_i32_0 = arith.constant 0 : i32
    return %arg0, %c0_i32 : i32, i32
  }
  func.func @transform_10(%arg0: i32, %arg1: i32) -> (i32, i32) {
    %c1_i32 = arith.constant 1 : i32
    %0 = arith.muli %arg0, %c1_i32 : i32
    %1 = arith.addi %0, %arg1 : i32
    %c0_i32 = arith.constant 0 : i32
    %c0_i32_0 = arith.constant 0 : i32
    return %1, %c0_i32 : i32, i32
  }
  func.func @transform_11(%arg0: i32, %arg1: i32) -> (i32, i32) {
    %c0_i32 = arith.constant 0 : i32
    %c0_i32_0 = arith.constant 0 : i32
    return %arg0, %c0_i32 : i32, i32
  }
  func.func @transform_12(%arg0: i32, %arg1: i32) -> (i32, i32) {
    %c0_i32 = arith.constant 0 : i32
    %c0_i32_0 = arith.constant 0 : i32
    return %arg0, %c0_i32 : i32, i32
  }
}

</mosaic_0001>

<llo_original>
// kernel: tpu_custom_call.1
$region0: #{tpu_custom_call.1}
  #allocation0 [shape = 'u32[]', space=smem, size = 0x4, offset = 0x4, fixed_abs, tag = 'smem constant byte address 0x4 - core index']
  #allocation1 [shape = 'u32[72,128]{1,0:T(1,128)}', space=vmem, size = 0x9000, scoped, tag = 'internal scratch']
  #allocation2 [shape = 'f32[8,128]{1,0:T(8,128)}', space=vmem, size = 0x1000, scoped, tag = 'scratch operand']
  #allocation3 [shape = 'f32[8,128]{1,0:T(8,128)}', space=vmem, size = 0x1000, scoped, tag = 'scratch operand']
  #allocation4 [shape = 'f32[64,512]{1,0:T(8,128)}', space=vmem, size = 0x20000, scoped, tag = 'scratch operand']
  #allocation5 [shape = 'f32[64,128]{1,0:T(8,128)}', space=vmem, size = 0x8000, scoped, tag = 'scratch operand']
  %s0 = inlined_call_operand.hbm [shape: f32[64,128], index: 0, kind: input, shape index: {}]
  %s1 = inlined_call_operand.hbm [shape: f32[128,128], index: 1, kind: input, shape index: {}]
  %s2 = inlined_call_operand.hbm [shape: f32[1,128], index: 2, kind: input, shape index: {}]
  %s3 = inlined_call_operand.hbm [shape: f32[128,512], index: 3, kind: input, shape index: {}]
  %s4 = inlined_call_operand.hbm [shape: f32[128,512], index: 4, kind: input, shape index: {}]
  %s5 = inlined_call_operand.hbm [shape: f32[1,512], index: 5, kind: input, shape index: {}]
  %s6 = inlined_call_operand.hbm [shape: f32[128,128], index: 6, kind: input, shape index: {}]
  %s7 = inlined_call_operand.hbm [shape: f32[1,128], index: 7, kind: input, shape index: {}]
  %s8 = inlined_call_operand.hbm [shape: f32[8,128], index: 8, kind: input, shape index: {}]
  %s9 = inlined_call_operand.vmem [shape: f32[8,128], index: 9, kind: input, shape index: {}]
  %s10 = inlined_call_operand.hbm [shape: f32[64,128], index: 10, kind: output, shape index: {0}]
  %s11 = inlined_call_operand.hbm [shape: f32[8,128], index: 11, kind: output, shape index: {1}]
  %s12 = inlined_call_operand.hbm [shape: f32[8,128], index: 12, kind: output, shape index: {2}]
  %13 = xla_tuple %s10, %s11, %s12
  %s14 = sld [smem:[#allocation0]]
  $region110: #{tpu_custom_call.1} parent=0
    _
  %s16 = ssub.s32 1, %s14
  %s17 = scalar_select 0, %s16, %s14
  $region1: #{tpu_custom_call.1} parent=0
    #allocation6 [shape = 'u8[32768]{0}', space=vmem, size = 0x8000, scoped, tag = 'input window, operand 0, single buffered']
    #allocation7 [shape = 's32[1]{0}', space=sflag, size = 0x4, scoped, tag = 'scoped memory for tpu_custom_call.1']
    #allocation8 [shape = 's32[1]{0}', space=sflag, size = 0x4, scoped, tag = 'scoped memory for tpu_custom_call.1']
    #allocation9 [shape = 'u8[65536]{0}', space=vmem, size = 0x10000, scoped, tag = 'input window, operand 1, single buffered']
    #allocation10 [shape = 's32[1]{0}', space=sflag, size = 0x4, scoped, tag = 'scoped memory for tpu_custom_call.1']
    #allocation11 [shape = 'u8[512]{0}', space=vmem, size = 0x400, scoped, tag = 'input window, operand 2, single buffered']
    #allocation12 [shape = 'u8[262144]{0}', space=vmem, size = 0x40000, scoped, tag = 'input window, operand 3, single buffered']
    #allocation13 [shape = 's32[1]{0}', space=sflag, size = 0x4, scoped, tag = 'scoped memory for tpu_custom_call.1']
    #allocation14 [shape = 'u8[262144]{0}', space=vmem, size = 0x40000, scoped, tag = 'input window, operand 4, single buffered']
    #allocation15 [shape = 'u8[2048]{0}', space=vmem, size = 0x800, scoped, tag = 'input window, operand 5, single buffered']
    #allocation16 [shape = 's32[1]{0}', space=sflag, size = 0x4, scoped, tag = 'scoped memory for tpu_custom_call.1']
    #allocation17 [shape = 'u8[65536]{0}', space=vmem, size = 0x10000, scoped, tag = 'input window, operand 6, single buffered']
    #allocation18 [shape = 'u8[512]{0}', space=vmem, size = 0x400, scoped, tag = 'input window, operand 7, single buffered']
    #allocation19 [shape = 's32[1]{0}', space=sflag, size = 0x4, scoped, tag = 'scoped memory for tpu_custom_call.1']
    #allocation20 [shape = 'u8[4096]{0}', space=vmem, size = 0x1000, scoped, tag = 'input window, operand 8, single buffered']
    #allocation21 [shape = 'u8[32768]{0}', space=vmem, size = 0x8000, scoped, tag = 'output window, operand 0, single buffered']
    #allocation22 [shape = 'u8[4096]{0}', space=vmem, size = 0x1000, scoped, tag = 'output window, operand 1, single buffered']
    #allocation23 [shape = 's32[1]{0}', space=sflag, size = 0x4, scoped, tag = 'scoped memory for tpu_custom_call.1']
    #allocation24 [shape = 'u8[4096]{0}', space=vmem, size = 0x1000, scoped, tag = 'output window, operand 2, single buffered']
    %18 = vsyncpa [#allocation7], 0
    %19 = vsyncpa [#allocation10], 0
    %20 = vsyncpa [#allocation13], 0
    %21 = vsyncpa [#allocation16], 0
    %22 = vsyncpa [#allocation19], 0
    %23 = vsyncpa [#allocation8], 0
    %24 = vsyncpa [#allocation23], 0
    // Predicated region
    $region2: #{tpu_custom_call.1} parent=1 // pred_check
      _
    $region3: #{tpu_custom_call.1} parent=1 // pred_check_branch
      %26 = sbr.rel (0) target = $region5
    $region4: #{tpu_custom_call.1} parent=1 // pred_region
      %s27 = sadd.s32 0, 0
      %s28 = smul.u32 8, %s27
      %30 = vsyncadd [#allocation7], 0
      %s31 = smul.addr %s28, 8
      %s32 = scalar_lea.hbm %s0, %s31
      %s33 = sshll.u32 %s32, 4
      %s34 = int_to_ptr.hbm [resolvable:$true] %s33
      %s35 = sshll.u32 [#allocation6], 4
      %s36 = int_to_ptr.vmem [resolvable:$true] %s35
      %41 = dma.hbm_to_vmem [thread:$0]  %s34, 1024, %s36, [#allocation7], 128, 128, 8
    $region5: #{tpu_custom_call.1} parent=1 // pred_fallthru
      _
    // Predicated region
    $region6: #{tpu_custom_call.1} parent=1 // pred_check
      _
    $region7: #{tpu_custom_call.1} parent=1 // pred_check_branch
      %43 = sbr.rel (0) target = $region9
    $region8: #{tpu_custom_call.1} parent=1 // pred_region
      %45 = vsyncadd [#allocation10], 0
      %s46 = sshll.u32 %s1, 4
      %s47 = int_to_ptr.hbm [resolvable:$true] %s46
      %s48 = sshll.u32 [#allocation9], 4
      %s49 = int_to_ptr.vmem [resolvable:$true] %s48
      %54 = dma.hbm_to_vmem [thread:$0]  %s47, 2048, %s49, [#allocation10], 128, 128, 8
    $region9: #{tpu_custom_call.1} parent=1 // pred_fallthru
      _
    // Predicated region
    $region10: #{tpu_custom_call.1} parent=1 // pred_check
      _
    $region11: #{tpu_custom_call.1} parent=1 // pred_check_branch
      %56 = sbr.rel (0) target = $region13
    $region12: #{tpu_custom_call.1} parent=1 // pred_region
      %58 = vsyncadd [#allocation10], 0
      %s60 = sshll.u32 %s2, 4
      %s61 = int_to_ptr.hbm [resolvable:$true] %s60
      %s62 = sshll.u32 [#allocation11], 4
      %s63 = int_to_ptr.vmem [resolvable:$true] %s62
      %65 = dma.hbm_to_vmem [thread:$0]  %s61, 16, %s63, [#allocation10]
    $region13: #{tpu_custom_call.1} parent=1 // pred_fallthru
      _
    // Predicated region
    $region14: #{tpu_custom_call.1} parent=1 // pred_check
      _
    $region15: #{tpu_custom_call.1} parent=1 // pred_check_branch
      %67 = sbr.rel (0) target = $region17
    $region16: #{tpu_custom_call.1} parent=1 // pred_region
      %69 = vsyncadd [#allocation13], 0
      %s70 = sshll.u32 %s3, 4
      %s71 = int_to_ptr.hbm [resolvable:$true] %s70
      %s72 = sshll.u32 [#allocation12], 4
      %s73 = int_to_ptr.vmem [resolvable:$true] %s72
      %78 = dma.hbm_to_vmem [thread:$0]  %s71, 8192, %s73, [#allocation13], 512, 512, 32
    $region17: #{tpu_custom_call.1} parent=1 // pred_fallthru
      _
    // Predicated region
    $region18: #{tpu_custom_call.1} parent=1 // pred_check
      _
    $region19: #{tpu_custom_call.1} parent=1 // pred_check_branch
      %80 = sbr.rel (0) target = $region21
    $region20: #{tpu_custom_call.1} parent=1 // pred_region
      %82 = vsyncadd [#allocation13], 0
      %s83 = sshll.u32 %s4, 4
      %s84 = int_to_ptr.hbm [resolvable:$true] %s83
      %s85 = sshll.u32 [#allocation14], 4
      %s86 = int_to_ptr.vmem [resolvable:$true] %s85
      %91 = dma.hbm_to_vmem [thread:$0]  %s84, 8192, %s86, [#allocation13], 512, 512, 32
    $region21: #{tpu_custom_call.1} parent=1 // pred_fallthru
      _
    // Predicated region
    $region22: #{tpu_custom_call.1} parent=1 // pred_check
      _
    $region23: #{tpu_custom_call.1} parent=1 // pred_check_branch
      %93 = sbr.rel (0) target = $region25
    $region24: #{tpu_custom_call.1} parent=1 // pred_region
      %95 = vsyncadd [#allocation16], 0
      %s97 = sshll.u32 %s5, 4
      %s98 = int_to_ptr.hbm [resolvable:$true] %s97
      %s99 = sshll.u32 [#allocation15], 4
      %s100 = int_to_ptr.vmem [resolvable:$true] %s99
      %102 = dma.hbm_to_vmem [thread:$0]  %s98, 64, %s100, [#allocation16]
    $region25: #{tpu_custom_call.1} parent=1 // pred_fallthru
      _
    // Predicated region
    $region26: #{tpu_custom_call.1} parent=1 // pred_check
      _
    $region27: #{tpu_custom_call.1} parent=1 // pred_check_branch
      %104 = sbr.rel (0) target = $region29
    $region28: #{tpu_custom_call.1} parent=1 // pred_region
      %106 = vsyncadd [#allocation16], 0
      %s107 = sshll.u32 %s6, 4
      %s108 = int_to_ptr.hbm [resolvable:$true] %s107
      %s109 = sshll.u32 [#allocation17], 4
      %s110 = int_to_ptr.vmem [resolvable:$true] %s109
      %115 = dma.hbm_to_vmem [thread:$0]  %s108, 2048, %s110, [#allocation16], 128, 128, 8
    $region29: #{tpu_custom_call.1} parent=1 // pred_fallthru
      _
    // Predicated region
    $region30: #{tpu_custom_call.1} parent=1 // pred_check
      _
    $region31: #{tpu_custom_call.1} parent=1 // pred_check_branch
      %117 = sbr.rel (0) target = $region33
    $region32: #{tpu_custom_call.1} parent=1 // pred_region
      %119 = vsyncadd [#allocation19], 0
      %s121 = sshll.u32 %s7, 4
      %s122 = int_to_ptr.hbm [resolvable:$true] %s121
      %s123 = sshll.u32 [#allocation18], 4
      %s124 = int_to_ptr.vmem [resolvable:$true] %s123
      %126 = dma.hbm_to_vmem [thread:$0]  %s122, 16, %s124, [#allocation19]
    $region33: #{tpu_custom_call.1} parent=1 // pred_fallthru
      _
    // Predicated region
    $region34: #{tpu_custom_call.1} parent=1 // pred_check
      _
    $region35: #{tpu_custom_call.1} parent=1 // pred_check_branch
      %128 = sbr.rel (0) target = $region37
    $region36: #{tpu_custom_call.1} parent=1 // pred_region
      %130 = vsyncadd [#allocation19], 0
      %s132 = sshll.u32 %s8, 4
      %s133 = int_to_ptr.hbm [resolvable:$true] %s132
      %s134 = sshll.u32 [#allocation20], 4
      %s135 = int_to_ptr.vmem [resolvable:$true] %s134
      %137 = dma.hbm_to_vmem [thread:$0]  %s133, 128, %s135, [#allocation19]
    $region37: #{tpu_custom_call.1} parent=1 // pred_fallthru
      _
    // Predicated region
    $region38: #{tpu_custom_call.1} parent=1 // pred_check
      _
    $region39: #{tpu_custom_call.1} parent=1 // pred_check_branch
      %139 = sbr.rel (0) target = $region41
    $region40: #{tpu_custom_call.1} parent=1 // pred_region
      _
    $region41: #{tpu_custom_call.1} parent=1 // pred_fallthru
      _
    // Predicated region
    $region42: #{tpu_custom_call.1} parent=1 // pred_check
      _
    $region43: #{tpu_custom_call.1} parent=1 // pred_check_branch
      %141 = sbr.rel (0) target = $region45
    $region44: #{tpu_custom_call.1} parent=1 // pred_region
      %143 = dma.done [#allocation7], 1024
    $region45: #{tpu_custom_call.1} parent=1 // pred_fallthru
      _
    // Predicated region
    $region46: #{tpu_custom_call.1} parent=1 // pred_check
      _
    $region47: #{tpu_custom_call.1} parent=1 // pred_check_branch
      %145 = sbr.rel (0) target = $region49
    $region48: #{tpu_custom_call.1} parent=1 // pred_region
      %147 = dma.done [#allocation10], 2048
    $region49: #{tpu_custom_call.1} parent=1 // pred_fallthru
      _
    // Predicated region
    $region50: #{tpu_custom_call.1} parent=1 // pred_check
      _
    $region51: #{tpu_custom_call.1} parent=1 // pred_check_branch
      %149 = sbr.rel (0) target = $region53
    $region52: #{tpu_custom_call.1} parent=1 // pred_region
      %151 = dma.done [#allocation10], 16
    $region53: #{tpu_custom_call.1} parent=1 // pred_fallthru
      _
    // Predicated region
    $region54: #{tpu_custom_call.1} parent=1 // pred_check
      _
    $region55: #{tpu_custom_call.1} parent=1 // pred_check_branch
      %153 = sbr.rel (0) target = $region57
    $region56: #{tpu_custom_call.1} parent=1 // pred_region
      %155 = dma.done [#allocation13], 8192
    $region57: #{tpu_custom_call.1} parent=1 // pred_fallthru
      _
    // Predicated region
    $region58: #{tpu_custom_call.1} parent=1 // pred_check
      _
    $region59: #{tpu_custom_call.1} parent=1 // pred_check_branch
      %157 = sbr.rel (0) target = $region61
    $region60: #{tpu_custom_call.1} parent=1 // pred_region
      %159 = dma.done [#allocation13], 8192
    $region61: #{tpu_custom_call.1} parent=1 // pred_fallthru
      _
    // Predicated region
    $region62: #{tpu_custom_call.1} parent=1 // pred_check
      _
    $region63: #{tpu_custom_call.1} parent=1 // pred_check_branch
      %161 = sbr.rel (0) target = $region65
    $region64: #{tpu_custom_call.1} parent=1 // pred_region
      %163 = dma.done [#allocation16], 64
    $region65: #{tpu_custom_call.1} parent=1 // pred_fallthru
      _
    // Predicated region
    $region66: #{tpu_custom_call.1} parent=1 // pred_check
      _
    $region67: #{tpu_custom_call.1} parent=1 // pred_check_branch
      %165 = sbr.rel (0) target = $region69
    $region68: #{tpu_custom_call.1} parent=1 // pred_region
      %167 = dma.done [#allocation16], 2048
    $region69: #{tpu_custom_call.1} parent=1 // pred_fallthru
      _
    // Predicated region
    $region70: #{tpu_custom_call.1} parent=1 // pred_check
      _
    $region71: #{tpu_custom_call.1} parent=1 // pred_check_branch
      %169 = sbr.rel (0) target = $region73
    $region72: #{tpu_custom_call.1} parent=1 // pred_region
      %171 = dma.done [#allocation19], 16
    $region73: #{tpu_custom_call.1} parent=1 // pred_fallthru
      _
    // Predicated region
    $region74: #{tpu_custom_call.1} parent=1 // pred_check
      _
    $region75: #{tpu_custom_call.1} parent=1 // pred_check_branch
      %173 = sbr.rel (0) target = $region77
    $region76: #{tpu_custom_call.1} parent=1 // pred_region
      %175 = dma.done [#allocation19], 128
    $region77: #{tpu_custom_call.1} parent=1 // pred_fallthru
      _
    %s176 = sadd.s32 0, 0
    %s177 = smul.u32 8, %s176
    %s178 = sadd.s32 0, 0
    %s179 = smul.u32 8, %s178
    %p180 = scmp.eq.s32.totalorder 0, 0
    // Predicated region
    $region78: #{tpu_custom_call.1} parent=1 // pred_check
      %p181 = pneg %p180
    $region79: #{tpu_custom_call.1} parent=1 // pred_check_branch
      %183 = sbr.rel (%p181) target = $region81
    $region80: #{tpu_custom_call.1} parent=1 // pred_region
      %v184 = vld [vmem:[#allocation20] sm:$0xff]
      %185 = vst [vmem:[#allocation2] sm:$0xff] %v184
      %v186 = vld [vmem:[%s9] sm:$0xff]
      %187 = vst [vmem:[#allocation3] sm:$0xff] %v186
    $region81: #{tpu_custom_call.1} parent=1 // pred_fallthru
      _
    %v188 = vld [vmem:[#allocation6] sm:$0xff]
    %v189 = vld [vmem:[#allocation6 + $0x8] sm:$0xff]
    %v190 = vld [vmem:[#allocation6 + $0x10] sm:$0xff]
    %v191 = vld [vmem:[#allocation6 + $0x18] sm:$0xff]
    %v192 = vld [vmem:[#allocation6 + $0x20] sm:$0xff]
    %v193 = vld [vmem:[#allocation6 + $0x28] sm:$0xff]
    %v194 = vld [vmem:[#allocation6 + $0x30] sm:$0xff]
    %v195 = vld [vmem:[#allocation6 + $0x38] sm:$0xff]
    %v196 = vld [vmem:[#allocation9] sm:$0xff]
    %v197 = vld [vmem:[#allocation9 + $0x8] sm:$0xff]
    %v198 = vld [vmem:[#allocation9 + $0x10] sm:$0xff]
    %v199 = vld [vmem:[#allocation9 + $0x18] sm:$0xff]
    %v200 = vld [vmem:[#allocation9 + $0x20] sm:$0xff]
    %v201 = vld [vmem:[#allocation9 + $0x28] sm:$0xff]
    %v202 = vld [vmem:[#allocation9 + $0x30] sm:$0xff]
    %v203 = vld [vmem:[#allocation9 + $0x38] sm:$0xff]
    %v204 = vld [vmem:[#allocation9 + $0x40] sm:$0xff]
    %v205 = vld [vmem:[#allocation9 + $0x48] sm:$0xff]
    %v206 = vld [vmem:[#allocation9 + $0x50] sm:$0xff]
    %v207 = vld [vmem:[#allocation9 + $0x58] sm:$0xff]
    %v208 = vld [vmem:[#allocation9 + $0x60] sm:$0xff]
    %v209 = vld [vmem:[#allocation9 + $0x68] sm:$0xff]
    %v210 = vld [vmem:[#allocation9 + $0x70] sm:$0xff]
    %v211 = vld [vmem:[#allocation9 + $0x78] sm:$0xff]
    %v212 = vld [vmem:[#allocation11] sm:$0x1]
    %v214 = vperm.slane %v212, 0
    %216 = vmatpush.msra.mxu0 %v211
    %217 = vmatpush.msra.mxu0 %v210
    %218 = vmatpush.msra.mxu0 %v209
    %219 = vmatpush.msra.mxu0 %v208
    %220 = vmatpush.msra.mxu0 %v207
    %221 = vmatpush.msra.mxu0 %v206
    %222 = vmatpush.msra.mxu0 %v205
    %223 = vmatpush.msra.mxu0 %v204
    %224 = vmatpush.msra.mxu0 %v203
    %225 = vmatpush.msra.mxu0 %v202
    %226 = vmatpush.msra.mxu0 %v201
    %227 = vmatpush.msra.mxu0 %v200
    %228 = vmatpush.msra.mxu0 %v199
    %229 = vmatpush.msra.mxu0 %v198
    %230 = vmatpush.msra.mxu0 %v197
    %231 = vmatpush.msra.mxu0 %v196
    %232 = vmatmul.f32.gmra.mxu0 %v188
    %v233 = vpop.f32.mrf.mxu0
    %v234 = vadd.f32 %v214, %v233
    %235 = vmatmul.f32.gmra.mxu0 %v189
    %v236 = vpop.f32.mrf.mxu0
    %v237 = vadd.f32 %v214, %v236
    %238 = vmatmul.f32.gmra.mxu0 %v190
    %v239 = vpop.f32.mrf.mxu0
    %v240 = vadd.f32 %v214, %v239
    %241 = vmatmul.f32.gmra.mxu0 %v191
    %v242 = vpop.f32.mrf.mxu0
    %v243 = vadd.f32 %v214, %v242
    %244 = vmatmul.f32.gmra.mxu0 %v192
    %v245 = vpop.f32.mrf.mxu0
    %v246 = vadd.f32 %v214, %v245
    %247 = vmatmul.f32.gmra.mxu0 %v193
    %v248 = vpop.f32.mrf.mxu0
    %v249 = vadd.f32 %v214, %v248
    %250 = vmatmul.f32.gmra.mxu0 %v194
    %v251 = vpop.f32.mrf.mxu0
    %v252 = vadd.f32 %v214, %v251
    %253 = vmatmul.f32.gmra.mxu0 %v195
    %v254 = vpop.f32.mrf.mxu0
    %v255 = vadd.f32 %v214, %v254
    %256 = vdwg.mxu0
    %v257 = vmax.f32 %v234, 0.0
    %v258 = vmax.f32 %v237, 0.0
    %v259 = vmax.f32 %v240, 0.0
    %v260 = vmax.f32 %v243, 0.0
    %v261 = vmax.f32 %v246, 0.0
    %v262 = vmax.f32 %v249, 0.0
    %v263 = vmax.f32 %v252, 0.0
    %v264 = vmax.f32 %v255, 0.0
    %v265 = vld [vmem:[#allocation12] sm:$0xff]
    %v266 = vld [vmem:[#allocation12 + $0x8] sm:$0xff]
    %v267 = vld [vmem:[#allocation12 + $0x10] sm:$0xff]
    %v268 = vld [vmem:[#allocation12 + $0x18] sm:$0xff]
    %v269 = vld [vmem:[#allocation12 + $0x20] sm:$0xff]
    %v270 = vld [vmem:[#allocation12 + $0x28] sm:$0xff]
    %v271 = vld [vmem:[#allocation12 + $0x30] sm:$0xff]
    %v272 = vld [vmem:[#allocation12 + $0x38] sm:$0xff]
    %v273 = vld [vmem:[#allocation12 + $0x40] sm:$0xff]
    %v274 = vld [vmem:[#allocation12 + $0x48] sm:$0xff]
    %v275 = vld [vmem:[#allocation12 + $0x50] sm:$0xff]
    %v276 = vld [vmem:[#allocation12 + $0x58] sm:$0xff]
    %v277 = vld [vmem:[#allocation12 + $0x60] sm:$0xff]
    %v278 = vld [vmem:[#allocation12 + $0x68] sm:$0xff]
    %v279 = vld [vmem:[#allocation12 + $0x70] sm:$0xff]
    %v280 = vld [vmem:[#allocation12 + $0x78] sm:$0xff]
    %v281 = vld [vmem:[#allocation12 + $0x80] sm:$0xff]
    %v282 = vld [vmem:[#allocation12 + $0x88] sm:$0xff]
    %v283 = vld [vmem:[#allocation12 + $0x90] sm:$0xff]
    %v284 = vld [vmem:[#allocation12 + $0x98] sm:$0xff]
    %v285 = vld [vmem:[#allocation12 + $0xa0] sm:$0xff]
    %v286 = vld [vmem:[#allocation12 + $0xa8] sm:$0xff]
    %v287 = vld [vmem:[#allocation12 + $0xb0] sm:$0xff]
    %v288 = vld [vmem:[#allocation12 + $0xb8] sm:$0xff]
    %v289 = vld [vmem:[#allocation12 + $0xc0] sm:$0xff]
    %v290 = vld [vmem:[#allocation12 + $0xc8] sm:$0xff]
    %v291 = vld [vmem:[#allocation12 + $0xd0] sm:$0xff]
    %v292 = vld [vmem:[#allocation12 + $0xd8] sm:$0xff]
    %v293 = vld [vmem:[#allocation12 + $0xe0] sm:$0xff]
    %v294 = vld [vmem:[#allocation12 + $0xe8] sm:$0xff]
    %v295 = vld [vmem:[#allocation12 + $0xf0] sm:$0xff]
    %v296 = vld [vmem:[#allocation12 + $0xf8] sm:$0xff]
    %v297 = vld [vmem:[#allocation12 + $0x100] sm:$0xff]
    %v298 = vld [vmem:[#allocation12 + $0x108] sm:$0xff]
    %v299 = vld [vmem:[#allocation12 + $0x110] sm:$0xff]
    %v300 = vld [vmem:[#allocation12 + $0x118] sm:$0xff]
    %v301 = vld [vmem:[#allocation12 + $0x120] sm:$0xff]
    %v302 = vld [vmem:[#allocation12 + $0x128] sm:$0xff]
    %v303 = vld [vmem:[#allocation12 + $0x130] sm:$0xff]
    %v304 = vld [vmem:[#allocation12 + $0x138] sm:$0xff]
    %v305 = vld [vmem:[#allocation12 + $0x140] sm:$0xff]
    %v306 = vld [vmem:[#allocation12 + $0x148] sm:$0xff]
    %v307 = vld [vmem:[#allocation12 + $0x150] sm:$0xff]
    %v308 = vld [vmem:[#allocation12 + $0x158] sm:$0xff]
    %v309 = vld [vmem:[#allocation12 + $0x160] sm:$0xff]
    %v310 = vld [vmem:[#allocation12 + $0x168] sm:$0xff]
    %v311 = vld [vmem:[#allocation12 + $0x170] sm:$0xff]
    %v312 = vld [vmem:[#allocation12 + $0x178] sm:$0xff]
    %v313 = vld [vmem:[#allocation12 + $0x180] sm:$0xff]
    %v314 = vld [vmem:[#allocation12 + $0x188] sm:$0xff]
    %v315 = vld [vmem:[#allocation12 + $0x190] sm:$0xff]
    %v316 = vld [vmem:[#allocation12 + $0x198] sm:$0xff]
    %v317 = vld [vmem:[#allocation12 + $0x1a0] sm:$0xff]
    %v318 = vld [vmem:[#allocation12 + $0x1a8] sm:$0xff]
    %v319 = vld [vmem:[#allocation12 + $0x1b0] sm:$0xff]
    %v320 = vld [vmem:[#allocation12 + $0x1b8] sm:$0xff]
    %v321 = vld [vmem:[#allocation12 + $0x1c0] sm:$0xff]
    %v322 = vld [vmem:[#allocation12 + $0x1c8] sm:$0xff]
    %v323 = vld [vmem:[#allocation12 + $0x1d0] sm:$0xff]
    %v324 = vld [vmem:[#allocation12 + $0x1d8] sm:$0xff]
    %v325 = vld [vmem:[#allocation12 + $0x1e0] sm:$0xff]
    %v326 = vld [vmem:[#allocation12 + $0x1e8] sm:$0xff]
    %v327 = vld [vmem:[#allocation12 + $0x1f0] sm:$0xff]
    %v328 = vld [vmem:[#allocation12 + $0x1f8] sm:$0xff]
    %v329 = vld [vmem:[#allocation15] sm:$0xf]
    %v331 = vperm.slane %v329, 0
    %v332 = vperm.slane %v329, 1
    %v333 = vperm.slane %v329, 2
    %v334 = vperm.slane %v329, 3
    %339 = vmatpush.msra.mxu0 %v325
    %340 = vmatpush.msra.mxu0 %v321
    %341 = vmatpush.msra.mxu0 %v317
    %342 = vmatpush.msra.mxu0 %v313
    %343 = vmatpush.msra.mxu0 %v309
    %344 = vmatpush.msra.mxu0 %v305
    %345 = vmatpush.msra.mxu0 %v301
    %346 = vmatpush.msra.mxu0 %v297
    %347 = vmatpush.msra.mxu0 %v293
    %348 = vmatpush.msra.mxu0 %v289
    %349 = vmatpush.msra.mxu0 %v285
    %350 = vmatpush.msra.mxu0 %v281
    %351 = vmatpush.msra.mxu0 %v277
    %352 = vmatpush.msra.mxu0 %v273
    %353 = vmatpush.msra.mxu0 %v269
    %354 = vmatpush.msra.mxu0 %v265
    %355 = vmatmul.f32.gmra.mxu0 %v257
    %v356 = vpop.f32.mrf.mxu0
    %v357 = vadd.f32 %v331, %v356
    %358 = vmatmul.f32.gmra.mxu0 %v258
    %v359 = vpop.f32.mrf.mxu0
    %v360 = vadd.f32 %v331, %v359
    %361 = vmatmul.f32.gmra.mxu0 %v259
    %v362 = vpop.f32.mrf.mxu0
    %v363 = vadd.f32 %v331, %v362
    %364 = vmatmul.f32.gmra.mxu0 %v260
    %v365 = vpop.f32.mrf.mxu0
    %v366 = vadd.f32 %v331, %v365
    %367 = vmatmul.f32.gmra.mxu0 %v261
    %v368 = vpop.f32.mrf.mxu0
    %v369 = vadd.f32 %v331, %v368
    %370 = vmatmul.f32.gmra.mxu0 %v262
    %v371 = vpop.f32.mrf.mxu0
    %v372 = vadd.f32 %v331, %v371
    %373 = vmatmul.f32.gmra.mxu0 %v263
    %v374 = vpop.f32.mrf.mxu0
    %v375 = vadd.f32 %v331, %v374
    %376 = vmatmul.f32.gmra.mxu0 %v264
    %v377 = vpop.f32.mrf.mxu0
    %v378 = vadd.f32 %v331, %v377
    %379 = vdwg.mxu0
    %380 = vmatpush.msra.mxu0 %v326
    %381 = vmatpush.msra.mxu0 %v322
    %382 = vmatpush.msra.mxu0 %v318
    %383 = vmatpush.msra.mxu0 %v314
    %384 = vmatpush.msra.mxu0 %v310
    %385 = vmatpush.msra.mxu0 %v306
    %386 = vmatpush.msra.mxu0 %v302
    %387 = vmatpush.msra.mxu0 %v298
    %388 = vmatpush.msra.mxu0 %v294
    %389 = vmatpush.msra.mxu0 %v290
    %390 = vmatpush.msra.mxu0 %v286
    %391 = vmatpush.msra.mxu0 %v282
    %392 = vmatpush.msra.mxu0 %v278
    %393 = vmatpush.msra.mxu0 %v274
    %394 = vmatpush.msra.mxu0 %v270
    %395 = vmatpush.msra.mxu0 %v266
    %396 = vmatmul.f32.gmra.mxu0 %v257
    %v397 = vpop.f32.mrf.mxu0
    %v398 = vadd.f32 %v332, %v397
    %399 = vmatmul.f32.gmra.mxu0 %v258
    %v400 = vpop.f32.mrf.mxu0
    %v401 = vadd.f32 %v332, %v400
    %402 = vmatmul.f32.gmra.mxu0 %v259
    %v403 = vpop.f32.mrf.mxu0
    %v404 = vadd.f32 %v332, %v403
    %405 = vmatmul.f32.gmra.mxu0 %v260
    %v406 = vpop.f32.mrf.mxu0
    %v407 = vadd.f32 %v332, %v406
    %408 = vmatmul.f32.gmra.mxu0 %v261
    %v409 = vpop.f32.mrf.mxu0
    %v410 = vadd.f32 %v332, %v409
    %411 = vmatmul.f32.gmra.mxu0 %v262
    %v412 = vpop.f32.mrf.mxu0
    %v413 = vadd.f32 %v332, %v412
    %414 = vmatmul.f32.gmra.mxu0 %v263
    %v415 = vpop.f32.mrf.mxu0
    %v416 = vadd.f32 %v332, %v415
    %417 = vmatmul.f32.gmra.mxu0 %v264
    %v418 = vpop.f32.mrf.mxu0
    %v419 = vadd.f32 %v332, %v418
    %420 = vdwg.mxu0
    %421 = vmatpush.msra.mxu0 %v327
    %422 = vmatpush.msra.mxu0 %v323
    %423 = vmatpush.msra.mxu0 %v319
    %424 = vmatpush.msra.mxu0 %v315
    %425 = vmatpush.msra.mxu0 %v311
    %426 = vmatpush.msra.mxu0 %v307
    %427 = vmatpush.msra.mxu0 %v303
    %428 = vmatpush.msra.mxu0 %v299
    %429 = vmatpush.msra.mxu0 %v295
    %430 = vmatpush.msra.mxu0 %v291
    %431 = vmatpush.msra.mxu0 %v287
    %432 = vmatpush.msra.mxu0 %v283
    %433 = vmatpush.msra.mxu0 %v279
    %434 = vmatpush.msra.mxu0 %v275
    %435 = vmatpush.msra.mxu0 %v271
    %436 = vmatpush.msra.mxu0 %v267
    %437 = vmatmul.f32.gmra.mxu0 %v257
    %v438 = vpop.f32.mrf.mxu0
    %v439 = vadd.f32 %v333, %v438
    %440 = vmatmul.f32.gmra.mxu0 %v258
    %v441 = vpop.f32.mrf.mxu0
    %v442 = vadd.f32 %v333, %v441
    %443 = vmatmul.f32.gmra.mxu0 %v259
    %v444 = vpop.f32.mrf.mxu0
    %v445 = vadd.f32 %v333, %v444
    %446 = vmatmul.f32.gmra.mxu0 %v260
    %v447 = vpop.f32.mrf.mxu0
    %v448 = vadd.f32 %v333, %v447
    %449 = vmatmul.f32.gmra.mxu0 %v261
    %v450 = vpop.f32.mrf.mxu0
    %v451 = vadd.f32 %v333, %v450
    %452 = vmatmul.f32.gmra.mxu0 %v262
    %v453 = vpop.f32.mrf.mxu0
    %v454 = vadd.f32 %v333, %v453
    %455 = vmatmul.f32.gmra.mxu0 %v263
    %v456 = vpop.f32.mrf.mxu0
    %v457 = vadd.f32 %v333, %v456
    %458 = vmatmul.f32.gmra.mxu0 %v264
    %v459 = vpop.f32.mrf.mxu0
    %v460 = vadd.f32 %v333, %v459
    %461 = vdwg.mxu0
    %462 = vmatpush.msra.mxu0 %v328
    %463 = vmatpush.msra.mxu0 %v324
    %464 = vmatpush.msra.mxu0 %v320
    %465 = vmatpush.msra.mxu0 %v316
    %466 = vmatpush.msra.mxu0 %v312
    %467 = vmatpush.msra.mxu0 %v308
    %468 = vmatpush.msra.mxu0 %v304
    %469 = vmatpush.msra.mxu0 %v300
    %470 = vmatpush.msra.mxu0 %v296
    %471 = vmatpush.msra.mxu0 %v292
    %472 = vmatpush.msra.mxu0 %v288
    %473 = vmatpush.msra.mxu0 %v284
    %474 = vmatpush.msra.mxu0 %v280
    %475 = vmatpush.msra.mxu0 %v276
    %476 = vmatpush.msra.mxu0 %v272
    %477 = vmatpush.msra.mxu0 %v268
    %478 = vmatmul.f32.gmra.mxu0 %v257
    %v479 = vpop.f32.mrf.mxu0
    %v480 = vadd.f32 %v334, %v479
    %481 = vmatmul.f32.gmra.mxu0 %v258
    %v482 = vpop.f32.mrf.mxu0
    %v483 = vadd.f32 %v334, %v482
    %484 = vmatmul.f32.gmra.mxu0 %v259
    %v485 = vpop.f32.mrf.mxu0
    %v486 = vadd.f32 %v334, %v485
    %487 = vmatmul.f32.gmra.mxu0 %v260
    %v488 = vpop.f32.mrf.mxu0
    %v489 = vadd.f32 %v334, %v488
    %490 = vmatmul.f32.gmra.mxu0 %v261
    %v491 = vpop.f32.mrf.mxu0
    %v492 = vadd.f32 %v334, %v491
    %493 = vmatmul.f32.gmra.mxu0 %v262
    %v494 = vpop.f32.mrf.mxu0
    %v495 = vadd.f32 %v334, %v494
    %496 = vmatmul.f32.gmra.mxu0 %v263
    %v497 = vpop.f32.mrf.mxu0
    %v498 = vadd.f32 %v334, %v497
    %499 = vmatmul.f32.gmra.mxu0 %v264
    %v500 = vpop.f32.mrf.mxu0
    %v501 = vadd.f32 %v334, %v500
    %502 = vdwg.mxu0
    %503 = vst [vmem:[#allocation4] sm:$0xff] %v357
    %504 = vst [vmem:[#allocation4 + $0x8] sm:$0xff] %v398
    %505 = vst [vmem:[#allocation4 + $0x10] sm:$0xff] %v439
    %506 = vst [vmem:[#allocation4 + $0x18] sm:$0xff] %v480
    %507 = vst [vmem:[#allocation4 + $0x20] sm:$0xff] %v360
    %508 = vst [vmem:[#allocation4 + $0x28] sm:$0xff] %v401
    %509 = vst [vmem:[#allocation4 + $0x30] sm:$0xff] %v442
    %510 = vst [vmem:[#allocation4 + $0x38] sm:$0xff] %v483
    %511 = vst [vmem:[#allocation4 + $0x40] sm:$0xff] %v363
    %512 = vst [vmem:[#allocation4 + $0x48] sm:$0xff] %v404
    %513 = vst [vmem:[#allocation4 + $0x50] sm:$0xff] %v445
    %514 = vst [vmem:[#allocation4 + $0x58] sm:$0xff] %v486
    %515 = vst [vmem:[#allocation4 + $0x60] sm:$0xff] %v366
    %516 = vst [vmem:[#allocation4 + $0x68] sm:$0xff] %v407
    %517 = vst [vmem:[#allocation4 + $0x70] sm:$0xff] %v448
    %518 = vst [vmem:[#allocation4 + $0x78] sm:$0xff] %v489
    %519 = vst [vmem:[#allocation4 + $0x80] sm:$0xff] %v369
    %520 = vst [vmem:[#allocation4 + $0x88] sm:$0xff] %v410
    %521 = vst [vmem:[#allocation4 + $0x90] sm:$0xff] %v451
    %522 = vst [vmem:[#allocation4 + $0x98] sm:$0xff] %v492
    %523 = vst [vmem:[#allocation4 + $0xa0] sm:$0xff] %v372
    %524 = vst [vmem:[#allocation4 + $0xa8] sm:$0xff] %v413
    %525 = vst [vmem:[#allocation4 + $0xb0] sm:$0xff] %v454
    %526 = vst [vmem:[#allocation4 + $0xb8] sm:$0xff] %v495
    %527 = vst [vmem:[#allocation4 + $0xc0] sm:$0xff] %v375
    %528 = vst [vmem:[#allocation4 + $0xc8] sm:$0xff] %v416
    %529 = vst [vmem:[#allocation4 + $0xd0] sm:$0xff] %v457
    %530 = vst [vmem:[#allocation4 + $0xd8] sm:$0xff] %v498
    %531 = vst [vmem:[#allocation4 + $0xe0] sm:$0xff] %v378
    %532 = vst [vmem:[#allocation4 + $0xe8] sm:$0xff] %v419
    %533 = vst [vmem:[#allocation4 + $0xf0] sm:$0xff] %v460
    %534 = vst [vmem:[#allocation4 + $0xf8] sm:$0xff] %v501
    %v535 = vld [vmem:[#allocation2] sm:$0xff]
    %v536 = vld [vmem:[#allocation3] sm:$0xff]
    %s537 = smul.u32 0, 4
    %s538 = smul.addr %s537, 8
    %s539 = scalar_lea.vmem [#allocation4], %s538
    %v540 = vld [vmem:[%s539] sm:$0xff]
    %v541 = vld [vmem:[%s539 + $0x8] sm:$0xff]
    %v542 = vld [vmem:[%s539 + $0x10] sm:$0xff]
    %v543 = vld [vmem:[%s539 + $0x18] sm:$0xff]
    %v544 = vld [vmem:[#allocation14] sm:$0xff]
    %v545 = vld [vmem:[#allocation14 + $0x8] sm:$0xff]
    %v546 = vld [vmem:[#allocation14 + $0x10] sm:$0xff]
    %v547 = vld [vmem:[#allocation14 + $0x18] sm:$0xff]
    %v548 = vld [vmem:[#allocation14 + $0x20] sm:$0xff]
    %v549 = vld [vmem:[#allocation14 + $0x28] sm:$0xff]
    %v550 = vld [vmem:[#allocation14 + $0x30] sm:$0xff]
    %v551 = vld [vmem:[#allocation14 + $0x38] sm:$0xff]
    %v552 = vld [vmem:[#allocation14 + $0x40] sm:$0xff]
    %v553 = vld [vmem:[#allocation14 + $0x48] sm:$0xff]
    %v554 = vld [vmem:[#allocation14 + $0x50] sm:$0xff]
    %v555 = vld [vmem:[#allocation14 + $0x58] sm:$0xff]
    %v556 = vld [vmem:[#allocation14 + $0x60] sm:$0xff]
    %v557 = vld [vmem:[#allocation14 + $0x68] sm:$0xff]
    %v558 = vld [vmem:[#allocation14 + $0x70] sm:$0xff]
    %v559 = vld [vmem:[#allocation14 + $0x78] sm:$0xff]
    %v560 = vld [vmem:[#allocation14 + $0x80] sm:$0xff]
    %v561 = vld [vmem:[#allocation14 + $0x88] sm:$0xff]
    %v562 = vld [vmem:[#allocation14 + $0x90] sm:$0xff]
    %v563 = vld [vmem:[#allocation14 + $0x98] sm:$0xff]
    %v564 = vld [vmem:[#allocation14 + $0xa0] sm:$0xff]
    %v565 = vld [vmem:[#allocation14 + $0xa8] sm:$0xff]
    %v566 = vld [vmem:[#allocation14 + $0xb0] sm:$0xff]
    %v567 = vld [vmem:[#allocation14 + $0xb8] sm:$0xff]
    %v568 = vld [vmem:[#allocation14 + $0xc0] sm:$0xff]
    %v569 = vld [vmem:[#allocation14 + $0xc8] sm:$0xff]
    %v570 = vld [vmem:[#allocation14 + $0xd0] sm:$0xff]
    %v571 = vld [vmem:[#allocation14 + $0xd8] sm:$0xff]
    %v572 = vld [vmem:[#allocation14 + $0xe0] sm:$0xff]
    %v573 = vld [vmem:[#allocation14 + $0xe8] sm:$0xff]
    %v574 = vld [vmem:[#allocation14 + $0xf0] sm:$0xff]
    %v575 = vld [vmem:[#allocation14 + $0xf8] sm:$0xff]
    %v576 = vld [vmem:[#allocation14 + $0x100] sm:$0xff]
    %v577 = vld [vmem:[#allocation14 + $0x108] sm:$0xff]
    %v578 = vld [vmem:[#allocation14 + $0x110] sm:$0xff]
    %v579 = vld [vmem:[#allocation14 + $0x118] sm:$0xff]
    %v580 = vld [vmem:[#allocation14 + $0x120] sm:$0xff]
    %v581 = vld [vmem:[#allocation14 + $0x128] sm:$0xff]
    %v582 = vld [vmem:[#allocation14 + $0x130] sm:$0xff]
    %v583 = vld [vmem:[#allocation14 + $0x138] sm:$0xff]
    %v584 = vld [vmem:[#allocation14 + $0x140] sm:$0xff]
    %v585 = vld [vmem:[#allocation14 + $0x148] sm:$0xff]
    %v586 = vld [vmem:[#allocation14 + $0x150] sm:$0xff]
    %v587 = vld [vmem:[#allocation14 + $0x158] sm:$0xff]
    %v588 = vld [vmem:[#allocation14 + $0x160] sm:$0xff]
    %v589 = vld [vmem:[#allocation14 + $0x168] sm:$0xff]
    %v590 = vld [vmem:[#allocation14 + $0x170] sm:$0xff]
    %v591 = vld [vmem:[#allocation14 + $0x178] sm:$0xff]
    %v592 = vld [vmem:[#allocation14 + $0x180] sm:$0xff]
    %v593 = vld [vmem:[#allocation14 + $0x188] sm:$0xff]
    %v594 = vld [vmem:[#allocation14 + $0x190] sm:$0xff]
    %v595 = vld [vmem:[#allocation14 + $0x198] sm:$0xff]
    %v596 = vld [vmem:[#allocation14 + $0x1a0] sm:$0xff]
    %v597 = vld [vmem:[#allocation14 + $0x1a8] sm:$0xff]
    %v598 = vld [vmem:[#allocation14 + $0x1b0] sm:$0xff]
    %v599 = vld [vmem:[#allocation14 + $0x1b8] sm:$0xff]
    %v600 = vld [vmem:[#allocation14 + $0x1c0] sm:$0xff]
    %v601 = vld [vmem:[#allocation14 + $0x1c8] sm:$0xff]
    %v602 = vld [vmem:[#allocation14 + $0x1d0] sm:$0xff]
    %v603 = vld [vmem:[#allocation14 + $0x1d8] sm:$0xff]
    %v604 = vld [vmem:[#allocation14 + $0x1e0] sm:$0xff]
    %v605 = vld [vmem:[#allocation14 + $0x1e8] sm:$0xff]
    %v606 = vld [vmem:[#allocation14 + $0x1f0] sm:$0xff]
    %v607 = vld [vmem:[#allocation14 + $0x1f8] sm:$0xff]
    %608 = vmatpush.msra.mxu0 %v604
    %609 = vmatpush.msra.mxu0 %v600
    %610 = vmatpush.msra.mxu0 %v596
    %611 = vmatpush.msra.mxu0 %v592
    %612 = vmatpush.msra.mxu0 %v588
    %613 = vmatpush.msra.mxu0 %v584
    %614 = vmatpush.msra.mxu0 %v580
    %615 = vmatpush.msra.mxu0 %v576
    %616 = vmatpush.msra.mxu0 %v572
    %617 = vmatpush.msra.mxu0 %v568
    %618 = vmatpush.msra.mxu0 %v564
    %619 = vmatpush.msra.mxu0 %v560
    %620 = vmatpush.msra.mxu0 %v556
    %621 = vmatpush.msra.mxu0 %v552
    %622 = vmatpush.msra.mxu0 %v548
    %623 = vmatpush.msra.mxu0 %v544
    %624 = vmatmul.f32.gmra.mxu0 %v535
    %v625 = vpop.f32.mrf.mxu0
    %v626 = vadd.f32 0.0, %v625
    %627 = vdwg.mxu0
    %628 = vmatpush.msra.mxu0 %v605
    %629 = vmatpush.msra.mxu0 %v601
    %630 = vmatpush.msra.mxu0 %v597
    %631 = vmatpush.msra.mxu0 %v593
    %632 = vmatpush.msra.mxu0 %v589
    %633 = vmatpush.msra.mxu0 %v585
    %634 = vmatpush.msra.mxu0 %v581
    %635 = vmatpush.msra.mxu0 %v577
    %636 = vmatpush.msra.mxu0 %v573
    %637 = vmatpush.msra.mxu0 %v569
    %638 = vmatpush.msra.mxu0 %v565
    %639 = vmatpush.msra.mxu0 %v561
    %640 = vmatpush.msra.mxu0 %v557
    %641 = vmatpush.msra.mxu0 %v553
    %642 = vmatpush.msra.mxu0 %v549
    %643 = vmatpush.msra.mxu0 %v545
    %644 = vmatmul.f32.gmra.mxu0 %v535
    %v645 = vpop.f32.mrf.mxu0
    %v646 = vadd.f32 0.0, %v645
    %647 = vdwg.mxu0
    %648 = vmatpush.msra.mxu0 %v606
    %649 = vmatpush.msra.mxu0 %v602
    %650 = vmatpush.msra.mxu0 %v598
    %651 = vmatpush.msra.mxu0 %v594
    %652 = vmatpush.msra.mxu0 %v590
    %653 = vmatpush.msra.mxu0 %v586
    %654 = vmatpush.msra.mxu0 %v582
    %655 = vmatpush.msra.mxu0 %v578
    %656 = vmatpush.msra.mxu0 %v574
    %657 = vmatpush.msra.mxu0 %v570
    %658 = vmatpush.msra.mxu0 %v566
    %659 = vmatpush.msra.mxu0 %v562
    %660 = vmatpush.msra.mxu0 %v558
    %661 = vmatpush.msra.mxu0 %v554
    %662 = vmatpush.msra.mxu0 %v550
    %663 = vmatpush.msra.mxu0 %v546
    %664 = vmatmul.f32.gmra.mxu0 %v535
    %v665 = vpop.f32.mrf.mxu0
    %v666 = vadd.f32 0.0, %v665
    %667 = vdwg.mxu0
    %668 = vmatpush.msra.mxu0 %v607
    %669 = vmatpush.msra.mxu0 %v603
    %670 = vmatpush.msra.mxu0 %v599
    %671 = vmatpush.msra.mxu0 %v595
    %672 = vmatpush.msra.mxu0 %v591
    %673 = vmatpush.msra.mxu0 %v587
    %674 = vmatpush.msra.mxu0 %v583
    %675 = vmatpush.msra.mxu0 %v579
    %676 = vmatpush.msra.mxu0 %v575
    %677 = vmatpush.msra.mxu0 %v571
    %678 = vmatpush.msra.mxu0 %v567
    %679 = vmatpush.msra.mxu0 %v563
    %680 = vmatpush.msra.mxu0 %v559
    %681 = vmatpush.msra.mxu0 %v555
    %682 = vmatpush.msra.mxu0 %v551
    %683 = vmatpush.msra.mxu0 %v547
    %684 = vmatmul.f32.gmra.mxu0 %v535
    %v685 = vpop.f32.mrf.mxu0
    %v686 = vadd.f32 0.0, %v685
    %687 = vdwg.mxu0
    %v688 = vadd.f32 %v540, %v626
    %v689 = vadd.f32 %v541, %v646
    %v690 = vadd.f32 %v542, %v666
    %v691 = vadd.f32 %v543, %v686
    %v692 = vmul.f32 %v688, 0.5
    %v693 = vtanh.pop %v692
    %v694 = vmul.f32 %v693, 0.5
    %v695 = vadd.f32 %v694, 0.5
    %v696 = vmul.f32 %v689, 0.5
    %v697 = vtanh.pop %v696
    %v698 = vmul.f32 %v697, 0.5
    %v699 = vadd.f32 %v698, 0.5
    %v700 = vtanh.pop %v690
    %v701 = vmul.f32 %v691, 0.5
    %v702 = vtanh.pop %v701
    %v703 = vmul.f32 %v702, 0.5
    %v704 = vadd.f32 %v703, 0.5
    %v705 = vmul.f32 %v699, %v536
    %v706 = vmul.f32 %v695, %v700
    %v707 = vadd.f32 %v705, %v706
    %v708 = vtanh.pop %v707
    %v709 = vmul.f32 %v704, %v708
    %710 = vst [vmem:[#allocation5] sm:$0xff] %v709
    %s711 = smul.u32 1, 4
    %s712 = smul.addr %s711, 8
    %s713 = scalar_lea.vmem [#allocation4], %s712
    %v714 = vld [vmem:[%s713] sm:$0xff]
    %v715 = vld [vmem:[%s713 + $0x8] sm:$0xff]
    %v716 = vld [vmem:[%s713 + $0x10] sm:$0xff]
    %v717 = vld [vmem:[%s713 + $0x18] sm:$0xff]
    %v718 = vld [vmem:[#allocation14] sm:$0xff]
    %v719 = vld [vmem:[#allocation14 + $0x8] sm:$0xff]
    %v720 = vld [vmem:[#allocation14 + $0x10] sm:$0xff]
    %v721 = vld [vmem:[#allocation14 + $0x18] sm:$0xff]
    %v722 = vld [vmem:[#allocation14 + $0x20] sm:$0xff]
    %v723 = vld [vmem:[#allocation14 + $0x28] sm:$0xff]
    %v724 = vld [vmem:[#allocation14 + $0x30] sm:$0xff]
    %v725 = vld [vmem:[#allocation14 + $0x38] sm:$0xff]
    %v726 = vld [vmem:[#allocation14 + $0x40] sm:$0xff]
    %v727 = vld [vmem:[#allocation14 + $0x48] sm:$0xff]
    %v728 = vld [vmem:[#allocation14 + $0x50] sm:$0xff]
    %v729 = vld [vmem:[#allocation14 + $0x58] sm:$0xff]
    %v730 = vld [vmem:[#allocation14 + $0x60] sm:$0xff]
    %v731 = vld [vmem:[#allocation14 + $0x68] sm:$0xff]
    %v732 = vld [vmem:[#allocation14 + $0x70] sm:$0xff]
    %v733 = vld [vmem:[#allocation14 + $0x78] sm:$0xff]
    %v734 = vld [vmem:[#allocation14 + $0x80] sm:$0xff]
    %v735 = vld [vmem:[#allocation14 + $0x88] sm:$0xff]
    %v736 = vld [vmem:[#allocation14 + $0x90] sm:$0xff]
    %v737 = vld [vmem:[#allocation14 + $0x98] sm:$0xff]
    %v738 = vld [vmem:[#allocation14 + $0xa0] sm:$0xff]
    %v739 = vld [vmem:[#allocation14 + $0xa8] sm:$0xff]
    %v740 = vld [vmem:[#allocation14 + $0xb0] sm:$0xff]
    %v741 = vld [vmem:[#allocation14 + $0xb8] sm:$0xff]
    %v742 = vld [vmem:[#allocation14 + $0xc0] sm:$0xff]
    %v743 = vld [vmem:[#allocation14 + $0xc8] sm:$0xff]
    %v744 = vld [vmem:[#allocation14 + $0xd0] sm:$0xff]
    %v745 = vld [vmem:[#allocation14 + $0xd8] sm:$0xff]
    %v746 = vld [vmem:[#allocation14 + $0xe0] sm:$0xff]
    %v747 = vld [vmem:[#allocation14 + $0xe8] sm:$0xff]
    %v748 = vld [vmem:[#allocation14 + $0xf0] sm:$0xff]
    %v749 = vld [vmem:[#allocation14 + $0xf8] sm:$0xff]
    %v750 = vld [vmem:[#allocation14 + $0x100] sm:$0xff]
    %v751 = vld [vmem:[#allocation14 + $0x108] sm:$0xff]
    %v752 = vld [vmem:[#allocation14 + $0x110] sm:$0xff]
    %v753 = vld [vmem:[#allocation14 + $0x118] sm:$0xff]
    %v754 = vld [vmem:[#allocation14 + $0x120] sm:$0xff]
    %v755 = vld [vmem:[#allocation14 + $0x128] sm:$0xff]
    %v756 = vld [vmem:[#allocation14 + $0x130] sm:$0xff]
    %v757 = vld [vmem:[#allocation14 + $0x138] sm:$0xff]
    %v758 = vld [vmem:[#allocation14 + $0x140] sm:$0xff]
    %v759 = vld [vmem:[#allocation14 + $0x148] sm:$0xff]
    %v760 = vld [vmem:[#allocation14 + $0x150] sm:$0xff]
    %v761 = vld [vmem:[#allocation14 + $0x158] sm:$0xff]
    %v762 = vld [vmem:[#allocation14 + $0x160] sm:$0xff]
    %v763 = vld [vmem:[#allocation14 + $0x168] sm:$0xff]
    %v764 = vld [vmem:[#allocation14 + $0x170] sm:$0xff]
    %v765 = vld [vmem:[#allocation14 + $0x178] sm:$0xff]
    %v766 = vld [vmem:[#allocation14 + $0x180] sm:$0xff]
    %v767 = vld [vmem:[#allocation14 + $0x188] sm:$0xff]
    %v768 = vld [vmem:[#allocation14 + $0x190] sm:$0xff]
    %v769 = vld [vmem:[#allocation14 + $0x198] sm:$0xff]
    %v770 = vld [vmem:[#allocation14 + $0x1a0] sm:$0xff]
    %v771 = vld [vmem:[#allocation14 + $0x1a8] sm:$0xff]
    %v772 = vld [vmem:[#allocation14 + $0x1b0] sm:$0xff]
    %v773 = vld [vmem:[#allocation14 + $0x1b8] sm:$0xff]
    %v774 = vld [vmem:[#allocation14 + $0x1c0] sm:$0xff]
    %v775 = vld [vmem:[#allocation14 + $0x1c8] sm:$0xff]
    %v776 = vld [vmem:[#allocation14 + $0x1d0] sm:$0xff]
    %v777 = vld [vmem:[#allocation14 + $0x1d8] sm:$0xff]
    %v778 = vld [vmem:[#allocation14 + $0x1e0] sm:$0xff]
    %v779 = vld [vmem:[#allocation14 + $0x1e8] sm:$0xff]
    %v780 = vld [vmem:[#allocation14 + $0x1f0] sm:$0xff]
    %v781 = vld [vmem:[#allocation14 + $0x1f8] sm:$0xff]
    %782 = vmatpush.msra.mxu0 %v778
    %783 = vmatpush.msra.mxu0 %v774
    %784 = vmatpush.msra.mxu0 %v770
    %785 = vmatpush.msra.mxu0 %v766
    %786 = vmatpush.msra.mxu0 %v762
    %787 = vmatpush.msra.mxu0 %v758
    %788 = vmatpush.msra.mxu0 %v754
    %789 = vmatpush.msra.mxu0 %v750
    %790 = vmatpush.msra.mxu0 %v746
    %791 = vmatpush.msra.mxu0 %v742
    %792 = vmatpush.msra.mxu0 %v738
    %793 = vmatpush.msra.mxu0 %v734
    %794 = vmatpush.msra.mxu0 %v730
    %795 = vmatpush.msra.mxu0 %v726
    %796 = vmatpush.msra.mxu0 %v722
    %797 = vmatpush.msra.mxu0 %v718
    %798 = vmatmul.f32.gmra.mxu0 %v709
    %v799 = vpop.f32.mrf.mxu0
    %v800 = vadd.f32 0.0, %v799
    %801 = vdwg.mxu0
    %802 = vmatpush.msra.mxu0 %v779
    %803 = vmatpush.msra.mxu0 %v775
    %804 = vmatpush.msra.mxu0 %v771
    %805 = vmatpush.msra.mxu0 %v767
    %806 = vmatpush.msra.mxu0 %v763
    %807 = vmatpush.msra.mxu0 %v759
    %808 = vmatpush.msra.mxu0 %v755
    %809 = vmatpush.msra.mxu0 %v751
    %810 = vmatpush.msra.mxu0 %v747
    %811 = vmatpush.msra.mxu0 %v743
    %812 = vmatpush.msra.mxu0 %v739
    %813 = vmatpush.msra.mxu0 %v735
    %814 = vmatpush.msra.mxu0 %v731
    %815 = vmatpush.msra.mxu0 %v727
    %816 = vmatpush.msra.mxu0 %v723
    %817 = vmatpush.msra.mxu0 %v719
    %818 = vmatmul.f32.gmra.mxu0 %v709
    %v819 = vpop.f32.mrf.mxu0
    %v820 = vadd.f32 0.0, %v819
    %821 = vdwg.mxu0
    %822 = vmatpush.msra.mxu0 %v780
    %823 = vmatpush.msra.mxu0 %v776
    %824 = vmatpush.msra.mxu0 %v772
    %825 = vmatpush.msra.mxu0 %v768
    %826 = vmatpush.msra.mxu0 %v764
    %827 = vmatpush.msra.mxu0 %v760
    %828 = vmatpush.msra.mxu0 %v756
    %829 = vmatpush.msra.mxu0 %v752
    %830 = vmatpush.msra.mxu0 %v748
    %831 = vmatpush.msra.mxu0 %v744
    %832 = vmatpush.msra.mxu0 %v740
    %833 = vmatpush.msra.mxu0 %v736
    %834 = vmatpush.msra.mxu0 %v732
    %835 = vmatpush.msra.mxu0 %v728
    %836 = vmatpush.msra.mxu0 %v724
    %837 = vmatpush.msra.mxu0 %v720
    %838 = vmatmul.f32.gmra.mxu0 %v709
    %v839 = vpop.f32.mrf.mxu0
    %v840 = vadd.f32 0.0, %v839
    %841 = vdwg.mxu0
    %842 = vmatpush.msra.mxu0 %v781
    %843 = vmatpush.msra.mxu0 %v777
    %844 = vmatpush.msra.mxu0 %v773
    %845 = vmatpush.msra.mxu0 %v769
    %846 = vmatpush.msra.mxu0 %v765
    %847 = vmatpush.msra.mxu0 %v761
    %848 = vmatpush.msra.mxu0 %v757
    %849 = vmatpush.msra.mxu0 %v753
    %850 = vmatpush.msra.mxu0 %v749
    %851 = vmatpush.msra.mxu0 %v745
    %852 = vmatpush.msra.mxu0 %v741
    %853 = vmatpush.msra.mxu0 %v737
    %854 = vmatpush.msra.mxu0 %v733
    %855 = vmatpush.msra.mxu0 %v729
    %856 = vmatpush.msra.mxu0 %v725
    %857 = vmatpush.msra.mxu0 %v721
    %858 = vmatmul.f32.gmra.mxu0 %v709
    %v859 = vpop.f32.mrf.mxu0
    %v860 = vadd.f32 0.0, %v859
    %861 = vdwg.mxu0
    %v862 = vadd.f32 %v714, %v800
    %v863 = vadd.f32 %v715, %v820
    %v864 = vadd.f32 %v716, %v840
    %v865 = vadd.f32 %v717, %v860
    %v866 = vmul.f32 %v862, 0.5
    %v867 = vtanh.pop %v866
    %v868 = vmul.f32 %v867, 0.5
    %v869 = vadd.f32 %v868, 0.5
    %v870 = vmul.f32 %v863, 0.5
    %v871 = vtanh.pop %v870
    %v872 = vmul.f32 %v871, 0.5
    %v873 = vadd.f32 %v872, 0.5
    %v874 = vtanh.pop %v864
    %v875 = vmul.f32 %v865, 0.5
    %v876 = vtanh.pop %v875
    %v877 = vmul.f32 %v876, 0.5
    %v878 = vadd.f32 %v877, 0.5
    %v879 = vmul.f32 %v873, %v707
    %v880 = vmul.f32 %v869, %v874
    %v881 = vadd.f32 %v879, %v880
    %v882 = vtanh.pop %v881
    %v883 = vmul.f32 %v878, %v882
    %s884 = scalar_lea.vmem [#allocation5], 8
    %885 = vst [vmem:[%s884] sm:$0xff] %v883
    %s886 = smul.u32 2, 4
    %s887 = smul.addr %s886, 8
    %s888 = scalar_lea.vmem [#allocation4], %s887
    %v889 = vld [vmem:[%s888] sm:$0xff]
    %v890 = vld [vmem:[%s888 + $0x8] sm:$0xff]
    %v891 = vld [vmem:[%s888 + $0x10] sm:$0xff]
    %v892 = vld [vmem:[%s888 + $0x18] sm:$0xff]
    %v893 = vld [vmem:[#allocation14] sm:$0xff]
    %v894 = vld [vmem:[#allocation14 + $0x8] sm:$0xff]
    %v895 = vld [vmem:[#allocation14 + $0x10] sm:$0xff]
    %v896 = vld [vmem:[#allocation14 + $0x18] sm:$0xff]
    %v897 = vld [vmem:[#allocation14 + $0x20] sm:$0xff]
    %v898 = vld [vmem:[#allocation14 + $0x28] sm:$0xff]
    %v899 = vld [vmem:[#allocation14 + $0x30] sm:$0xff]
    %v900 = vld [vmem:[#allocation14 + $0x38] sm:$0xff]
    %v901 = vld [vmem:[#allocation14 + $0x40] sm:$0xff]
    %v902 = vld [vmem:[#allocation14 + $0x48] sm:$0xff]
    %v903 = vld [vmem:[#allocation14 + $0x50] sm:$0xff]
    %v904 = vld [vmem:[#allocation14 + $0x58] sm:$0xff]
    %v905 = vld [vmem:[#allocation14 + $0x60] sm:$0xff]
    %v906 = vld [vmem:[#allocation14 + $0x68] sm:$0xff]
    %v907 = vld [vmem:[#allocation14 + $0x70] sm:$0xff]
    %v908 = vld [vmem:[#allocation14 + $0x78] sm:$0xff]
    %v909 = vld [vmem:[#allocation14 + $0x80] sm:$0xff]
    %v910 = vld [vmem:[#allocation14 + $0x88] sm:$0xff]
    %v911 = vld [vmem:[#allocation14 + $0x90] sm:$0xff]
    %v912 = vld [vmem:[#allocation14 + $0x98] sm:$0xff]
    %v913 = vld [vmem:[#allocation14 + $0xa0] sm:$0xff]
    %v914 = vld [vmem:[#allocation14 + $0xa8] sm:$0xff]
    %v915 = vld [vmem:[#allocation14 + $0xb0] sm:$0xff]
    %v916 = vld [vmem:[#allocation14 + $0xb8] sm:$0xff]
    %v917 = vld [vmem:[#allocation14 + $0xc0] sm:$0xff]
    %v918 = vld [vmem:[#allocation14 + $0xc8] sm:$0xff]
    %v919 = vld [vmem:[#allocation14 + $0xd0] sm:$0xff]
    %v920 = vld [vmem:[#allocation14 + $0xd8] sm:$0xff]
    %v921 = vld [vmem:[#allocation14 + $0xe0] sm:$0xff]
    %v922 = vld [vmem:[#allocation14 + $0xe8] sm:$0xff]
    %v923 = vld [vmem:[#allocation14 + $0xf0] sm:$0xff]
    %v924 = vld [vmem:[#allocation14 + $0xf8] sm:$0xff]
    %v925 = vld [vmem:[#allocation14 + $0x100] sm:$0xff]
    %v926 = vld [vmem:[#allocation14 + $0x108] sm:$0xff]
    %v927 = vld [vmem:[#allocation14 + $0x110] sm:$0xff]
    %v928 = vld [vmem:[#allocation14 + $0x118] sm:$0xff]
    %v929 = vld [vmem:[#allocation14 + $0x120] sm:$0xff]
    %v930 = vld [vmem:[#allocation14 + $0x128] sm:$0xff]
    %v931 = vld [vmem:[#allocation14 + $0x130] sm:$0xff]
    %v932 = vld [vmem:[#allocation14 + $0x138] sm:$0xff]
    %v933 = vld [vmem:[#allocation14 + $0x140] sm:$0xff]
    %v934 = vld [vmem:[#allocation14 + $0x148] sm:$0xff]
    %v935 = vld [vmem:[#allocation14 + $0x150] sm:$0xff]
    %v936 = vld [vmem:[#allocation14 + $0x158] sm:$0xff]
    %v937 = vld [vmem:[#allocation14 + $0x160] sm:$0xff]
    %v938 = vld [vmem:[#allocation14 + $0x168] sm:$0xff]
    %v939 = vld [vmem:[#allocation14 + $0x170] sm:$0xff]
    %v940 = vld [vmem:[#allocation14 + $0x178] sm:$0xff]
    %v941 = vld [vmem:[#allocation14 + $0x180] sm:$0xff]
    %v942 = vld [vmem:[#allocation14 + $0x188] sm:$0xff]
    %v943 = vld [vmem:[#allocation14 + $0x190] sm:$0xff]
    %v944 = vld [vmem:[#allocation14 + $0x198] sm:$0xff]
    %v945 = vld [vmem:[#allocation14 + $0x1a0] sm:$0xff]
    %v946 = vld [vmem:[#allocation14 + $0x1a8] sm:$0xff]
    %v947 = vld [vmem:[#allocation14 + $0x1b0] sm:$0xff]
    %v948 = vld [vmem:[#allocation14 + $0x1b8] sm:$0xff]
    %v949 = vld [vmem:[#allocation14 + $0x1c0] sm:$0xff]
    %v950 = vld [vmem:[#allocation14 + $0x1c8] sm:$0xff]
    %v951 = vld [vmem:[#allocation14 + $0x1d0] sm:$0xff]
    %v952 = vld [vmem:[#allocation14 + $0x1d8] sm:$0xff]
    %v953 = vld [vmem:[#allocation14 + $0x1e0] sm:$0xff]
    %v954 = vld [vmem:[#allocation14 + $0x1e8] sm:$0xff]
    %v955 = vld [vmem:[#allocation14 + $0x1f0] sm:$0xff]
    %v956 = vld [vmem:[#allocation14 + $0x1f8] sm:$0xff]
    %957 = vmatpush.msra.mxu0 %v953
    %958 = vmatpush.msra.mxu0 %v949
    %959 = vmatpush.msra.mxu0 %v945
    %960 = vmatpush.msra.mxu0 %v941
    %961 = vmatpush.msra.mxu0 %v937
    %962 = vmatpush.msra.mxu0 %v933
    %963 = vmatpush.msra.mxu0 %v929
    %964 = vmatpush.msra.mxu0 %v925
    %965 = vmatpush.msra.mxu0 %v921
    %966 = vmatpush.msra.mxu0 %v917
    %967 = vmatpush.msra.mxu0 %v913
    %968 = vmatpush.msra.mxu0 %v909
    %969 = vmatpush.msra.mxu0 %v905
    %970 = vmatpush.msra.mxu0 %v901
    %971 = vmatpush.msra.mxu0 %v897
    %972 = vmatpush.msra.mxu0 %v893
    %973 = vmatmul.f32.gmra.mxu0 %v883
    %v974 = vpop.f32.mrf.mxu0
    %v975 = vadd.f32 0.0, %v974
    %976 = vdwg.mxu0
    %977 = vmatpush.msra.mxu0 %v954
    %978 = vmatpush.msra.mxu0 %v950
    %979 = vmatpush.msra.mxu0 %v946
    %980 = vmatpush.msra.mxu0 %v942
    %981 = vmatpush.msra.mxu0 %v938
    %982 = vmatpush.msra.mxu0 %v934
    %983 = vmatpush.msra.mxu0 %v930
    %984 = vmatpush.msra.mxu0 %v926
    %985 = vmatpush.msra.mxu0 %v922
    %986 = vmatpush.msra.mxu0 %v918
    %987 = vmatpush.msra.mxu0 %v914
    %988 = vmatpush.msra.mxu0 %v910
    %989 = vmatpush.msra.mxu0 %v906
    %990 = vmatpush.msra.mxu0 %v902
    %991 = vmatpush.msra.mxu0 %v898
    %992 = vmatpush.msra.mxu0 %v894
    %993 = vmatmul.f32.gmra.mxu0 %v883
    %v994 = vpop.f32.mrf.mxu0
    %v995 = vadd.f32 0.0, %v994
    %996 = vdwg.mxu0
    %997 = vmatpush.msra.mxu0 %v955
    %998 = vmatpush.msra.mxu0 %v951
    %999 = vmatpush.msra.mxu0 %v947
    %1000 = vmatpush.msra.mxu0 %v943
    %1001 = vmatpush.msra.mxu0 %v939
    %1002 = vmatpush.msra.mxu0 %v935
    %1003 = vmatpush.msra.mxu0 %v931
    %1004 = vmatpush.msra.mxu0 %v927
    %1005 = vmatpush.msra.mxu0 %v923
    %1006 = vmatpush.msra.mxu0 %v919
    %1007 = vmatpush.msra.mxu0 %v915
    %1008 = vmatpush.msra.mxu0 %v911
    %1009 = vmatpush.msra.mxu0 %v907
    %1010 = vmatpush.msra.mxu0 %v903
    %1011 = vmatpush.msra.mxu0 %v899
    %1012 = vmatpush.msra.mxu0 %v895
    %1013 = vmatmul.f32.gmra.mxu0 %v883
    %v1014 = vpop.f32.mrf.mxu0
    %v1015 = vadd.f32 0.0, %v1014
    %1016 = vdwg.mxu0
    %1017 = vmatpush.msra.mxu0 %v956
    %1018 = vmatpush.msra.mxu0 %v952
    %1019 = vmatpush.msra.mxu0 %v948
    %1020 = vmatpush.msra.mxu0 %v944
    %1021 = vmatpush.msra.mxu0 %v940
    %1022 = vmatpush.msra.mxu0 %v936
    %1023 = vmatpush.msra.mxu0 %v932
    %1024 = vmatpush.msra.mxu0 %v928
    %1025 = vmatpush.msra.mxu0 %v924
    %1026 = vmatpush.msra.mxu0 %v920
    %1027 = vmatpush.msra.mxu0 %v916
    %1028 = vmatpush.msra.mxu0 %v912
    %1029 = vmatpush.msra.mxu0 %v908
    %1030 = vmatpush.msra.mxu0 %v904
    %1031 = vmatpush.msra.mxu0 %v900
    %1032 = vmatpush.msra.mxu0 %v896
    %1033 = vmatmul.f32.gmra.mxu0 %v883
    %v1034 = vpop.f32.mrf.mxu0
    %v1035 = vadd.f32 0.0, %v1034
    %1036 = vdwg.mxu0
    %v1037 = vadd.f32 %v889, %v975
    %v1038 = vadd.f32 %v890, %v995
    %v1039 = vadd.f32 %v891, %v1015
    %v1040 = vadd.f32 %v892, %v1035
    %v1041 = vmul.f32 %v1037, 0.5
    %v1042 = vtanh.pop %v1041
    %v1043 = vmul.f32 %v1042, 0.5
    %v1044 = vadd.f32 %v1043, 0.5
    %v1045 = vmul.f32 %v1038, 0.5
    %v1046 = vtanh.pop %v1045
    %v1047 = vmul.f32 %v1046, 0.5
    %v1048 = vadd.f32 %v1047, 0.5
    %v1049 = vtanh.pop %v1039
    %v1050 = vmul.f32 %v1040, 0.5
    %v1051 = vtanh.pop %v1050
    %v1052 = vmul.f32 %v1051, 0.5
    %v1053 = vadd.f32 %v1052, 0.5
    %v1054 = vmul.f32 %v1048, %v881
    %v1055 = vmul.f32 %v1044, %v1049
    %v1056 = vadd.f32 %v1054, %v1055
    %v1057 = vtanh.pop %v1056
    %v1058 = vmul.f32 %v1053, %v1057
    %s1059 = scalar_lea.vmem [#allocation5], 16
    %1060 = vst [vmem:[%s1059] sm:$0xff] %v1058
    %s1061 = smul.u32 3, 4
    %s1062 = smul.addr %s1061, 8
    %s1063 = scalar_lea.vmem [#allocation4], %s1062
    %v1064 = vld [vmem:[%s1063] sm:$0xff]
    %v1065 = vld [vmem:[%s1063 + $0x8] sm:$0xff]
    %v1066 = vld [vmem:[%s1063 + $0x10] sm:$0xff]
    %v1067 = vld [vmem:[%s1063 + $0x18] sm:$0xff]
    %v1068 = vld [vmem:[#allocation14] sm:$0xff]
    %v1069 = vld [vmem:[#allocation14 + $0x8] sm:$0xff]
    %v1070 = vld [vmem:[#allocation14 + $0x10] sm:$0xff]
    %v1071 = vld [vmem:[#allocation14 + $0x18] sm:$0xff]
    %v1072 = vld [vmem:[#allocation14 + $0x20] sm:$0xff]
    %v1073 = vld [vmem:[#allocation14 + $0x28] sm:$0xff]
    %v1074 = vld [vmem:[#allocation14 + $0x30] sm:$0xff]
    %v1075 = vld [vmem:[#allocation14 + $0x38] sm:$0xff]
    %v1076 = vld [vmem:[#allocation14 + $0x40] sm:$0xff]
    %v1077 = vld [vmem:[#allocation14 + $0x48] sm:$0xff]
    %v1078 = vld [vmem:[#allocation14 + $0x50] sm:$0xff]
    %v1079 = vld [vmem:[#allocation14 + $0x58] sm:$0xff]
    %v1080 = vld [vmem:[#allocation14 + $0x60] sm:$0xff]
    %v1081 = vld [vmem:[#allocation14 + $0x68] sm:$0xff]
    %v1082 = vld [vmem:[#allocation14 + $0x70] sm:$0xff]
    %v1083 = vld [vmem:[#allocation14 + $0x78] sm:$0xff]
    %v1084 = vld [vmem:[#allocation14 + $0x80] sm:$0xff]
    %v1085 = vld [vmem:[#allocation14 + $0x88] sm:$0xff]
    %v1086 = vld [vmem:[#allocation14 + $0x90] sm:$0xff]
    %v1087 = vld [vmem:[#allocation14 + $0x98] sm:$0xff]
    %v1088 = vld [vmem:[#allocation14 + $0xa0] sm:$0xff]
    %v1089 = vld [vmem:[#allocation14 + $0xa8] sm:$0xff]
    %v1090 = vld [vmem:[#allocation14 + $0xb0] sm:$0xff]
    %v1091 = vld [vmem:[#allocation14 + $0xb8] sm:$0xff]
    %v1092 = vld [vmem:[#allocation14 + $0xc0] sm:$0xff]
    %v1093 = vld [vmem:[#allocation14 + $0xc8] sm:$0xff]
    %v1094 = vld [vmem:[#allocation14 + $0xd0] sm:$0xff]
    %v1095 = vld [vmem:[#allocation14 + $0xd8] sm:$0xff]
    %v1096 = vld [vmem:[#allocation14 + $0xe0] sm:$0xff]
    %v1097 = vld [vmem:[#allocation14 + $0xe8] sm:$0xff]
    %v1098 = vld [vmem:[#allocation14 + $0xf0] sm:$0xff]
    %v1099 = vld [vmem:[#allocation14 + $0xf8] sm:$0xff]
    %v1100 = vld [vmem:[#allocation14 + $0x100] sm:$0xff]
    %v1101 = vld [vmem:[#allocation14 + $0x108] sm:$0xff]
    %v1102 = vld [vmem:[#allocation14 + $0x110] sm:$0xff]
    %v1103 = vld [vmem:[#allocation14 + $0x118] sm:$0xff]
    %v1104 = vld [vmem:[#allocation14 + $0x120] sm:$0xff]
    %v1105 = vld [vmem:[#allocation14 + $0x128] sm:$0xff]
    %v1106 = vld [vmem:[#allocation14 + $0x130] sm:$0xff]
    %v1107 = vld [vmem:[#allocation14 + $0x138] sm:$0xff]
    %v1108 = vld [vmem:[#allocation14 + $0x140] sm:$0xff]
    %v1109 = vld [vmem:[#allocation14 + $0x148] sm:$0xff]
    %v1110 = vld [vmem:[#allocation14 + $0x150] sm:$0xff]
    %v1111 = vld [vmem:[#allocation14 + $0x158] sm:$0xff]
    %v1112 = vld [vmem:[#allocation14 + $0x160] sm:$0xff]
    %v1113 = vld [vmem:[#allocation14 + $0x168] sm:$0xff]
    %v1114 = vld [vmem:[#allocation14 + $0x170] sm:$0xff]
    %v1115 = vld [vmem:[#allocation14 + $0x178] sm:$0xff]
    %v1116 = vld [vmem:[#allocation14 + $0x180] sm:$0xff]
    %v1117 = vld [vmem:[#allocation14 + $0x188] sm:$0xff]
    %v1118 = vld [vmem:[#allocation14 + $0x190] sm:$0xff]
    %v1119 = vld [vmem:[#allocation14 + $0x198] sm:$0xff]
    %v1120 = vld [vmem:[#allocation14 + $0x1a0] sm:$0xff]
    %v1121 = vld [vmem:[#allocation14 + $0x1a8] sm:$0xff]
    %v1122 = vld [vmem:[#allocation14 + $0x1b0] sm:$0xff]
    %v1123 = vld [vmem:[#allocation14 + $0x1b8] sm:$0xff]
    %v1124 = vld [vmem:[#allocation14 + $0x1c0] sm:$0xff]
    %v1125 = vld [vmem:[#allocation14 + $0x1c8] sm:$0xff]
    %v1126 = vld [vmem:[#allocation14 + $0x1d0] sm:$0xff]
    %v1127 = vld [vmem:[#allocation14 + $0x1d8] sm:$0xff]
    %v1128 = vld [vmem:[#allocation14 + $0x1e0] sm:$0xff]
    %v1129 = vld [vmem:[#allocation14 + $0x1e8] sm:$0xff]
    %v1130 = vld [vmem:[#allocation14 + $0x1f0] sm:$0xff]
    %v1131 = vld [vmem:[#allocation14 + $0x1f8] sm:$0xff]
    %1132 = vmatpush.msra.mxu0 %v1128
    %1133 = vmatpush.msra.mxu0 %v1124
    %1134 = vmatpush.msra.mxu0 %v1120
    %1135 = vmatpush.msra.mxu0 %v1116
    %1136 = vmatpush.msra.mxu0 %v1112
    %1137 = vmatpush.msra.mxu0 %v1108
    %1138 = vmatpush.msra.mxu0 %v1104
    %1139 = vmatpush.msra.mxu0 %v1100
    %1140 = vmatpush.msra.mxu0 %v1096
    %1141 = vmatpush.msra.mxu0 %v1092
    %1142 = vmatpush.msra.mxu0 %v1088
    %1143 = vmatpush.msra.mxu0 %v1084
    %1144 = vmatpush.msra.mxu0 %v1080
    %1145 = vmatpush.msra.mxu0 %v1076
    %1146 = vmatpush.msra.mxu0 %v1072
    %1147 = vmatpush.msra.mxu0 %v1068
    %1148 = vmatmul.f32.gmra.mxu0 %v1058
    %v1149 = vpop.f32.mrf.mxu0
    %v1150 = vadd.f32 0.0, %v1149
    %1151 = vdwg.mxu0
    %1152 = vmatpush.msra.mxu0 %v1129
    %1153 = vmatpush.msra.mxu0 %v1125
    %1154 = vmatpush.msra.mxu0 %v1121
    %1155 = vmatpush.msra.mxu0 %v1117
    %1156 = vmatpush.msra.mxu0 %v1113
    %1157 = vmatpush.msra.mxu0 %v1109
    %1158 = vmatpush.msra.mxu0 %v1105
    %1159 = vmatpush.msra.mxu0 %v1101
    %1160 = vmatpush.msra.mxu0 %v1097
    %1161 = vmatpush.msra.mxu0 %v1093
    %1162 = vmatpush.msra.mxu0 %v1089
    %1163 = vmatpush.msra.mxu0 %v1085
    %1164 = vmatpush.msra.mxu0 %v1081
    %1165 = vmatpush.msra.mxu0 %v1077
    %1166 = vmatpush.msra.mxu0 %v1073
    %1167 = vmatpush.msra.mxu0 %v1069
    %1168 = vmatmul.f32.gmra.mxu0 %v1058
    %v1169 = vpop.f32.mrf.mxu0
    %v1170 = vadd.f32 0.0, %v1169
    %1171 = vdwg.mxu0
    %1172 = vmatpush.msra.mxu0 %v1130
    %1173 = vmatpush.msra.mxu0 %v1126
    %1174 = vmatpush.msra.mxu0 %v1122
    %1175 = vmatpush.msra.mxu0 %v1118
    %1176 = vmatpush.msra.mxu0 %v1114
    %1177 = vmatpush.msra.mxu0 %v1110
    %1178 = vmatpush.msra.mxu0 %v1106
    %1179 = vmatpush.msra.mxu0 %v1102
    %1180 = vmatpush.msra.mxu0 %v1098
    %1181 = vmatpush.msra.mxu0 %v1094
    %1182 = vmatpush.msra.mxu0 %v1090
    %1183 = vmatpush.msra.mxu0 %v1086
    %1184 = vmatpush.msra.mxu0 %v1082
    %1185 = vmatpush.msra.mxu0 %v1078
    %1186 = vmatpush.msra.mxu0 %v1074
    %1187 = vmatpush.msra.mxu0 %v1070
    %1188 = vmatmul.f32.gmra.mxu0 %v1058
    %v1189 = vpop.f32.mrf.mxu0
    %v1190 = vadd.f32 0.0, %v1189
    %1191 = vdwg.mxu0
    %1192 = vmatpush.msra.mxu0 %v1131
    %1193 = vmatpush.msra.mxu0 %v1127
    %1194 = vmatpush.msra.mxu0 %v1123
    %1195 = vmatpush.msra.mxu0 %v1119
    %1196 = vmatpush.msra.mxu0 %v1115
    %1197 = vmatpush.msra.mxu0 %v1111
    %1198 = vmatpush.msra.mxu0 %v1107
    %1199 = vmatpush.msra.mxu0 %v1103
    %1200 = vmatpush.msra.mxu0 %v1099
    %1201 = vmatpush.msra.mxu0 %v1095
    %1202 = vmatpush.msra.mxu0 %v1091
    %1203 = vmatpush.msra.mxu0 %v1087
    %1204 = vmatpush.msra.mxu0 %v1083
    %1205 = vmatpush.msra.mxu0 %v1079
    %1206 = vmatpush.msra.mxu0 %v1075
    %1207 = vmatpush.msra.mxu0 %v1071
    %1208 = vmatmul.f32.gmra.mxu0 %v1058
    %v1209 = vpop.f32.mrf.mxu0
    %v1210 = vadd.f32 0.0, %v1209
    %1211 = vdwg.mxu0
    %v1212 = vadd.f32 %v1064, %v1150
    %v1213 = vadd.f32 %v1065, %v1170
    %v1214 = vadd.f32 %v1066, %v1190
    %v1215 = vadd.f32 %v1067, %v1210
    %v1216 = vmul.f32 %v1212, 0.5
    %v1217 = vtanh.pop %v1216
    %v1218 = vmul.f32 %v1217, 0.5
    %v1219 = vadd.f32 %v1218, 0.5
    %v1220 = vmul.f32 %v1213, 0.5
    %v1221 = vtanh.pop %v1220
    %v1222 = vmul.f32 %v1221, 0.5
    %v1223 = vadd.f32 %v1222, 0.5
    %v1224 = vtanh.pop %v1214
    %v1225 = vmul.f32 %v1215, 0.5
    %v1226 = vtanh.pop %v1225
    %v1227 = vmul.f32 %v1226, 0.5
    %v1228 = vadd.f32 %v1227, 0.5
    %v1229 = vmul.f32 %v1223, %v1056
    %v1230 = vmul.f32 %v1219, %v1224
    %v1231 = vadd.f32 %v1229, %v1230
    %v1232 = vtanh.pop %v1231
    %v1233 = vmul.f32 %v1228, %v1232
    %s1234 = scalar_lea.vmem [#allocation5], 24
    %1235 = vst [vmem:[%s1234] sm:$0xff] %v1233
    %s1236 = smul.u32 4, 4
    %s1237 = smul.addr %s1236, 8
    %s1238 = scalar_lea.vmem [#allocation4], %s1237
    %v1239 = vld [vmem:[%s1238] sm:$0xff]
    %v1240 = vld [vmem:[%s1238 + $0x8] sm:$0xff]
    %v1241 = vld [vmem:[%s1238 + $0x10] sm:$0xff]
    %v1242 = vld [vmem:[%s1238 + $0x18] sm:$0xff]
    %v1243 = vld [vmem:[#allocation14] sm:$0xff]
    %v1244 = vld [vmem:[#allocation14 + $0x8] sm:$0xff]
    %v1245 = vld [vmem:[#allocation14 + $0x10] sm:$0xff]
    %v1246 = vld [vmem:[#allocation14 + $0x18] sm:$0xff]
    %v1247 = vld [vmem:[#allocation14 + $0x20] sm:$0xff]
    %v1248 = vld [vmem:[#allocation14 + $0x28] sm:$0xff]
    %v1249 = vld [vmem:[#allocation14 + $0x30] sm:$0xff]
    %v1250 = vld [vmem:[#allocation14 + $0x38] sm:$0xff]
    %v1251 = vld [vmem:[#allocation14 + $0x40] sm:$0xff]
    %v1252 = vld [vmem:[#allocation14 + $0x48] sm:$0xff]
    %v1253 = vld [vmem:[#allocation14 + $0x50] sm:$0xff]
    %v1254 = vld [vmem:[#allocation14 + $0x58] sm:$0xff]
    %v1255 = vld [vmem:[#allocation14 + $0x60] sm:$0xff]
    %v1256 = vld [vmem:[#allocation14 + $0x68] sm:$0xff]
    %v1257 = vld [vmem:[#allocation14 + $0x70] sm:$0xff]
    %v1258 = vld [vmem:[#allocation14 + $0x78] sm:$0xff]
    %v1259 = vld [vmem:[#allocation14 + $0x80] sm:$0xff]
    %v1260 = vld [vmem:[#allocation14 + $0x88] sm:$0xff]
    %v1261 = vld [vmem:[#allocation14 + $0x90] sm:$0xff]
    %v1262 = vld [vmem:[#allocation14 + $0x98] sm:$0xff]
    %v1263 = vld [vmem:[#allocation14 + $0xa0] sm:$0xff]
    %v1264 = vld [vmem:[#allocation14 + $0xa8] sm:$0xff]
    %v1265 = vld [vmem:[#allocation14 + $0xb0] sm:$0xff]
    %v1266 = vld [vmem:[#allocation14 + $0xb8] sm:$0xff]
    %v1267 = vld [vmem:[#allocation14 + $0xc0] sm:$0xff]
    %v1268 = vld [vmem:[#allocation14 + $0xc8] sm:$0xff]
    %v1269 = vld [vmem:[#allocation14 + $0xd0] sm:$0xff]
    %v1270 = vld [vmem:[#allocation14 + $0xd8] sm:$0xff]
    %v1271 = vld [vmem:[#allocation14 + $0xe0] sm:$0xff]
    %v1272 = vld [vmem:[#allocation14 + $0xe8] sm:$0xff]
    %v1273 = vld [vmem:[#allocation14 + $0xf0] sm:$0xff]
    %v1274 = vld [vmem:[#allocation14 + $0xf8] sm:$0xff]
    %v1275 = vld [vmem:[#allocation14 + $0x100] sm:$0xff]
    %v1276 = vld [vmem:[#allocation14 + $0x108] sm:$0xff]
    %v1277 = vld [vmem:[#allocation14 + $0x110] sm:$0xff]
    %v1278 = vld [vmem:[#allocation14 + $0x118] sm:$0xff]
    %v1279 = vld [vmem:[#allocation14 + $0x120] sm:$0xff]
    %v1280 = vld [vmem:[#allocation14 + $0x128] sm:$0xff]
    %v1281 = vld [vmem:[#allocation14 + $0x130] sm:$0xff]
    %v1282 = vld [vmem:[#allocation14 + $0x138] sm:$0xff]
    %v1283 = vld [vmem:[#allocation14 + $0x140] sm:$0xff]
    %v1284 = vld [vmem:[#allocation14 + $0x148] sm:$0xff]
    %v1285 = vld [vmem:[#allocation14 + $0x150] sm:$0xff]
    %v1286 = vld [vmem:[#allocation14 + $0x158] sm:$0xff]
    %v1287 = vld [vmem:[#allocation14 + $0x160] sm:$0xff]
    %v1288 = vld [vmem:[#allocation14 + $0x168] sm:$0xff]
    %v1289 = vld [vmem:[#allocation14 + $0x170] sm:$0xff]
    %v1290 = vld [vmem:[#allocation14 + $0x178] sm:$0xff]
    %v1291 = vld [vmem:[#allocation14 + $0x180] sm:$0xff]
    %v1292 = vld [vmem:[#allocation14 + $0x188] sm:$0xff]
    %v1293 = vld [vmem:[#allocation14 + $0x190] sm:$0xff]
    %v1294 = vld [vmem:[#allocation14 + $0x198] sm:$0xff]
    %v1295 = vld [vmem:[#allocation14 + $0x1a0] sm:$0xff]
    %v1296 = vld [vmem:[#allocation14 + $0x1a8] sm:$0xff]
    %v1297 = vld [vmem:[#allocation14 + $0x1b0] sm:$0xff]
    %v1298 = vld [vmem:[#allocation14 + $0x1b8] sm:$0xff]
    %v1299 = vld [vmem:[#allocation14 + $0x1c0] sm:$0xff]
    %v1300 = vld [vmem:[#allocation14 + $0x1c8] sm:$0xff]
    %v1301 = vld [vmem:[#allocation14 + $0x1d0] sm:$0xff]
    %v1302 = vld [vmem:[#allocation14 + $0x1d8] sm:$0xff]
    %v1303 = vld [vmem:[#allocation14 + $0x1e0] sm:$0xff]
    %v1304 = vld [vmem:[#allocation14 + $0x1e8] sm:$0xff]
    %v1305 = vld [vmem:[#allocation14 + $0x1f0] sm:$0xff]
    %v1306 = vld [vmem:[#allocation14 + $0x1f8] sm:$0xff]
    %1307 = vmatpush.msra.mxu0 %v1303
    %1308 = vmatpush.msra.mxu0 %v1299
    %1309 = vmatpush.msra.mxu0 %v1295
    %1310 = vmatpush.msra.mxu0 %v1291
    %1311 = vmatpush.msra.mxu0 %v1287
    %1312 = vmatpush.msra.mxu0 %v1283
    %1313 = vmatpush.msra.mxu0 %v1279
    %1314 = vmatpush.msra.mxu0 %v1275
    %1315 = vmatpush.msra.mxu0 %v1271
    %1316 = vmatpush.msra.mxu0 %v1267
    %1317 = vmatpush.msra.mxu0 %v1263
    %1318 = vmatpush.msra.mxu0 %v1259
    %1319 = vmatpush.msra.mxu0 %v1255
    %1320 = vmatpush.msra.mxu0 %v1251
    %1321 = vmatpush.msra.mxu0 %v1247
    %1322 = vmatpush.msra.mxu0 %v1243
    %1323 = vmatmul.f32.gmra.mxu0 %v1233
    %v1324 = vpop.f32.mrf.mxu0
    %v1325 = vadd.f32 0.0, %v1324
    %1326 = vdwg.mxu0
    %1327 = vmatpush.msra.mxu0 %v1304
    %1328 = vmatpush.msra.mxu0 %v1300
    %1329 = vmatpush.msra.mxu0 %v1296
    %1330 = vmatpush.msra.mxu0 %v1292
    %1331 = vmatpush.msra.mxu0 %v1288
    %1332 = vmatpush.msra.mxu0 %v1284
    %1333 = vmatpush.msra.mxu0 %v1280
    %1334 = vmatpush.msra.mxu0 %v1276
    %1335 = vmatpush.msra.mxu0 %v1272
    %1336 = vmatpush.msra.mxu0 %v1268
    %1337 = vmatpush.msra.mxu0 %v1264
    %1338 = vmatpush.msra.mxu0 %v1260
    %1339 = vmatpush.msra.mxu0 %v1256
    %1340 = vmatpush.msra.mxu0 %v1252
    %1341 = vmatpush.msra.mxu0 %v1248
    %1342 = vmatpush.msra.mxu0 %v1244
    %1343 = vmatmul.f32.gmra.mxu0 %v1233
    %v1344 = vpop.f32.mrf.mxu0
    %v1345 = vadd.f32 0.0, %v1344
    %1346 = vdwg.mxu0
    %1347 = vmatpush.msra.mxu0 %v1305
    %1348 = vmatpush.msra.mxu0 %v1301
    %1349 = vmatpush.msra.mxu0 %v1297
    %1350 = vmatpush.msra.mxu0 %v1293
    %1351 = vmatpush.msra.mxu0 %v1289
    %1352 = vmatpush.msra.mxu0 %v1285
    %1353 = vmatpush.msra.mxu0 %v1281
    %1354 = vmatpush.msra.mxu0 %v1277
    %1355 = vmatpush.msra.mxu0 %v1273
    %1356 = vmatpush.msra.mxu0 %v1269
    %1357 = vmatpush.msra.mxu0 %v1265
    %1358 = vmatpush.msra.mxu0 %v1261
    %1359 = vmatpush.msra.mxu0 %v1257
    %1360 = vmatpush.msra.mxu0 %v1253
    %1361 = vmatpush.msra.mxu0 %v1249
    %1362 = vmatpush.msra.mxu0 %v1245
    %1363 = vmatmul.f32.gmra.mxu0 %v1233
    %v1364 = vpop.f32.mrf.mxu0
    %v1365 = vadd.f32 0.0, %v1364
    %1366 = vdwg.mxu0
    %1367 = vmatpush.msra.mxu0 %v1306
    %1368 = vmatpush.msra.mxu0 %v1302
    %1369 = vmatpush.msra.mxu0 %v1298
    %1370 = vmatpush.msra.mxu0 %v1294
    %1371 = vmatpush.msra.mxu0 %v1290
    %1372 = vmatpush.msra.mxu0 %v1286
    %1373 = vmatpush.msra.mxu0 %v1282
    %1374 = vmatpush.msra.mxu0 %v1278
    %1375 = vmatpush.msra.mxu0 %v1274
    %1376 = vmatpush.msra.mxu0 %v1270
    %1377 = vmatpush.msra.mxu0 %v1266
    %1378 = vmatpush.msra.mxu0 %v1262
    %1379 = vmatpush.msra.mxu0 %v1258
    %1380 = vmatpush.msra.mxu0 %v1254
    %1381 = vmatpush.msra.mxu0 %v1250
    %1382 = vmatpush.msra.mxu0 %v1246
    %1383 = vmatmul.f32.gmra.mxu0 %v1233
    %v1384 = vpop.f32.mrf.mxu0
    %v1385 = vadd.f32 0.0, %v1384
    %1386 = vdwg.mxu0
    %v1387 = vadd.f32 %v1239, %v1325
    %v1388 = vadd.f32 %v1240, %v1345
    %v1389 = vadd.f32 %v1241, %v1365
    %v1390 = vadd.f32 %v1242, %v1385
    %v1391 = vmul.f32 %v1387, 0.5
    %v1392 = vtanh.pop %v1391
    %v1393 = vmul.f32 %v1392, 0.5
    %v1394 = vadd.f32 %v1393, 0.5
    %v1395 = vmul.f32 %v1388, 0.5
    %v1396 = vtanh.pop %v1395
    %v1397 = vmul.f32 %v1396, 0.5
    %v1398 = vadd.f32 %v1397, 0.5
    %v1399 = vtanh.pop %v1389
    %v1400 = vmul.f32 %v1390, 0.5
    %v1401 = vtanh.pop %v1400
    %v1402 = vmul.f32 %v1401, 0.5
    %v1403 = vadd.f32 %v1402, 0.5
    %v1404 = vmul.f32 %v1398, %v1231
    %v1405 = vmul.f32 %v1394, %v1399
    %v1406 = vadd.f32 %v1404, %v1405
    %v1407 = vtanh.pop %v1406
    %v1408 = vmul.f32 %v1403, %v1407
    %s1409 = scalar_lea.vmem [#allocation5], 32
    %1410 = vst [vmem:[%s1409] sm:$0xff] %v1408
    %s1411 = smul.u32 5, 4
    %s1412 = smul.addr %s1411, 8
    %s1413 = scalar_lea.vmem [#allocation4], %s1412
    %v1414 = vld [vmem:[%s1413] sm:$0xff]
    %v1415 = vld [vmem:[%s1413 + $0x8] sm:$0xff]
    %v1416 = vld [vmem:[%s1413 + $0x10] sm:$0xff]
    %v1417 = vld [vmem:[%s1413 + $0x18] sm:$0xff]
    %v1418 = vld [vmem:[#allocation14] sm:$0xff]
    %v1419 = vld [vmem:[#allocation14 + $0x8] sm:$0xff]
    %v1420 = vld [vmem:[#allocation14 + $0x10] sm:$0xff]
    %v1421 = vld [vmem:[#allocation14 + $0x18] sm:$0xff]
    %v1422 = vld [vmem:[#allocation14 + $0x20] sm:$0xff]
    %v1423 = vld [vmem:[#allocation14 + $0x28] sm:$0xff]
    %v1424 = vld [vmem:[#allocation14 + $0x30] sm:$0xff]
    %v1425 = vld [vmem:[#allocation14 + $0x38] sm:$0xff]
    %v1426 = vld [vmem:[#allocation14 + $0x40] sm:$0xff]
    %v1427 = vld [vmem:[#allocation14 + $0x48] sm:$0xff]
    %v1428 = vld [vmem:[#allocation14 + $0x50] sm:$0xff]
    %v1429 = vld [vmem:[#allocation14 + $0x58] sm:$0xff]
    %v1430 = vld [vmem:[#allocation14 + $0x60] sm:$0xff]
    %v1431 = vld [vmem:[#allocation14 + $0x68] sm:$0xff]
    %v1432 = vld [vmem:[#allocation14 + $0x70] sm:$0xff]
    %v1433 = vld [vmem:[#allocation14 + $0x78] sm:$0xff]
    %v1434 = vld [vmem:[#allocation14 + $0x80] sm:$0xff]
    %v1435 = vld [vmem:[#allocation14 + $0x88] sm:$0xff]
    %v1436 = vld [vmem:[#allocation14 + $0x90] sm:$0xff]
    %v1437 = vld [vmem:[#allocation14 + $0x98] sm:$0xff]
    %v1438 = vld [vmem:[#allocation14 + $0xa0] sm:$0xff]
    %v1439 = vld [vmem:[#allocation14 + $0xa8] sm:$0xff]
    %v1440 = vld [vmem:[#allocation14 + $0xb0] sm:$0xff]
    %v1441 = vld [vmem:[#allocation14 + $0xb8] sm:$0xff]
    %v1442 = vld [vmem:[#allocation14 + $0xc0] sm:$0xff]
    %v1443 = vld [vmem:[#allocation14 + $0xc8] sm:$0xff]
    %v1444 = vld [vmem:[#allocation14 + $0xd0] sm:$0xff]
    %v1445 = vld [vmem:[#allocation14 + $0xd8] sm:$0xff]
    %v1446 = vld [vmem:[#allocation14 + $0xe0] sm:$0xff]
    %v1447 = vld [vmem:[#allocation14 + $0xe8] sm:$0xff]
    %v1448 = vld [vmem:[#allocation14 + $0xf0] sm:$0xff]
    %v1449 = vld [vmem:[#allocation14 + $0xf8] sm:$0xff]
    %v1450 = vld [vmem:[#allocation14 + $0x100] sm:$0xff]
    %v1451 = vld [vmem:[#allocation14 + $0x108] sm:$0xff]
    %v1452 = vld [vmem:[#allocation14 + $0x110] sm:$0xff]
    %v1453 = vld [vmem:[#allocation14 + $0x118] sm:$0xff]
    %v1454 = vld [vmem:[#allocation14 + $0x120] sm:$0xff]
    %v1455 = vld [vmem:[#allocation14 + $0x128] sm:$0xff]
    %v1456 = vld [vmem:[#allocation14 + $0x130] sm:$0xff]
    %v1457 = vld [vmem:[#allocation14 + $0x138] sm:$0xff]
    %v1458 = vld [vmem:[#allocation14 + $0x140] sm:$0xff]
    %v1459 = vld [vmem:[#allocation14 + $0x148] sm:$0xff]
    %v1460 = vld [vmem:[#allocation14 + $0x150] sm:$0xff]
    %v1461 = vld [vmem:[#allocation14 + $0x158] sm:$0xff]
    %v1462 = vld [vmem:[#allocation14 + $0x160] sm:$0xff]
    %v1463 = vld [vmem:[#allocation14 + $0x168] sm:$0xff]
    %v1464 = vld [vmem:[#allocation14 + $0x170] sm:$0xff]
    %v1465 = vld [vmem:[#allocation14 + $0x178] sm:$0xff]
    %v1466 = vld [vmem:[#allocation14 + $0x180] sm:$0xff]
    %v1467 = vld [vmem:[#allocation14 + $0x188] sm:$0xff]
    %v1468 = vld [vmem:[#allocation14 + $0x190] sm:$0xff]
    %v1469 = vld [vmem:[#allocation14 + $0x198] sm:$0xff]
    %v1470 = vld [vmem:[#allocation14 + $0x1a0] sm:$0xff]
    %v1471 = vld [vmem:[#allocation14 + $0x1a8] sm:$0xff]
    %v1472 = vld [vmem:[#allocation14 + $0x1b0] sm:$0xff]
    %v1473 = vld [vmem:[#allocation14 + $0x1b8] sm:$0xff]
    %v1474 = vld [vmem:[#allocation14 + $0x1c0] sm:$0xff]
    %v1475 = vld [vmem:[#allocation14 + $0x1c8] sm:$0xff]
    %v1476 = vld [vmem:[#allocation14 + $0x1d0] sm:$0xff]
    %v1477 = vld [vmem:[#allocation14 + $0x1d8] sm:$0xff]
    %v1478 = vld [vmem:[#allocation14 + $0x1e0] sm:$0xff]
    %v1479 = vld [vmem:[#allocation14 + $0x1e8] sm:$0xff]
    %v1480 = vld [vmem:[#allocation14 + $0x1f0] sm:$0xff]
    %v1481 = vld [vmem:[#allocation14 + $0x1f8] sm:$0xff]
    %1482 = vmatpush.msra.mxu0 %v1478
    %1483 = vmatpush.msra.mxu0 %v1474
    %1484 = vmatpush.msra.mxu0 %v1470
    %1485 = vmatpush.msra.mxu0 %v1466
    %1486 = vmatpush.msra.mxu0 %v1462
    %1487 = vmatpush.msra.mxu0 %v1458
    %1488 = vmatpush.msra.mxu0 %v1454
    %1489 = vmatpush.msra.mxu0 %v1450
    %1490 = vmatpush.msra.mxu0 %v1446
    %1491 = vmatpush.msra.mxu0 %v1442
    %1492 = vmatpush.msra.mxu0 %v1438
    %1493 = vmatpush.msra.mxu0 %v1434
    %1494 = vmatpush.msra.mxu0 %v1430
    %1495 = vmatpush.msra.mxu0 %v1426
    %1496 = vmatpush.msra.mxu0 %v1422
    %1497 = vmatpush.msra.mxu0 %v1418
    %1498 = vmatmul.f32.gmra.mxu0 %v1408
    %v1499 = vpop.f32.mrf.mxu0
    %v1500 = vadd.f32 0.0, %v1499
    %1501 = vdwg.mxu0
    %1502 = vmatpush.msra.mxu0 %v1479
    %1503 = vmatpush.msra.mxu0 %v1475
    %1504 = vmatpush.msra.mxu0 %v1471
    %1505 = vmatpush.msra.mxu0 %v1467
    %1506 = vmatpush.msra.mxu0 %v1463
    %1507 = vmatpush.msra.mxu0 %v1459
    %1508 = vmatpush.msra.mxu0 %v1455
    %1509 = vmatpush.msra.mxu0 %v1451
    %1510 = vmatpush.msra.mxu0 %v1447
    %1511 = vmatpush.msra.mxu0 %v1443
    %1512 = vmatpush.msra.mxu0 %v1439
    %1513 = vmatpush.msra.mxu0 %v1435
    %1514 = vmatpush.msra.mxu0 %v1431
    %1515 = vmatpush.msra.mxu0 %v1427
    %1516 = vmatpush.msra.mxu0 %v1423
    %1517 = vmatpush.msra.mxu0 %v1419
    %1518 = vmatmul.f32.gmra.mxu0 %v1408
    %v1519 = vpop.f32.mrf.mxu0
    %v1520 = vadd.f32 0.0, %v1519
    %1521 = vdwg.mxu0
    %1522 = vmatpush.msra.mxu0 %v1480
    %1523 = vmatpush.msra.mxu0 %v1476
    %1524 = vmatpush.msra.mxu0 %v1472
    %1525 = vmatpush.msra.mxu0 %v1468
    %1526 = vmatpush.msra.mxu0 %v1464
    %1527 = vmatpush.msra.mxu0 %v1460
    %1528 = vmatpush.msra.mxu0 %v1456
    %1529 = vmatpush.msra.mxu0 %v1452
    %1530 = vmatpush.msra.mxu0 %v1448
    %1531 = vmatpush.msra.mxu0 %v1444
    %1532 = vmatpush.msra.mxu0 %v1440
    %1533 = vmatpush.msra.mxu0 %v1436
    %1534 = vmatpush.msra.mxu0 %v1432
    %1535 = vmatpush.msra.mxu0 %v1428
    %1536 = vmatpush.msra.mxu0 %v1424
    %1537 = vmatpush.msra.mxu0 %v1420
    %1538 = vmatmul.f32.gmra.mxu0 %v1408
    %v1539 = vpop.f32.mrf.mxu0
    %v1540 = vadd.f32 0.0, %v1539
    %1541 = vdwg.mxu0
    %1542 = vmatpush.msra.mxu0 %v1481
    %1543 = vmatpush.msra.mxu0 %v1477
    %1544 = vmatpush.msra.mxu0 %v1473
    %1545 = vmatpush.msra.mxu0 %v1469
    %1546 = vmatpush.msra.mxu0 %v1465
    %1547 = vmatpush.msra.mxu0 %v1461
    %1548 = vmatpush.msra.mxu0 %v1457
    %1549 = vmatpush.msra.mxu0 %v1453
    %1550 = vmatpush.msra.mxu0 %v1449
    %1551 = vmatpush.msra.mxu0 %v1445
    %1552 = vmatpush.msra.mxu0 %v1441
    %1553 = vmatpush.msra.mxu0 %v1437
    %1554 = vmatpush.msra.mxu0 %v1433
    %1555 = vmatpush.msra.mxu0 %v1429
    %1556 = vmatpush.msra.mxu0 %v1425
    %1557 = vmatpush.msra.mxu0 %v1421
    %1558 = vmatmul.f32.gmra.mxu0 %v1408
    %v1559 = vpop.f32.mrf.mxu0
    %v1560 = vadd.f32 0.0, %v1559
    %1561 = vdwg.mxu0
    %v1562 = vadd.f32 %v1414, %v1500
    %v1563 = vadd.f32 %v1415, %v1520
    %v1564 = vadd.f32 %v1416, %v1540
    %v1565 = vadd.f32 %v1417, %v1560
    %v1566 = vmul.f32 %v1562, 0.5
    %v1567 = vtanh.pop %v1566
    %v1568 = vmul.f32 %v1567, 0.5
    %v1569 = vadd.f32 %v1568, 0.5
    %v1570 = vmul.f32 %v1563, 0.5
    %v1571 = vtanh.pop %v1570
    %v1572 = vmul.f32 %v1571, 0.5
    %v1573 = vadd.f32 %v1572, 0.5
    %v1574 = vtanh.pop %v1564
    %v1575 = vmul.f32 %v1565, 0.5
    %v1576 = vtanh.pop %v1575
    %v1577 = vmul.f32 %v1576, 0.5
    %v1578 = vadd.f32 %v1577, 0.5
    %v1579 = vmul.f32 %v1573, %v1406
    %v1580 = vmul.f32 %v1569, %v1574
    %v1581 = vadd.f32 %v1579, %v1580
    %v1582 = vtanh.pop %v1581
    %v1583 = vmul.f32 %v1578, %v1582
    %s1584 = scalar_lea.vmem [#allocation5], 40
    %1585 = vst [vmem:[%s1584] sm:$0xff] %v1583
    %s1586 = smul.u32 6, 4
    %s1587 = smul.addr %s1586, 8
    %s1588 = scalar_lea.vmem [#allocation4], %s1587
    %v1589 = vld [vmem:[%s1588] sm:$0xff]
    %v1590 = vld [vmem:[%s1588 + $0x8] sm:$0xff]
    %v1591 = vld [vmem:[%s1588 + $0x10] sm:$0xff]
    %v1592 = vld [vmem:[%s1588 + $0x18] sm:$0xff]
    %v1593 = vld [vmem:[#allocation14] sm:$0xff]
    %v1594 = vld [vmem:[#allocation14 + $0x8] sm:$0xff]
    %v1595 = vld [vmem:[#allocation14 + $0x10] sm:$0xff]
    %v1596 = vld [vmem:[#allocation14 + $0x18] sm:$0xff]
    %v1597 = vld [vmem:[#allocation14 + $0x20] sm:$0xff]
    %v1598 = vld [vmem:[#allocation14 + $0x28] sm:$0xff]
    %v1599 = vld [vmem:[#allocation14 + $0x30] sm:$0xff]
    %v1600 = vld [vmem:[#allocation14 + $0x38] sm:$0xff]
    %v1601 = vld [vmem:[#allocation14 + $0x40] sm:$0xff]
    %v1602 = vld [vmem:[#allocation14 + $0x48] sm:$0xff]
    %v1603 = vld [vmem:[#allocation14 + $0x50] sm:$0xff]
    %v1604 = vld [vmem:[#allocation14 + $0x58] sm:$0xff]
    %v1605 = vld [vmem:[#allocation14 + $0x60] sm:$0xff]
    %v1606 = vld [vmem:[#allocation14 + $0x68] sm:$0xff]
    %v1607 = vld [vmem:[#allocation14 + $0x70] sm:$0xff]
    %v1608 = vld [vmem:[#allocation14 + $0x78] sm:$0xff]
    %v1609 = vld [vmem:[#allocation14 + $0x80] sm:$0xff]
    %v1610 = vld [vmem:[#allocation14 + $0x88] sm:$0xff]
    %v1611 = vld [vmem:[#allocation14 + $0x90] sm:$0xff]
    %v1612 = vld [vmem:[#allocation14 + $0x98] sm:$0xff]
    %v1613 = vld [vmem:[#allocation14 + $0xa0] sm:$0xff]
    %v1614 = vld [vmem:[#allocation14 + $0xa8] sm:$0xff]
    %v1615 = vld [vmem:[#allocation14 + $0xb0] sm:$0xff]
    %v1616 = vld [vmem:[#allocation14 + $0xb8] sm:$0xff]
    %v1617 = vld [vmem:[#allocation14 + $0xc0] sm:$0xff]
    %v1618 = vld [vmem:[#allocation14 + $0xc8] sm:$0xff]
    %v1619 = vld [vmem:[#allocation14 + $0xd0] sm:$0xff]
    %v1620 = vld [vmem:[#allocation14 + $0xd8] sm:$0xff]
    %v1621 = vld [vmem:[#allocation14 + $0xe0] sm:$0xff]
    %v1622 = vld [vmem:[#allocation14 + $0xe8] sm:$0xff]
    %v1623 = vld [vmem:[#allocation14 + $0xf0] sm:$0xff]
    %v1624 = vld [vmem:[#allocation14 + $0xf8] sm:$0xff]
    %v1625 = vld [vmem:[#allocation14 + $0x100] sm:$0xff]
    %v1626 = vld [vmem:[#allocation14 + $0x108] sm:$0xff]
    %v1627 = vld [vmem:[#allocation14 + $0x110] sm:$0xff]
    %v1628 = vld [vmem:[#allocation14 + $0x118] sm:$0xff]
    %v1629 = vld [vmem:[#allocation14 + $0x120] sm:$0xff]
    %v1630 = vld [vmem:[#allocation14 + $0x128] sm:$0xff]
    %v1631 = vld [vmem:[#allocation14 + $0x130] sm:$0xff]
    %v1632 = vld [vmem:[#allocation14 + $0x138] sm:$0xff]
    %v1633 = vld [vmem:[#allocation14 + $0x140] sm:$0xff]
    %v1634 = vld [vmem:[#allocation14 + $0x148] sm:$0xff]
    %v1635 = vld [vmem:[#allocation14 + $0x150] sm:$0xff]
    %v1636 = vld [vmem:[#allocation14 + $0x158] sm:$0xff]
    %v1637 = vld [vmem:[#allocation14 + $0x160] sm:$0xff]
    %v1638 = vld [vmem:[#allocation14 + $0x168] sm:$0xff]
    %v1639 = vld [vmem:[#allocation14 + $0x170] sm:$0xff]
    %v1640 = vld [vmem:[#allocation14 + $0x178] sm:$0xff]
    %v1641 = vld [vmem:[#allocation14 + $0x180] sm:$0xff]
    %v1642 = vld [vmem:[#allocation14 + $0x188] sm:$0xff]
    %v1643 = vld [vmem:[#allocation14 + $0x190] sm:$0xff]
    %v1644 = vld [vmem:[#allocation14 + $0x198] sm:$0xff]
    %v1645 = vld [vmem:[#allocation14 + $0x1a0] sm:$0xff]
    %v1646 = vld [vmem:[#allocation14 + $0x1a8] sm:$0xff]
    %v1647 = vld [vmem:[#allocation14 + $0x1b0] sm:$0xff]
    %v1648 = vld [vmem:[#allocation14 + $0x1b8] sm:$0xff]
    %v1649 = vld [vmem:[#allocation14 + $0x1c0] sm:$0xff]
    %v1650 = vld [vmem:[#allocation14 + $0x1c8] sm:$0xff]
    %v1651 = vld [vmem:[#allocation14 + $0x1d0] sm:$0xff]
    %v1652 = vld [vmem:[#allocation14 + $0x1d8] sm:$0xff]
    %v1653 = vld [vmem:[#allocation14 + $0x1e0] sm:$0xff]
    %v1654 = vld [vmem:[#allocation14 + $0x1e8] sm:$0xff]
    %v1655 = vld [vmem:[#allocation14 + $0x1f0] sm:$0xff]
    %v1656 = vld [vmem:[#allocation14 + $0x1f8] sm:$0xff]
    %1657 = vmatpush.msra.mxu0 %v1653
    %1658 = vmatpush.msra.mxu0 %v1649
    %1659 = vmatpush.msra.mxu0 %v1645
    %1660 = vmatpush.msra.mxu0 %v1641
    %1661 = vmatpush.msra.mxu0 %v1637
    %1662 = vmatpush.msra.mxu0 %v1633
    %1663 = vmatpush.msra.mxu0 %v1629
    %1664 = vmatpush.msra.mxu0 %v1625
    %1665 = vmatpush.msra.mxu0 %v1621
    %1666 = vmatpush.msra.mxu0 %v1617
    %1667 = vmatpush.msra.mxu0 %v1613
    %1668 = vmatpush.msra.mxu0 %v1609
    %1669 = vmatpush.msra.mxu0 %v1605
    %1670 = vmatpush.msra.mxu0 %v1601
    %1671 = vmatpush.msra.mxu0 %v1597
    %1672 = vmatpush.msra.mxu0 %v1593
    %1673 = vmatmul.f32.gmra.mxu0 %v1583
    %v1674 = vpop.f32.mrf.mxu0
    %v1675 = vadd.f32 0.0, %v1674
    %1676 = vdwg.mxu0
    %1677 = vmatpush.msra.mxu0 %v1654
    %1678 = vmatpush.msra.mxu0 %v1650
    %1679 = vmatpush.msra.mxu0 %v1646
    %1680 = vmatpush.msra.mxu0 %v1642
    %1681 = vmatpush.msra.mxu0 %v1638
    %1682 = vmatpush.msra.mxu0 %v1634
    %1683 = vmatpush.msra.mxu0 %v1630
    %1684 = vmatpush.msra.mxu0 %v1626
    %1685 = vmatpush.msra.mxu0 %v1622
    %1686 = vmatpush.msra.mxu0 %v1618
    %1687 = vmatpush.msra.mxu0 %v1614
    %1688 = vmatpush.msra.mxu0 %v1610
    %1689 = vmatpush.msra.mxu0 %v1606
    %1690 = vmatpush.msra.mxu0 %v1602
    %1691 = vmatpush.msra.mxu0 %v1598
    %1692 = vmatpush.msra.mxu0 %v1594
    %1693 = vmatmul.f32.gmra.mxu0 %v1583
    %v1694 = vpop.f32.mrf.mxu0
    %v1695 = vadd.f32 0.0, %v1694
    %1696 = vdwg.mxu0
    %1697 = vmatpush.msra.mxu0 %v1655
    %1698 = vmatpush.msra.mxu0 %v1651
    %1699 = vmatpush.msra.mxu0 %v1647
    %1700 = vmatpush.msra.mxu0 %v1643
    %1701 = vmatpush.msra.mxu0 %v1639
    %1702 = vmatpush.msra.mxu0 %v1635
    %1703 = vmatpush.msra.mxu0 %v1631
    %1704 = vmatpush.msra.mxu0 %v1627
    %1705 = vmatpush.msra.mxu0 %v1623
    %1706 = vmatpush.msra.mxu0 %v1619
    %1707 = vmatpush.msra.mxu0 %v1615
    %1708 = vmatpush.msra.mxu0 %v1611
    %1709 = vmatpush.msra.mxu0 %v1607
    %1710 = vmatpush.msra.mxu0 %v1603
    %1711 = vmatpush.msra.mxu0 %v1599
    %1712 = vmatpush.msra.mxu0 %v1595
    %1713 = vmatmul.f32.gmra.mxu0 %v1583
    %v1714 = vpop.f32.mrf.mxu0
    %v1715 = vadd.f32 0.0, %v1714
    %1716 = vdwg.mxu0
    %1717 = vmatpush.msra.mxu0 %v1656
    %1718 = vmatpush.msra.mxu0 %v1652
    %1719 = vmatpush.msra.mxu0 %v1648
    %1720 = vmatpush.msra.mxu0 %v1644
    %1721 = vmatpush.msra.mxu0 %v1640
    %1722 = vmatpush.msra.mxu0 %v1636
    %1723 = vmatpush.msra.mxu0 %v1632
    %1724 = vmatpush.msra.mxu0 %v1628
    %1725 = vmatpush.msra.mxu0 %v1624
    %1726 = vmatpush.msra.mxu0 %v1620
    %1727 = vmatpush.msra.mxu0 %v1616
    %1728 = vmatpush.msra.mxu0 %v1612
    %1729 = vmatpush.msra.mxu0 %v1608
    %1730 = vmatpush.msra.mxu0 %v1604
    %1731 = vmatpush.msra.mxu0 %v1600
    %1732 = vmatpush.msra.mxu0 %v1596
    %1733 = vmatmul.f32.gmra.mxu0 %v1583
    %v1734 = vpop.f32.mrf.mxu0
    %v1735 = vadd.f32 0.0, %v1734
    %1736 = vdwg.mxu0
    %v1737 = vadd.f32 %v1589, %v1675
    %v1738 = vadd.f32 %v1590, %v1695
    %v1739 = vadd.f32 %v1591, %v1715
    %v1740 = vadd.f32 %v1592, %v1735
    %v1741 = vmul.f32 %v1737, 0.5
    %v1742 = vtanh.pop %v1741
    %v1743 = vmul.f32 %v1742, 0.5
    %v1744 = vadd.f32 %v1743, 0.5
    %v1745 = vmul.f32 %v1738, 0.5
    %v1746 = vtanh.pop %v1745
    %v1747 = vmul.f32 %v1746, 0.5
    %v1748 = vadd.f32 %v1747, 0.5
    %v1749 = vtanh.pop %v1739
    %v1750 = vmul.f32 %v1740, 0.5
    %v1751 = vtanh.pop %v1750
    %v1752 = vmul.f32 %v1751, 0.5
    %v1753 = vadd.f32 %v1752, 0.5
    %v1754 = vmul.f32 %v1748, %v1581
    %v1755 = vmul.f32 %v1744, %v1749
    %v1756 = vadd.f32 %v1754, %v1755
    %v1757 = vtanh.pop %v1756
    %v1758 = vmul.f32 %v1753, %v1757
    %s1759 = scalar_lea.vmem [#allocation5], 48
    %1760 = vst [vmem:[%s1759] sm:$0xff] %v1758
    %s1761 = smul.u32 7, 4
    %s1762 = smul.addr %s1761, 8
    %s1763 = scalar_lea.vmem [#allocation4], %s1762
    %v1764 = vld [vmem:[%s1763] sm:$0xff]
    %v1765 = vld [vmem:[%s1763 + $0x8] sm:$0xff]
    %v1766 = vld [vmem:[%s1763 + $0x10] sm:$0xff]
    %v1767 = vld [vmem:[%s1763 + $0x18] sm:$0xff]
    %v1768 = vld [vmem:[#allocation14] sm:$0xff]
    %v1769 = vld [vmem:[#allocation14 + $0x8] sm:$0xff]
    %v1770 = vld [vmem:[#allocation14 + $0x10] sm:$0xff]
    %v1771 = vld [vmem:[#allocation14 + $0x18] sm:$0xff]
    %v1772 = vld [vmem:[#allocation14 + $0x20] sm:$0xff]
    %v1773 = vld [vmem:[#allocation14 + $0x28] sm:$0xff]
    %v1774 = vld [vmem:[#allocation14 + $0x30] sm:$0xff]
    %v1775 = vld [vmem:[#allocation14 + $0x38] sm:$0xff]
    %v1776 = vld [vmem:[#allocation14 + $0x40] sm:$0xff]
    %v1777 = vld [vmem:[#allocation14 + $0x48] sm:$0xff]
    %v1778 = vld [vmem:[#allocation14 + $0x50] sm:$0xff]
    %v1779 = vld [vmem:[#allocation14 + $0x58] sm:$0xff]
    %v1780 = vld [vmem:[#allocation14 + $0x60] sm:$0xff]
    %v1781 = vld [vmem:[#allocation14 + $0x68] sm:$0xff]
    %v1782 = vld [vmem:[#allocation14 + $0x70] sm:$0xff]
    %v1783 = vld [vmem:[#allocation14 + $0x78] sm:$0xff]
    %v1784 = vld [vmem:[#allocation14 + $0x80] sm:$0xff]
    %v1785 = vld [vmem:[#allocation14 + $0x88] sm:$0xff]
    %v1786 = vld [vmem:[#allocation14 + $0x90] sm:$0xff]
    %v1787 = vld [vmem:[#allocation14 + $0x98] sm:$0xff]
    %v1788 = vld [vmem:[#allocation14 + $0xa0] sm:$0xff]
    %v1789 = vld [vmem:[#allocation14 + $0xa8] sm:$0xff]
    %v1790 = vld [vmem:[#allocation14 + $0xb0] sm:$0xff]
    %v1791 = vld [vmem:[#allocation14 + $0xb8] sm:$0xff]
    %v1792 = vld [vmem:[#allocation14 + $0xc0] sm:$0xff]
    %v1793 = vld [vmem:[#allocation14 + $0xc8] sm:$0xff]
    %v1794 = vld [vmem:[#allocation14 + $0xd0] sm:$0xff]
    %v1795 = vld [vmem:[#allocation14 + $0xd8] sm:$0xff]
    %v1796 = vld [vmem:[#allocation14 + $0xe0] sm:$0xff]
    %v1797 = vld [vmem:[#allocation14 + $0xe8] sm:$0xff]
    %v1798 = vld [vmem:[#allocation14 + $0xf0] sm:$0xff]
    %v1799 = vld [vmem:[#allocation14 + $0xf8] sm:$0xff]
    %v1800 = vld [vmem:[#allocation14 + $0x100] sm:$0xff]
    %v1801 = vld [vmem:[#allocation14 + $0x108] sm:$0xff]
    %v1802 = vld [vmem:[#allocation14 + $0x110] sm:$0xff]
    %v1803 = vld [vmem:[#allocation14 + $0x118] sm:$0xff]
    %v1804 = vld [vmem:[#allocation14 + $0x120] sm:$0xff]
    %v1805 = vld [vmem:[#allocation14 + $0x128] sm:$0xff]
    %v1806 = vld [vmem:[#allocation14 + $0x130] sm:$0xff]
    %v1807 = vld [vmem:[#allocation14 + $0x138] sm:$0xff]
    %v1808 = vld [vmem:[#allocation14 + $0x140] sm:$0xff]
    %v1809 = vld [vmem:[#allocation14 + $0x148] sm:$0xff]
    %v1810 = vld [vmem:[#allocation14 + $0x150] sm:$0xff]
    %v1811 = vld [vmem:[#allocation14 + $0x158] sm:$0xff]
    %v1812 = vld [vmem:[#allocation14 + $0x160] sm:$0xff]
    %v1813 = vld [vmem:[#allocation14 + $0x168] sm:$0xff]
    %v1814 = vld [vmem:[#allocation14 + $0x170] sm:$0xff]
    %v1815 = vld [vmem:[#allocation14 + $0x178] sm:$0xff]
    %v1816 = vld [vmem:[#allocation14 + $0x180] sm:$0xff]
    %v1817 = vld [vmem:[#allocation14 + $0x188] sm:$0xff]
    %v1818 = vld [vmem:[#allocation14 + $0x190] sm:$0xff]
    %v1819 = vld [vmem:[#allocation14 + $0x198] sm:$0xff]
    %v1820 = vld [vmem:[#allocation14 + $0x1a0] sm:$0xff]
    %v1821 = vld [vmem:[#allocation14 + $0x1a8] sm:$0xff]
    %v1822 = vld [vmem:[#allocation14 + $0x1b0] sm:$0xff]
    %v1823 = vld [vmem:[#allocation14 + $0x1b8] sm:$0xff]
    %v1824 = vld [vmem:[#allocation14 + $0x1c0] sm:$0xff]
    %v1825 = vld [vmem:[#allocation14 + $0x1c8] sm:$0xff]
    %v1826 = vld [vmem:[#allocation14 + $0x1d0] sm:$0xff]
    %v1827 = vld [vmem:[#allocation14 + $0x1d8] sm:$0xff]
    %v1828 = vld [vmem:[#allocation14 + $0x1e0] sm:$0xff]
    %v1829 = vld [vmem:[#allocation14 + $0x1e8] sm:$0xff]
    %v1830 = vld [vmem:[#allocation14 + $0x1f0] sm:$0xff]
    %v1831 = vld [vmem:[#allocation14 + $0x1f8] sm:$0xff]
    %1832 = vmatpush.msra.mxu0 %v1828
    %1833 = vmatpush.msra.mxu0 %v1824
    %1834 = vmatpush.msra.mxu0 %v1820
    %1835 = vmatpush.msra.mxu0 %v1816
    %1836 = vmatpush.msra.mxu0 %v1812
    %1837 = vmatpush.msra.mxu0 %v1808
    %1838 = vmatpush.msra.mxu0 %v1804
    %1839 = vmatpush.msra.mxu0 %v1800
    %1840 = vmatpush.msra.mxu0 %v1796
    %1841 = vmatpush.msra.mxu0 %v1792
    %1842 = vmatpush.msra.mxu0 %v1788
    %1843 = vmatpush.msra.mxu0 %v1784
    %1844 = vmatpush.msra.mxu0 %v1780
    %1845 = vmatpush.msra.mxu0 %v1776
    %1846 = vmatpush.msra.mxu0 %v1772
    %1847 = vmatpush.msra.mxu0 %v1768
    %1848 = vmatmul.f32.gmra.mxu0 %v1758
    %v1849 = vpop.f32.mrf.mxu0
    %v1850 = vadd.f32 0.0, %v1849
    %1851 = vdwg.mxu0
    %1852 = vmatpush.msra.mxu0 %v1829
    %1853 = vmatpush.msra.mxu0 %v1825
    %1854 = vmatpush.msra.mxu0 %v1821
    %1855 = vmatpush.msra.mxu0 %v1817
    %1856 = vmatpush.msra.mxu0 %v1813
    %1857 = vmatpush.msra.mxu0 %v1809
    %1858 = vmatpush.msra.mxu0 %v1805
    %1859 = vmatpush.msra.mxu0 %v1801
    %1860 = vmatpush.msra.mxu0 %v1797
    %1861 = vmatpush.msra.mxu0 %v1793
    %1862 = vmatpush.msra.mxu0 %v1789
    %1863 = vmatpush.msra.mxu0 %v1785
    %1864 = vmatpush.msra.mxu0 %v1781
    %1865 = vmatpush.msra.mxu0 %v1777
    %1866 = vmatpush.msra.mxu0 %v1773
    %1867 = vmatpush.msra.mxu0 %v1769
    %1868 = vmatmul.f32.gmra.mxu0 %v1758
    %v1869 = vpop.f32.mrf.mxu0
    %v1870 = vadd.f32 0.0, %v1869
    %1871 = vdwg.mxu0
    %1872 = vmatpush.msra.mxu0 %v1830
    %1873 = vmatpush.msra.mxu0 %v1826
    %1874 = vmatpush.msra.mxu0 %v1822
    %1875 = vmatpush.msra.mxu0 %v1818
    %1876 = vmatpush.msra.mxu0 %v1814
    %1877 = vmatpush.msra.mxu0 %v1810
    %1878 = vmatpush.msra.mxu0 %v1806
    %1879 = vmatpush.msra.mxu0 %v1802
    %1880 = vmatpush.msra.mxu0 %v1798
    %1881 = vmatpush.msra.mxu0 %v1794
    %1882 = vmatpush.msra.mxu0 %v1790
    %1883 = vmatpush.msra.mxu0 %v1786
    %1884 = vmatpush.msra.mxu0 %v1782
    %1885 = vmatpush.msra.mxu0 %v1778
    %1886 = vmatpush.msra.mxu0 %v1774
    %1887 = vmatpush.msra.mxu0 %v1770
    %1888 = vmatmul.f32.gmra.mxu0 %v1758
    %v1889 = vpop.f32.mrf.mxu0
    %v1890 = vadd.f32 0.0, %v1889
    %1891 = vdwg.mxu0
    %1892 = vmatpush.msra.mxu0 %v1831
    %1893 = vmatpush.msra.mxu0 %v1827
    %1894 = vmatpush.msra.mxu0 %v1823
    %1895 = vmatpush.msra.mxu0 %v1819
    %1896 = vmatpush.msra.mxu0 %v1815
    %1897 = vmatpush.msra.mxu0 %v1811
    %1898 = vmatpush.msra.mxu0 %v1807
    %1899 = vmatpush.msra.mxu0 %v1803
    %1900 = vmatpush.msra.mxu0 %v1799
    %1901 = vmatpush.msra.mxu0 %v1795
    %1902 = vmatpush.msra.mxu0 %v1791
    %1903 = vmatpush.msra.mxu0 %v1787
    %1904 = vmatpush.msra.mxu0 %v1783
    %1905 = vmatpush.msra.mxu0 %v1779
    %1906 = vmatpush.msra.mxu0 %v1775
    %1907 = vmatpush.msra.mxu0 %v1771
    %1908 = vmatmul.f32.gmra.mxu0 %v1758
    %v1909 = vpop.f32.mrf.mxu0
    %v1910 = vadd.f32 0.0, %v1909
    %1911 = vdwg.mxu0
    %v1912 = vadd.f32 %v1764, %v1850
    %v1913 = vadd.f32 %v1765, %v1870
    %v1914 = vadd.f32 %v1766, %v1890
    %v1915 = vadd.f32 %v1767, %v1910
    %v1916 = vmul.f32 %v1912, 0.5
    %v1917 = vtanh.pop %v1916
    %v1918 = vmul.f32 %v1917, 0.5
    %v1919 = vadd.f32 %v1918, 0.5
    %v1920 = vmul.f32 %v1913, 0.5
    %v1921 = vtanh.pop %v1920
    %v1922 = vmul.f32 %v1921, 0.5
    %v1923 = vadd.f32 %v1922, 0.5
    %v1924 = vtanh.pop %v1914
    %v1925 = vmul.f32 %v1915, 0.5
    %v1926 = vtanh.pop %v1925
    %v1927 = vmul.f32 %v1926, 0.5
    %v1928 = vadd.f32 %v1927, 0.5
    %v1929 = vmul.f32 %v1923, %v1756
    %v1930 = vmul.f32 %v1919, %v1924
    %v1931 = vadd.f32 %v1929, %v1930
    %v1932 = vtanh.pop %v1931
    %v1933 = vmul.f32 %v1928, %v1932
    %s1934 = scalar_lea.vmem [#allocation5], 56
    %1935 = vst [vmem:[%s1934] sm:$0xff] %v1933
    %1936 = vst [vmem:[#allocation2] sm:$0xff] %v1933
    %1937 = vst [vmem:[#allocation3] sm:$0xff] %v1931
    %v1938 = vld [vmem:[#allocation5] sm:$0xff]
    %v1939 = vld [vmem:[#allocation5 + $0x8] sm:$0xff]
    %v1940 = vld [vmem:[#allocation5 + $0x10] sm:$0xff]
    %v1941 = vld [vmem:[#allocation5 + $0x18] sm:$0xff]
    %v1942 = vld [vmem:[#allocation5 + $0x20] sm:$0xff]
    %v1943 = vld [vmem:[#allocation5 + $0x28] sm:$0xff]
    %v1944 = vld [vmem:[#allocation5 + $0x30] sm:$0xff]
    %v1945 = vld [vmem:[#allocation5 + $0x38] sm:$0xff]
    %v1946 = vld [vmem:[#allocation17] sm:$0xff]
    %v1947 = vld [vmem:[#allocation17 + $0x8] sm:$0xff]
    %v1948 = vld [vmem:[#allocation17 + $0x10] sm:$0xff]
    %v1949 = vld [vmem:[#allocation17 + $0x18] sm:$0xff]
    %v1950 = vld [vmem:[#allocation17 + $0x20] sm:$0xff]
    %v1951 = vld [vmem:[#allocation17 + $0x28] sm:$0xff]
    %v1952 = vld [vmem:[#allocation17 + $0x30] sm:$0xff]
    %v1953 = vld [vmem:[#allocation17 + $0x38] sm:$0xff]
    %v1954 = vld [vmem:[#allocation17 + $0x40] sm:$0xff]
    %v1955 = vld [vmem:[#allocation17 + $0x48] sm:$0xff]
    %v1956 = vld [vmem:[#allocation17 + $0x50] sm:$0xff]
    %v1957 = vld [vmem:[#allocation17 + $0x58] sm:$0xff]
    %v1958 = vld [vmem:[#allocation17 + $0x60] sm:$0xff]
    %v1959 = vld [vmem:[#allocation17 + $0x68] sm:$0xff]
    %v1960 = vld [vmem:[#allocation17 + $0x70] sm:$0xff]
    %v1961 = vld [vmem:[#allocation17 + $0x78] sm:$0xff]
    %v1962 = vld [vmem:[#allocation18] sm:$0x1]
    %v1964 = vperm.slane %v1962, 0
    %1966 = vmatpush.msra.mxu0 %v1961
    %1967 = vmatpush.msra.mxu0 %v1960
    %1968 = vmatpush.msra.mxu0 %v1959
    %1969 = vmatpush.msra.mxu0 %v1958
    %1970 = vmatpush.msra.mxu0 %v1957
    %1971 = vmatpush.msra.mxu0 %v1956
    %1972 = vmatpush.msra.mxu0 %v1955
    %1973 = vmatpush.msra.mxu0 %v1954
    %1974 = vmatpush.msra.mxu0 %v1953
    %1975 = vmatpush.msra.mxu0 %v1952
    %1976 = vmatpush.msra.mxu0 %v1951
    %1977 = vmatpush.msra.mxu0 %v1950
    %1978 = vmatpush.msra.mxu0 %v1949
    %1979 = vmatpush.msra.mxu0 %v1948
    %1980 = vmatpush.msra.mxu0 %v1947
    %1981 = vmatpush.msra.mxu0 %v1946
    %1982 = vmatmul.f32.gmra.mxu0 %v1938
    %v1983 = vpop.f32.mrf.mxu0
    %v1984 = vadd.f32 %v1964, %v1983
    %1985 = vmatmul.f32.gmra.mxu0 %v1939
    %v1986 = vpop.f32.mrf.mxu0
    %v1987 = vadd.f32 %v1964, %v1986
    %1988 = vmatmul.f32.gmra.mxu0 %v1940
    %v1989 = vpop.f32.mrf.mxu0
    %v1990 = vadd.f32 %v1964, %v1989
    %1991 = vmatmul.f32.gmra.mxu0 %v1941
    %v1992 = vpop.f32.mrf.mxu0
    %v1993 = vadd.f32 %v1964, %v1992
    %1994 = vmatmul.f32.gmra.mxu0 %v1942
    %v1995 = vpop.f32.mrf.mxu0
    %v1996 = vadd.f32 %v1964, %v1995
    %1997 = vmatmul.f32.gmra.mxu0 %v1943
    %v1998 = vpop.f32.mrf.mxu0
    %v1999 = vadd.f32 %v1964, %v1998
    %2000 = vmatmul.f32.gmra.mxu0 %v1944
    %v2001 = vpop.f32.mrf.mxu0
    %v2002 = vadd.f32 %v1964, %v2001
    %2003 = vmatmul.f32.gmra.mxu0 %v1945
    %v2004 = vpop.f32.mrf.mxu0
    %v2005 = vadd.f32 %v1964, %v2004
    %2006 = vdwg.mxu0
    %2007 = vst [vmem:[#allocation21] sm:$0xff] %v1984
    %2008 = vst [vmem:[#allocation21 + $0x8] sm:$0xff] %v1987
    %2009 = vst [vmem:[#allocation21 + $0x10] sm:$0xff] %v1990
    %2010 = vst [vmem:[#allocation21 + $0x18] sm:$0xff] %v1993
    %2011 = vst [vmem:[#allocation21 + $0x20] sm:$0xff] %v1996
    %2012 = vst [vmem:[#allocation21 + $0x28] sm:$0xff] %v1999
    %2013 = vst [vmem:[#allocation21 + $0x30] sm:$0xff] %v2002
    %2014 = vst [vmem:[#allocation21 + $0x38] sm:$0xff] %v2005
    // Predicated region
    $region82: #{tpu_custom_call.1} parent=1 // pred_check
      %p2015 = pneg %p180
    $region83: #{tpu_custom_call.1} parent=1 // pred_check_branch
      %2017 = sbr.rel (%p2015) target = $region85
    $region84: #{tpu_custom_call.1} parent=1 // pred_region
      %2018 = vst [vmem:[#allocation22] sm:$0xff] %v1933
      %2019 = vst [vmem:[#allocation24] sm:$0xff] %v1931
    $region85: #{tpu_custom_call.1} parent=1 // pred_fallthru
      _
    // Predicated region
    $region86: #{tpu_custom_call.1} parent=1 // pred_check
      _
    $region87: #{tpu_custom_call.1} parent=1 // pred_check_branch
      %2021 = sbr.rel (0) target = $region89
    $region88: #{tpu_custom_call.1} parent=1 // pred_region
      %s2022 = sadd.s32 0, 0
      %s2023 = smul.u32 8, %s2022
      %2025 = vsyncadd [#allocation8], 0
      %s2026 = smul.addr %s2023, 8
      %s2027 = scalar_lea.hbm %s10, %s2026
      %s2028 = sshll.u32 [#allocation21], 4
      %s2029 = int_to_ptr.vmem [resolvable:$true] %s2028
      %s2030 = sshll.u32 %s2027, 4
      %s2031 = int_to_ptr.hbm [resolvable:$true] %s2030
      %2036 = dma.vmem_to_hbm [thread:$0]  %s2029, 1024, %s2031, [#allocation8], 128, 128, 8
    $region89: #{tpu_custom_call.1} parent=1 // pred_fallthru
      _
    // Predicated region
    $region90: #{tpu_custom_call.1} parent=1 // pred_check
      _
    $region91: #{tpu_custom_call.1} parent=1 // pred_check_branch
      %2038 = sbr.rel (0) target = $region93
    $region92: #{tpu_custom_call.1} parent=1 // pred_region
      %2040 = vsyncadd [#allocation23], 0
      %s2042 = sshll.u32 [#allocation22], 4
      %s2043 = int_to_ptr.vmem [resolvable:$true] %s2042
      %s2044 = sshll.u32 %s11, 4
      %s2045 = int_to_ptr.hbm [resolvable:$true] %s2044
      %2047 = dma.vmem_to_hbm [thread:$0]  %s2043, 128, %s2045, [#allocation23]
    $region93: #{tpu_custom_call.1} parent=1 // pred_fallthru
      _
    // Predicated region
    $region94: #{tpu_custom_call.1} parent=1 // pred_check
      _
    $region95: #{tpu_custom_call.1} parent=1 // pred_check_branch
      %2049 = sbr.rel (0) target = $region97
    $region96: #{tpu_custom_call.1} parent=1 // pred_region
      %2051 = vsyncadd [#allocation23], 0
      %s2053 = sshll.u32 [#allocation24], 4
      %s2054 = int_to_ptr.vmem [resolvable:$true] %s2053
      %s2055 = sshll.u32 %s12, 4
      %s2056 = int_to_ptr.hbm [resolvable:$true] %s2055
      %2058 = dma.vmem_to_hbm [thread:$0]  %s2054, 128, %s2056, [#allocation23]
    $region97: #{tpu_custom_call.1} parent=1 // pred_fallthru
      _
    // Predicated region
    $region98: #{tpu_custom_call.1} parent=1 // pred_check
      _
    $region99: #{tpu_custom_call.1} parent=1 // pred_check_branch
      %2060 = sbr.rel (0) target = $region101
    $region100: #{tpu_custom_call.1} parent=1 // pred_region
      %2062 = dma.done [#allocation8], 1024
    $region101: #{tpu_custom_call.1} parent=1 // pred_fallthru
      _
    // Predicated region
    $region102: #{tpu_custom_call.1} parent=1 // pred_check
      _
    $region103: #{tpu_custom_call.1} parent=1 // pred_check_branch
      %2064 = sbr.rel (0) target = $region105
    $region104: #{tpu_custom_call.1} parent=1 // pred_region
      %2066 = dma.done [#allocation23], 128
    $region105: #{tpu_custom_call.1} parent=1 // pred_fallthru
      _
    // Predicated region
    $region106: #{tpu_custom_call.1} parent=1 // pred_check
      _
    $region107: #{tpu_custom_call.1} parent=1 // pred_check_branch
      %2068 = sbr.rel (0) target = $region109
    $region108: #{tpu_custom_call.1} parent=1 // pred_region
      %2070 = dma.done [#allocation23], 128
    $region109: #{tpu_custom_call.1} parent=1 // pred_fallthru
      _
    %2071 = vsyncpa [#allocation7], 1
    %2072 = vsyncpa [#allocation10], 1
    %2073 = vsyncpa [#allocation13], 1
    %2074 = vsyncpa [#allocation16], 1
    %2075 = vsyncpa [#allocation19], 1
    %2076 = vsyncpa [#allocation8], 1
    %2077 = vsyncpa [#allocation23], 1

</llo_original>
